<compile_context>
chip_gen: v6e
topology: v6e:2x2x1
jax: 0.10.0
libtpu: 0.0.40
codegen_flags: <defaults>
</compile_context>

<pallas_src>
import jax
import jax.numpy as jnp
from jax.experimental import pallas as pl
from jax.experimental.pallas import tpu as pltpu

_BN_EPS = 1e-5
_LEAKY_SLOPE = 0.2

_SINGLE_K_MAX = 2048            # single K block (no reduction grid) up to this
_TK_SPLIT = 512                 # K tile when the contraction is split
_TM_MAX = 1024                  # row-tile cap
_M_GRANULE = 16                 # bf16 sublane packing granule
_VMEM_BUDGET = 32 * 1024 * 1024 # keep working set well inside v7x's 64 MiB


def _round_up(x, m):
    return ((x + m - 1) // m) * m


# ----------------------------------------------------------------------------
# Fused matmul kernel: prologue(A) @ B  (+ multi-part K)  + affine + leaky
# ----------------------------------------------------------------------------
def _make_mm_kernel(n_parts, prologue, has_scale, has_shift, out_slope,
                    single_k):
    """Ref order: A_0, B_0, ..., A_{P-1}, B_{P-1},
                  [p_scale, p_shift]  if prologue == "affine"
                  [out_scale]         if has_scale
                  [out_shift]         if has_shift
                  out_ref,
                  [acc_ref]           if not single_k (split-K reduction)"""

    def kernel(*refs):
        idx = 0
        ab_refs = []
        for _ in range(n_parts):
            ab_refs.append((refs[idx], refs[idx + 1]))
            idx += 2
        if prologue == "affine":
            ps_ref, pt_ref = refs[idx], refs[idx + 1]
            idx += 2
        sc_ref = sh_ref = None
        if has_scale:
            sc_ref = refs[idx]
            idx += 1
        if has_shift:
            sh_ref = refs[idx]
            idx += 1
        o_ref = refs[idx]
        idx += 1
        acc_ref = None if single_k else refs[idx]

        def dot_all():
            acc = None
            for a_ref, b_ref in ab_refs:
                a = a_ref[...]
                if prologue == "relu":            # fused ReLU input prologue
                    a = jnp.maximum(a, 0)
                elif prologue == "affine":        # fused BN + LeakyReLU(0.2)
                    af = a.astype(jnp.float32) * ps_ref[...] + pt_ref[...]
                    af = jnp.where(af >= 0, af, _LEAKY_SLOPE * af)
                    a = af.astype(jnp.bfloat16)
                d = jnp.dot(a, b_ref[...], preferred_element_type=jnp.float32)
                acc = d if acc is None else acc + d
            return acc

        def finalize(acc):
            y = acc                                # f32 epilogue, cast at store
            if has_scale:
                y = y * sc_ref[...]
            if has_shift:
                y = y + sh_ref[...]
            if out_slope == 0.0:
                y = jnp.maximum(y, 0.0)
            elif out_slope != 1.0:
                y = jnp.where(y >= 0, y, out_slope * y)
            o_ref[...] = y.astype(o_ref.dtype)

        if single_k:
            finalize(dot_all())
        else:
            k = pl.program_id(2)

            @pl.when(k == 0)
            def _init():
                acc_ref[...] = jnp.zeros_like(acc_ref)

            acc_ref[...] += dot_all()

            @pl.when(k == pl.num_programs(2) - 1)
            def _fin():
                finalize(acc_ref[...])

    return kernel


def fused_matmul(parts, nc, *, out_scale=None, out_shift=None, out_slope=1.0,
                 prologue="none", p_scale=None, p_shift=None,
                 out_dtype=jnp.bfloat16):
    """out[M, nc] = act((sum_p prologue(A_p) @ B_p) * out_scale + out_shift).

    parts: list of (A_p, B_p); A_p (M, K), B_p (K, nc); parts share M and K.
    prologue: "none" | "relu" | "affine" (x*p_scale + p_shift then leaky 0.2;
              affine only with a single part).
    bf16 MXU operands / f32 accumulation; result stored as `out_dtype`.
    """
    n_parts = len(parts)
    M, K = parts[0][0].shape
    for a_p, b_p in parts:
        assert a_p.shape == (M, K) and b_p.shape == (K, nc)
    assert prologue in ("none", "relu", "affine")
    assert prologue != "affine" or (n_parts == 1 and p_scale is not None
                                    and p_shift is not None)

    out_itemsize = 2 if out_dtype == jnp.bfloat16 else 4

    # ---- tile selection -----------------------------------------------------
    tn = 256 if nc >= 256 else 128       # feed the 256-wide MXU when possible
    np_ = _round_up(nc, tn)

    if K <= _SINGLE_K_MAX:               # single K block: no scratch, 2-D grid
        single_k = True
        kp = _round_up(K, 8)
        tk = kp
    else:                                # split-K reduction grid (innermost)
        single_k = False
        tk = _TK_SPLIT
        kp = _round_up(K, tk)

    tm = min(_TM_MAX, _round_up(M, _M_GRANULE))
    # v7x megacore: ensure >= 2 parallel grid steps when the N axis has only 1.
    if np_ // tn == 1 and pl.cdiv(M, tm) == 1 and M >= 4 * _M_GRANULE:
        tm = _round_up(pl.cdiv(M, 2), _M_GRANULE)

    def vmem_bytes(tm_):
        a = n_parts * 2 * tm_ * tk * 2                      # dbl-buffered A
        b = n_parts * 2 * tk * tn * 2                       # dbl-buffered B
        o = 2 * tm_ * tn * out_itemsize                     # dbl-buffered out
        acc = 0 if single_k else tm_ * tn * 4
        tmp = 4 * tm_ * tn + (8 * tm_ * tk if prologue == "affine" else 0)
        return a + b + o + acc + tmp

    while tm > _M_GRANULE and vmem_bytes(tm) > _VMEM_BUDGET:
        tm = _round_up(tm // 2, _M_GRANULE)

    grid_m = pl.cdiv(M, tm)
    mp = grid_m * tm

    # ---- specs ----------------------------------------------------------------
    if single_k:
        grid = (grid_m, np_ // tn)
        a_map = lambda i, j: (i, 0)
        b_map = lambda i, j: (0, j)
        pv_map = lambda i, j: (0, 0)
        ov_map = lambda i, j: (0, j)
        o_map = lambda i, j: (i, j)
        dims = ("parallel", "parallel")
    else:
        grid = (grid_m, np_ // tn, kp // tk)
        a_map = lambda i, j, k: (i, k)
        b_map = lambda i, j, k: (k, j)
        pv_map = lambda i, j, k: (0, k)
        ov_map = lambda i, j, k: (0, j)
        o_map = lambda i, j, k: (i, j)
        dims = ("parallel", "parallel", "arbitrary")

    def pad2(x, rows, cols, dtype):
        x = x.astype(dtype)
        pr, pc = rows - x.shape[0], cols - x.shape[1]
        if pr or pc:                       # skip the pad pass when not needed
            x = jnp.pad(x, ((0, pr), (0, pc)))
        return x

    inputs, in_specs = [], []
    for a_p, b_p in parts:
        inputs.append(pad2(a_p, mp, kp, jnp.bfloat16))
        in_specs.append(pl.BlockSpec((tm, tk), a_map))
        inputs.append(pad2(b_p, kp, np_, jnp.bfloat16))
        in_specs.append(pl.BlockSpec((tk, tn), b_map))
    if prologue == "affine":
        inputs.append(pad2(p_scale.reshape(1, K), 1, kp, jnp.float32))
        in_specs.append(pl.BlockSpec((1, tk), pv_map))
        inputs.append(pad2(p_shift.reshape(1, K), 1, kp, jnp.float32))
        in_specs.append(pl.BlockSpec((1, tk), pv_map))
    has_scale = out_scale is not None
    has_shift = out_shift is not None
    if has_scale:
        inputs.append(pad2(out_scale.reshape(1, nc), 1, np_, jnp.float32))
        in_specs.append(pl.BlockSpec((1, tn), ov_map))
    if has_shift:
        inputs.append(pad2(out_shift.reshape(1, nc), 1, np_, jnp.float32))
        in_specs.append(pl.BlockSpec((1, tn), ov_map))

    kernel = _make_mm_kernel(n_parts, prologue, has_scale, has_shift,
                             float(out_slope), single_k)
    scratch = [] if single_k else [pltpu.VMEM((tm, tn), jnp.float32)]

    cost = pl.CostEstimate(
        flops=2 * mp * kp * np_ * n_parts,
        transcendentals=0,
        bytes_accessed=(n_parts * (mp * kp * 2 + kp * np_ * 2)
                        + mp * np_ * out_itemsize))

    out = pl.pallas_call(
        kernel,
        out_shape=jax.ShapeDtypeStruct((mp, np_), out_dtype),
        grid_spec=pltpu.PrefetchScalarGridSpec(
            num_scalar_prefetch=0,
            grid=grid,
            in_specs=in_specs,
            out_specs=pl.BlockSpec((tm, tn), o_map),
            scratch_shapes=scratch),
        compiler_params=pltpu.CompilerParams(
            dimension_semantics=dims,
            vmem_limit_bytes=48 * 1024 * 1024),
        cost_estimate=cost,
    )(*inputs)

    if mp != M or np_ != nc:
        out = out[:M, :nc]
    return out


# ----------------------------------------------------------------------------
# Conv lowerings (XLA glue for the patch gather; the hot path is the kernel)
# ----------------------------------------------------------------------------
def _im2col(x, ksize, stride, pad, pad_value=None):
    """x: (N,H,W,C) -> (N*OH*OW, ksize*ksize*C), patch order (kh, kw, c)."""
    # TODO(synk): fold this patch gather into the Pallas kernel (tap-indexed K
    # grid over an ANY-space NHWC input) to remove the 4x/9x HBM expansion.
    n, h, w, c = x.shape
    if pad > 0:
        if pad_value is None:
            xp = jnp.pad(x, ((0, 0), (pad, pad), (pad, pad), (0, 0)))
        else:
            pv = jnp.broadcast_to(pad_value.astype(x.dtype),
                                  (n, h + 2 * pad, w + 2 * pad, c))
            xp = jax.lax.dynamic_update_slice(pv, x, (0, pad, pad, 0))
    else:
        xp = x
    oh = (h + 2 * pad - ksize) // stride + 1
    ow = (w + 2 * pad - ksize) // stride + 1
    patches = []
    for kh in range(ksize):
        for kw in range(ksize):
            patches.append(
                xp[:, kh:kh + stride * oh:stride, kw:kw + stride * ow:stride, :])
    cols = jnp.concatenate(patches, axis=-1)
    return cols.reshape(n * oh * ow, ksize * ksize * c), (n, oh, ow)


def conv2d_s2(x, w, b, *, in_scale=None, in_shift=None,
              out_dtype=jnp.bfloat16):
    """nn.Conv2d(cin, cout, 4, stride=2, padding=1).

    Optional fused input prologue leaky_0.2(x*in_scale + in_shift) folds the
    parent level's BatchNorm1 + LeakyReLU into this conv's matmul.  Zero
    padding of the *activated* input is preserved by padding the raw input
    with the per-channel neutral value -shift/scale.
    """
    cout, cin = w.shape[0], w.shape[1]
    x = x.astype(jnp.bfloat16)
    if in_scale is None:
        cols, (n, oh, ow) = _im2col(x, 4, 2, 1)
        prologue, ps, pt = "none", None, None
    else:
        safe_scale = jnp.where(in_scale == 0, 1.0, in_scale)
        neutral = (-in_shift / safe_scale).astype(jnp.float32)
        # TODO(synk): channels with exactly-zero BN scale would need masking.
        cols, (n, oh, ow) = _im2col(x, 4, 2, 1, pad_value=neutral)
        prologue = "affine"
        ps = jnp.tile(in_scale.astype(jnp.float32), 16)   # K order = (kh,kw,c)
        pt = jnp.tile(in_shift.astype(jnp.float32), 16)
    wmat = jnp.transpose(w, (2, 3, 1, 0)).reshape(16 * cin, cout)
    out_shift = None if b is None else b.astype(jnp.float32)
    out = fused_matmul([(cols, wmat)], cout,
                       out_shift=out_shift, out_slope=1.0,
                       prologue=prologue, p_scale=ps, p_shift=pt,
                       out_dtype=out_dtype)
    return out.reshape(n, oh, ow, cout)


def _convt_subpixel_weight(w_t):
    """(Cin,Cout,4,4) ConvTranspose2d weight -> (9*Cin, 4*Cout) matrix.

    Row = (th*3+tw)*Cin + ci over the 3x3 taps of the 1-padded, non-upsampled
    input; column = (rh*2+rw)*Cout + co over the four 2x output phases.
    """
    cin, cout = w_t.shape[0], w_t.shape[1]
    bmat = jnp.zeros((3, 3, cin, 2, 2, cout), jnp.float32)
    for rh in range(2):
        for rw in range(2):
            for th in (rh, rh + 1):
                for tw in (rw, rw + 1):
                    kh = 3 + rh - 2 * th
                    kw = 3 + rw - 2 * tw
                    bmat = bmat.at[th, tw, :, rh, rw, :].set(w_t[:, :, kh, kw])
    return bmat.reshape(9 * cin, 4 * cout)


def conv_transpose2d_s2(xs, w_t, b, *, bn_scale=None, bn_shift=None,
                        out_dtype=jnp.bfloat16):
    """nn.ConvTranspose2d(sum(cin_i), cout, 4, stride=2, padding=1) applied to
    the channel-concat of `xs`, WITHOUT materializing the concat: each part is
    one term of a multi-part K reduction inside a single kernel.  The
    preceding ReLU is the fused input prologue; bias + BN2 the fused epilogue.
    Sub-pixel lowering: one matmul over 3x3 windows of the non-upsampled input
    yields all four 2x output phases.
    """
    cout = w_t.shape[1]
    n, hh, ww, _ = xs[0].shape
    parts = []
    coff = 0
    for x in xs:
        cin_i = x.shape[-1]
        cols, _ = _im2col(x.astype(jnp.bfloat16), 3, 1, 1)
        parts.append((cols, _convt_subpixel_weight(w_t[coff:coff + cin_i])))
        coff += cin_i
    assert coff == w_t.shape[0]

    # Fold bias into the BN affine:  bn(conv + bias) = conv*s + (bias*s + t).
    if bn_scale is not None:
        o_scale = bn_scale.astype(jnp.float32)
        o_shift = bn_shift.astype(jnp.float32)
        if b is not None:
            o_shift = o_shift + b.astype(jnp.float32) * o_scale
    else:
        o_scale = None
        o_shift = None if b is None else b.astype(jnp.float32)
    p4_scale = None if o_scale is None else jnp.tile(o_scale, 4)
    p4_shift = None if o_shift is None else jnp.tile(o_shift, 4)

    out4 = fused_matmul(parts, 4 * cout, out_scale=p4_scale,
                        out_shift=p4_shift, out_slope=1.0, prologue="relu",
                        out_dtype=out_dtype)
    out4 = out4.reshape(n, hh, ww, 2, 2, cout)
    # TODO(synk): write the four phases straight from the kernel via a
    # phase-aware output index_map to avoid this de-interleave pass.
    return jnp.transpose(out4, (0, 1, 3, 2, 4, 5)).reshape(n, 2 * hh, 2 * ww,
                                                           cout)


def _bn_scale_shift(bn):
    scale = bn["gamma"] / jnp.sqrt(bn["var"] + _BN_EPS)
    shift = bn["beta"] - bn["mean"] * scale
    return scale, shift


# ----------------------------------------------------------------------------
# UBlock parameters + forward
# ----------------------------------------------------------------------------
def _init_bn(key, c):
    k1, k2, k3, k4 = jax.random.split(key, 4)
    return {
        "gamma": 1.0 + 0.1 * jax.random.normal(k1, (c,), jnp.float32),
        "beta": 0.1 * jax.random.normal(k2, (c,), jnp.float32),
        "mean": 0.1 * jax.random.normal(k3, (c,), jnp.float32),
        "var": 0.5 + jax.random.uniform(k4, (c,), jnp.float32),
    }


def init_ublock(key, s, nf_in, max_nf, use_batchnorm=True, nf_out=None,
                nf_next=None):
    assert s >= 2 and s % 2 == 0
    nf_next = nf_next if nf_next else min(nf_in * 2, max_nf)
    nf_out = nf_out if nf_out else nf_in
    ks = jax.random.split(key, 8)
    p = {}
    conv_has_bias = not (use_batchnorm and s > 2)
    p["conv_w"] = 0.1 * jax.random.normal(ks[0], (nf_next, nf_in, 4, 4),
                                          jnp.float32)
    p["conv_b"] = (0.1 * jax.random.normal(ks[1], (nf_next,), jnp.float32)
                   if conv_has_bias else None)
    if s > 2:
        p["bn1"] = _init_bn(ks[2], nf_next) if use_batchnorm else None
        p["next"] = init_ublock(ks[3], s // 2, nf_next, max_nf, use_batchnorm)
        c_t_in = nf_next * 2
    else:
        p["bn1"] = None
        p["next"] = None
        c_t_in = nf_next
    p["convt_w"] = 0.1 * jax.random.normal(ks[4], (c_t_in, nf_out, 4, 4),
                                           jnp.float32)
    p["convt_b"] = (None if use_batchnorm
                    else 0.1 * jax.random.normal(ks[5], (nf_out,), jnp.float32))
    p["bn2"] = _init_bn(ks[6], nf_out) if use_batchnorm else None
    return p


def ublock_forward(params, x, in_scale=None, in_shift=None):
    """UBlock forward (eval mode).  x: (N, s, s, nf_in) NHWC.

    `in_scale`/`in_shift` carry the parent level's BatchNorm1 + LeakyReLU(0.2),
    fused as this level's encoder-conv input prologue.
    """
    h = conv2d_s2(x, params["conv_w"], params["conv_b"],
                  in_scale=in_scale, in_shift=in_shift)
    if params["next"] is not None:
        nf_next = params["conv_w"].shape[0]
        if params["bn1"] is not None:
            s1, t1 = _bn_scale_shift(params["bn1"])
        else:                                  # LeakyReLU only (no batchnorm)
            s1 = jnp.ones((nf_next,), jnp.float32)
            t1 = jnp.zeros((nf_next,), jnp.float32)
        h2 = ublock_forward(params["next"], h, in_scale=s1, in_shift=t1)
        xs = [h, h2]       # torch.cat(dim=1) realized as a 2-part K reduction
    else:
        xs = [h]
    s2 = t2 = None
    if params["bn2"] is not None:
        s2, t2 = _bn_scale_shift(params["bn2"])
    # nn.Dropout(0.5) for s <= 8 is identity in eval mode.
    # TODO(synk): training-mode dropout / batch-stat BN not implemented.
    return conv_transpose2d_s2(xs, params["convt_w"], params["convt_b"],
                               bn_scale=s2, bn_shift=t2)


def ublock_apply_nchw(params, x_nchw):
    x = jnp.transpose(x_nchw, (0, 2, 3, 1))
    y = ublock_forward(params, x)
    return jnp.transpose(y, (0, 3, 1, 2)).astype(jnp.float32)


# ----------------------------------------------------------------------------
# Pure-JAX reference (lax convolutions) for correctness checking
# ----------------------------------------------------------------------------
def _leaky(x, slope):
    return jnp.where(x >= 0, x, slope * x)


def _conv2d_ref(x, w, b):
    y = jax.lax.conv_general_dilated(
        x, jnp.transpose(w, (2, 3, 1, 0)), window_strides=(2, 2),
        padding=((1, 1), (1, 1)), dimension_numbers=("NHWC", "HWIO", "NHWC"))
    return y if b is None else y + b


def _convt_ref(x, w_t, b):
    w_hwio = jnp.transpose(w_t[:, :, ::-1, ::-1], (2, 3, 0, 1))
    y = jax.lax.conv_general_dilated(
        x, w_hwio, window_strides=(1, 1), padding=((2, 2), (2, 2)),
        lhs_dilation=(2, 2), dimension_numbers=("NHWC", "HWIO", "NHWC"))
    return y if b is None else y + b


def ublock_forward_ref(params, x):
    h = _conv2d_ref(x, params["conv_w"], params["conv_b"])
    if params["next"] is not None:
        ha = h
        if params["bn1"] is not None:
            s1, t1 = _bn_scale_shift(params["bn1"])
            ha = ha * s1 + t1
        ha = _leaky(ha, 0.2)
        h2 = ublock_forward_ref(params["next"], ha)
        h = jnp.concatenate([h, h2], axis=-1)
    y = _convt_ref(jnp.maximum(h, 0.0), params["convt_w"], params["convt_b"])
    if params["bn2"] is not None:
        s2, t2 = _bn_scale_shift(params["bn2"])
        y = y * s2 + t2
    return y


# ----------------------------------------------------------------------------
if __name__ == "__main__":
    key = jax.random.PRNGKey(0)

    def run_case(case_key, s, nf_in, max_nf, batch, tol=5e-2):
        kp, kx = jax.random.split(case_key)
        params = init_ublock(kp, s, nf_in, max_nf, use_batchnorm=True)
        x = jax.random.normal(kx, (batch, nf_in, s, s), jnp.float32)  # NCHW
        out = jax.block_until_ready(jax.jit(ublock_apply_nchw)(params, x))
        assert out.shape == (batch, nf_in, s, s), out.shape
        assert bool(jnp.all(jnp.isfinite(out)))
        ref = jnp.transpose(
            ublock_forward_ref(params, jnp.transpose(x, (0, 2, 3, 1))),
            (0, 3, 1, 2))
        err = float(jnp.max(jnp.abs(out - ref)))
        mag = float(jnp.max(jnp.abs(ref))) + 1e-6
        assert err / mag < tol, (err, mag)

    k1, k2 = jax.random.split(key)
    # Small config (4 recursion levels): exercises the single-K-block path,
    # the fused BN1+LeakyReLU prologue and the 2-part (concat-free) decoder.
    run_case(k1, s=16, nf_in=4, max_nf=16, batch=2)
    # Wider config: exercises the split-K reduction grid, tn=256 tiles and the
    # multi-K variants of the prologue / multi-part reduction.
    run_case(k2, s=4, nf_in=256, max_nf=512, batch=1)

    print("KERNEL_OK")
</pallas_src>

<mosaic_0001>
module attributes {stable_mosaic.version = 11 : i64} {
  func.func @kernel(%arg0: i32, %arg1: i32, %arg2: memref<64x64xbf16, #tpu.memory_space<vmem>>, %arg3: memref<64x128xbf16, #tpu.memory_space<vmem>>, %arg4: memref<64x128xbf16, #tpu.memory_space<vmem>>) attributes {dimension_semantics = [#tpu.dimension_semantics<parallel>, #tpu.dimension_semantics<parallel>], iteration_bounds = array<i64: 2, 1>, scalar_prefetch = 0 : i64, scratch_operands = 0 : i64, tpu.core_type = #tpu.core_type<tc>, window_params = [{transform_indices = @transform_0, window_bounds = array<i64: 64, 64>}, {transform_indices = @transform_1, window_bounds = array<i64: 64, 128>}, {transform_indices = @transform_2, window_bounds = array<i64: 64, 128>}]} {
    %c0 = arith.constant 0 : index
    %c0_0 = arith.constant 0 : index
    %0 = vector.load %arg2[%c0, %c0_0] : memref<64x64xbf16, #tpu.memory_space<vmem>>, vector<64x64xbf16>
    %c0_1 = arith.constant 0 : index
    %c0_2 = arith.constant 0 : index
    %1 = vector.load %arg3[%c0_1, %c0_2] : memref<64x128xbf16, #tpu.memory_space<vmem>>, vector<64x128xbf16>
    %cst = arith.constant dense<0.000000e+00> : vector<64x128xf32>
    %2 = tpu.matmul %0, %1, %cst {dimension_numbers = #tpu.dot_dimension_numbers<[1], [0], [0], [1], [0, 0, 1, 1], [], []>} : vector<64x64xbf16>, vector<64x128xbf16>, vector<64x128xf32> -> vector<64x128xf32>
    %3 = arith.truncf %2 : vector<64x128xf32> to vector<64x128xbf16>
    %c0_3 = arith.constant 0 : index
    %c0_4 = arith.constant 0 : index
    %4 = vector.load %arg4[%c0_3, %c0_4] : memref<64x128xbf16, #tpu.memory_space<vmem>>, vector<64x128xbf16>
    tpu.vector_store %arg4[%c0_3, %c0_4], %3 {strides = array<i32>} : memref<64x128xbf16, #tpu.memory_space<vmem>>, vector<64x128xbf16>,
    return
  }
  func.func @transform_0(%arg0: i32, %arg1: i32) -> (i32, i32) {
    %c0_i32 = arith.constant 0 : i32
    %c0_i32_0 = arith.constant 0 : i32
    return %arg0, %c0_i32 : i32, i32
  }
  func.func @transform_1(%arg0: i32, %arg1: i32) -> (i32, i32) {
    %c0_i32 = arith.constant 0 : i32
    %c0_i32_0 = arith.constant 0 : i32
    return %c0_i32, %arg1 : i32, i32
  }
  func.func @transform_2(%arg0: i32, %arg1: i32) -> (i32, i32) {
    %c0_i32 = arith.constant 0 : i32
    return %arg0, %arg1 : i32, i32
  }
}

module attributes {stable_mosaic.version = 11 : i64} {
  func.func @kernel(%arg0: i32, %arg1: i32, %arg2: memref<32x128xbf16, #tpu.memory_space<vmem>>, %arg3: memref<128x128xbf16, #tpu.memory_space<vmem>>, %arg4: memref<1x128xf32, #tpu.memory_space<vmem>>, %arg5: memref<1x128xf32, #tpu.memory_space<vmem>>, %arg6: memref<32x128xbf16, #tpu.memory_space<vmem>>) attributes {dimension_semantics = [#tpu.dimension_semantics<parallel>, #tpu.dimension_semantics<parallel>], iteration_bounds = array<i64: 1, 1>, scalar_prefetch = 0 : i64, scratch_operands = 0 : i64, tpu.core_type = #tpu.core_type<tc>, window_params = [{transform_indices = @transform_0, window_bounds = array<i64: 32, 128>}, {transform_indices = @transform_1, window_bounds = array<i64: 128, 128>}, {pipeline_mode = #tpu.pipeline_mode<synchronous>, transform_indices = @transform_2, window_bounds = array<i64: 1, 128>}, {pipeline_mode = #tpu.pipeline_mode<synchronous>, transform_indices = @transform_3, window_bounds = array<i64: 1, 128>}, {transform_indices = @transform_4, window_bounds = array<i64: 32, 128>}]} {
    %c0 = arith.constant 0 : index
    %c0_0 = arith.constant 0 : index
    %0 = vector.load %arg2[%c0, %c0_0] : memref<32x128xbf16, #tpu.memory_space<vmem>>, vector<32x128xbf16>
    %1 = arith.extf %0 : vector<32x128xbf16> to vector<32x128xf32>
    %c0_1 = arith.constant 0 : index
    %c0_2 = arith.constant 0 : index
    %2 = vector.load %arg4[%c0_1, %c0_2] : memref<1x128xf32, #tpu.memory_space<vmem>>, vector<1x128xf32>
    %3 = vector.broadcast %2 : vector<1x128xf32> to vector<32x128xf32>
    %4 = arith.mulf %1, %3 : vector<32x128xf32>
    %c0_3 = arith.constant 0 : index
    %c0_4 = arith.constant 0 : index
    %5 = vector.load %arg5[%c0_3, %c0_4] : memref<1x128xf32, #tpu.memory_space<vmem>>, vector<1x128xf32>
    %6 = vector.broadcast %5 : vector<1x128xf32> to vector<32x128xf32>
    %7 = arith.addf %4, %6 : vector<32x128xf32>
    %cst = arith.constant 0.000000e+00 : f32
    %8 = vector.broadcast %cst : f32 to vector<32x128xf32>
    %9 = arith.cmpf oge, %7, %8 : vector<32x128xf32>
    %cst_5 = arith.constant 2.000000e-01 : f32
    %10 = vector.broadcast %cst_5 : f32 to vector<32x128xf32>
    %11 = arith.mulf %10, %7 : vector<32x128xf32>
    %12 = arith.select %9, %7, %11 : vector<32x128xi1>, vector<32x128xf32>
    %13 = arith.truncf %12 : vector<32x128xf32> to vector<32x128xbf16>
    %c0_6 = arith.constant 0 : index
    %c0_7 = arith.constant 0 : index
    %14 = vector.load %arg3[%c0_6, %c0_7] : memref<128x128xbf16, #tpu.memory_space<vmem>>, vector<128x128xbf16>
    %cst_8 = arith.constant dense<0.000000e+00> : vector<32x128xf32>
    %15 = tpu.matmul %13, %14, %cst_8 {dimension_numbers = #tpu.dot_dimension_numbers<[1], [0], [0], [1], [0, 0, 1, 1], [], []>} : vector<32x128xbf16>, vector<128x128xbf16>, vector<32x128xf32> -> vector<32x128xf32>
    %16 = arith.truncf %15 : vector<32x128xf32> to vector<32x128xbf16>
    %c0_9 = arith.constant 0 : index
    %c0_10 = arith.constant 0 : index
    %17 = vector.load %arg6[%c0_9, %c0_10] : memref<32x128xbf16, #tpu.memory_space<vmem>>, vector<32x128xbf16>
    tpu.vector_store %arg6[%c0_9, %c0_10], %16 {strides = array<i32>} : memref<32x128xbf16, #tpu.memory_space<vmem>>, vector<32x128xbf16>,
    return
  }
  func.func @transform_0(%arg0: i32, %arg1: i32) -> (i32, i32) {
    %c0_i32 = arith.constant 0 : i32
    %c0_i32_0 = arith.constant 0 : i32
    return %arg0, %c0_i32 : i32, i32
  }
  func.func @transform_1(%arg0: i32, %arg1: i32) -> (i32, i32) {
    %c0_i32 = arith.constant 0 : i32
    %c0_i32_0 = arith.constant 0 : i32
    return %c0_i32, %arg1 : i32, i32
  }
  func.func @transform_2(%arg0: i32, %arg1: i32) -> (i32, i32) {
    %c0_i32 = arith.constant 0 : i32
    %c0_i32_0 = arith.constant 0 : i32
    %c0_i32_1 = arith.constant 0 : i32
    return %c0_i32, %c0_i32_0 : i32, i32
  }
  func.func @transform_3(%arg0: i32, %arg1: i32) -> (i32, i32) {
    %c0_i32 = arith.constant 0 : i32
    %c0_i32_0 = arith.constant 0 : i32
    %c0_i32_1 = arith.constant 0 : i32
    return %c0_i32, %c0_i32_0 : i32, i32
  }
  func.func @transform_4(%arg0: i32, %arg1: i32) -> (i32, i32) {
    %c0_i32 = arith.constant 0 : i32
    return %arg0, %arg1 : i32, i32
  }
}

module attributes {stable_mosaic.version = 11 : i64} {
  func.func @kernel(%arg0: i32, %arg1: i32, %arg2: memref<16x256xbf16, #tpu.memory_space<vmem>>, %arg3: memref<256x128xbf16, #tpu.memory_space<vmem>>, %arg4: memref<1x256xf32, #tpu.memory_space<vmem>>, %arg5: memref<1x256xf32, #tpu.memory_space<vmem>>, %arg6: memref<16x128xbf16, #tpu.memory_space<vmem>>) attributes {dimension_semantics = [#tpu.dimension_semantics<parallel>, #tpu.dimension_semantics<parallel>], iteration_bounds = array<i64: 1, 1>, scalar_prefetch = 0 : i64, scratch_operands = 0 : i64, tpu.core_type = #tpu.core_type<tc>, window_params = [{transform_indices = @transform_0, window_bounds = array<i64: 16, 256>}, {transform_indices = @transform_1, window_bounds = array<i64: 256, 128>}, {pipeline_mode = #tpu.pipeline_mode<synchronous>, transform_indices = @transform_2, window_bounds = array<i64: 1, 256>}, {pipeline_mode = #tpu.pipeline_mode<synchronous>, transform_indices = @transform_3, window_bounds = array<i64: 1, 256>}, {transform_indices = @transform_4, window_bounds = array<i64: 16, 128>}]} {
    %c0 = arith.constant 0 : index
    %c0_0 = arith.constant 0 : index
    %0 = vector.load %arg2[%c0, %c0_0] : memref<16x256xbf16, #tpu.memory_space<vmem>>, vector<16x256xbf16>
    %1 = arith.extf %0 : vector<16x256xbf16> to vector<16x256xf32>
    %c0_1 = arith.constant 0 : index
    %c0_2 = arith.constant 0 : index
    %2 = vector.load %arg4[%c0_1, %c0_2] : memref<1x256xf32, #tpu.memory_space<vmem>>, vector<1x256xf32>
    %3 = vector.broadcast %2 : vector<1x256xf32> to vector<16x256xf32>
    %4 = arith.mulf %1, %3 : vector<16x256xf32>
    %c0_3 = arith.constant 0 : index
    %c0_4 = arith.constant 0 : index
    %5 = vector.load %arg5[%c0_3, %c0_4] : memref<1x256xf32, #tpu.memory_space<vmem>>, vector<1x256xf32>
    %6 = vector.broadcast %5 : vector<1x256xf32> to vector<16x256xf32>
    %7 = arith.addf %4, %6 : vector<16x256xf32>
    %cst = arith.constant 0.000000e+00 : f32
    %8 = vector.broadcast %cst : f32 to vector<16x256xf32>
    %9 = arith.cmpf oge, %7, %8 : vector<16x256xf32>
    %cst_5 = arith.constant 2.000000e-01 : f32
    %10 = vector.broadcast %cst_5 : f32 to vector<16x256xf32>
    %11 = arith.mulf %10, %7 : vector<16x256xf32>
    %12 = arith.select %9, %7, %11 : vector<16x256xi1>, vector<16x256xf32>
    %13 = arith.truncf %12 : vector<16x256xf32> to vector<16x256xbf16>
    %c0_6 = arith.constant 0 : index
    %c0_7 = arith.constant 0 : index
    %14 = vector.load %arg3[%c0_6, %c0_7] : memref<256x128xbf16, #tpu.memory_space<vmem>>, vector<256x128xbf16>
    %cst_8 = arith.constant dense<0.000000e+00> : vector<16x128xf32>
    %15 = tpu.matmul %13, %14, %cst_8 {dimension_numbers = #tpu.dot_dimension_numbers<[1], [0], [0], [1], [0, 0, 1, 1], [], []>} : vector<16x256xbf16>, vector<256x128xbf16>, vector<16x128xf32> -> vector<16x128xf32>
    %16 = arith.truncf %15 : vector<16x128xf32> to vector<16x128xbf16>
    %c0_9 = arith.constant 0 : index
    %c0_10 = arith.constant 0 : index
    %17 = vector.load %arg6[%c0_9, %c0_10] : memref<16x128xbf16, #tpu.memory_space<vmem>>, vector<16x128xbf16>
    tpu.vector_store %arg6[%c0_9, %c0_10], %16 {strides = array<i32>} : memref<16x128xbf16, #tpu.memory_space<vmem>>, vector<16x128xbf16>,
    return
  }
  func.func @transform_0(%arg0: i32, %arg1: i32) -> (i32, i32) {
    %c0_i32 = arith.constant 0 : i32
    %c0_i32_0 = arith.constant 0 : i32
    return %arg0, %c0_i32 : i32, i32
  }
  func.func @transform_1(%arg0: i32, %arg1: i32) -> (i32, i32) {
    %c0_i32 = arith.constant 0 : i32
    %c0_i32_0 = arith.constant 0 : i32
    return %c0_i32, %arg1 : i32, i32
  }
  func.func @transform_2(%arg0: i32, %arg1: i32) -> (i32, i32) {
    %c0_i32 = arith.constant 0 : i32
    %c0_i32_0 = arith.constant 0 : i32
    %c0_i32_1 = arith.constant 0 : i32
    return %c0_i32, %c0_i32_0 : i32, i32
  }
  func.func @transform_3(%arg0: i32, %arg1: i32) -> (i32, i32) {
    %c0_i32 = arith.constant 0 : i32
    %c0_i32_0 = arith.constant 0 : i32
    %c0_i32_1 = arith.constant 0 : i32
    return %c0_i32, %c0_i32_0 : i32, i32
  }
  func.func @transform_4(%arg0: i32, %arg1: i32) -> (i32, i32) {
    %c0_i32 = arith.constant 0 : i32
    return %arg0, %arg1 : i32, i32
  }
}

module attributes {stable_mosaic.version = 11 : i64} {
  func.func @kernel(%arg0: i32, %arg1: i32, %arg2: memref<16x256xbf16, #tpu.memory_space<vmem>>, %arg3: memref<256x128xbf16, #tpu.memory_space<vmem>>, %arg4: memref<1x256xf32, #tpu.memory_space<vmem>>, %arg5: memref<1x256xf32, #tpu.memory_space<vmem>>, %arg6: memref<1x128xf32, #tpu.memory_space<vmem>>, %arg7: memref<16x128xbf16, #tpu.memory_space<vmem>>) attributes {dimension_semantics = [#tpu.dimension_semantics<parallel>, #tpu.dimension_semantics<parallel>], iteration_bounds = array<i64: 1, 1>, scalar_prefetch = 0 : i64, scratch_operands = 0 : i64, tpu.core_type = #tpu.core_type<tc>, window_params = [{transform_indices = @transform_0, window_bounds = array<i64: 16, 256>}, {transform_indices = @transform_1, window_bounds = array<i64: 256, 128>}, {pipeline_mode = #tpu.pipeline_mode<synchronous>, transform_indices = @transform_2, window_bounds = array<i64: 1, 256>}, {pipeline_mode = #tpu.pipeline_mode<synchronous>, transform_indices = @transform_3, window_bounds = array<i64: 1, 256>}, {transform_indices = @transform_4, window_bounds = array<i64: 1, 128>}, {transform_indices = @transform_5, window_bounds = array<i64: 16, 128>}]} {
    %c0 = arith.constant 0 : index
    %c0_0 = arith.constant 0 : index
    %0 = vector.load %arg2[%c0, %c0_0] : memref<16x256xbf16, #tpu.memory_space<vmem>>, vector<16x256xbf16>
    %1 = arith.extf %0 : vector<16x256xbf16> to vector<16x256xf32>
    %c0_1 = arith.constant 0 : index
    %c0_2 = arith.constant 0 : index
    %2 = vector.load %arg4[%c0_1, %c0_2] : memref<1x256xf32, #tpu.memory_space<vmem>>, vector<1x256xf32>
    %3 = vector.broadcast %2 : vector<1x256xf32> to vector<16x256xf32>
    %4 = arith.mulf %1, %3 : vector<16x256xf32>
    %c0_3 = arith.constant 0 : index
    %c0_4 = arith.constant 0 : index
    %5 = vector.load %arg5[%c0_3, %c0_4] : memref<1x256xf32, #tpu.memory_space<vmem>>, vector<1x256xf32>
    %6 = vector.broadcast %5 : vector<1x256xf32> to vector<16x256xf32>
    %7 = arith.addf %4, %6 : vector<16x256xf32>
    %cst = arith.constant 0.000000e+00 : f32
    %8 = vector.broadcast %cst : f32 to vector<16x256xf32>
    %9 = arith.cmpf oge, %7, %8 : vector<16x256xf32>
    %cst_5 = arith.constant 2.000000e-01 : f32
    %10 = vector.broadcast %cst_5 : f32 to vector<16x256xf32>
    %11 = arith.mulf %10, %7 : vector<16x256xf32>
    %12 = arith.select %9, %7, %11 : vector<16x256xi1>, vector<16x256xf32>
    %13 = arith.truncf %12 : vector<16x256xf32> to vector<16x256xbf16>
    %c0_6 = arith.constant 0 : index
    %c0_7 = arith.constant 0 : index
    %14 = vector.load %arg3[%c0_6, %c0_7] : memref<256x128xbf16, #tpu.memory_space<vmem>>, vector<256x128xbf16>
    %cst_8 = arith.constant dense<0.000000e+00> : vector<16x128xf32>
    %15 = tpu.matmul %13, %14, %cst_8 {dimension_numbers = #tpu.dot_dimension_numbers<[1], [0], [0], [1], [0, 0, 1, 1], [], []>} : vector<16x256xbf16>, vector<256x128xbf16>, vector<16x128xf32> -> vector<16x128xf32>
    %c0_9 = arith.constant 0 : index
    %c0_10 = arith.constant 0 : index
    %16 = vector.load %arg6[%c0_9, %c0_10] : memref<1x128xf32, #tpu.memory_space<vmem>>, vector<1x128xf32>
    %17 = vector.broadcast %16 : vector<1x128xf32> to vector<16x128xf32>
    %18 = arith.addf %15, %17 : vector<16x128xf32>
    %19 = arith.truncf %18 : vector<16x128xf32> to vector<16x128xbf16>
    %c0_11 = arith.constant 0 : index
    %c0_12 = arith.constant 0 : index
    %20 = vector.load %arg7[%c0_11, %c0_12] : memref<16x128xbf16, #tpu.memory_space<vmem>>, vector<16x128xbf16>
    tpu.vector_store %arg7[%c0_11, %c0_12], %19 {strides = array<i32>} : memref<16x128xbf16, #tpu.memory_space<vmem>>, vector<16x128xbf16>,
    return
  }
  func.func @transform_0(%arg0: i32, %arg1: i32) -> (i32, i32) {
    %c0_i32 = arith.constant 0 : i32
    %c0_i32_0 = arith.constant 0 : i32
    return %arg0, %c0_i32 : i32, i32
  }
  func.func @transform_1(%arg0: i32, %arg1: i32) -> (i32, i32) {
    %c0_i32 = arith.constant 0 : i32
    %c0_i32_0 = arith.constant 0 : i32
    return %c0_i32, %arg1 : i32, i32
  }
  func.func @transform_2(%arg0: i32, %arg1: i32) -> (i32, i32) {
    %c0_i32 = arith.constant 0 : i32
    %c0_i32_0 = arith.constant 0 : i32
    %c0_i32_1 = arith.constant 0 : i32
    return %c0_i32, %c0_i32_0 : i32, i32
  }
  func.func @transform_3(%arg0: i32, %arg1: i32) -> (i32, i32) {
    %c0_i32 = arith.constant 0 : i32
    %c0_i32_0 = arith.constant 0 : i32
    %c0_i32_1 = arith.constant 0 : i32
    return %c0_i32, %c0_i32_0 : i32, i32
  }
  func.func @transform_4(%arg0: i32, %arg1: i32) -> (i32, i32) {
    %c0_i32 = arith.constant 0 : i32
    %c0_i32_0 = arith.constant 0 : i32
    return %c0_i32, %arg1 : i32, i32
  }
  func.func @transform_5(%arg0: i32, %arg1: i32) -> (i32, i32) {
    %c0_i32 = arith.constant 0 : i32
    return %arg0, %arg1 : i32, i32
  }
}

module attributes {stable_mosaic.version = 11 : i64} {
  func.func @kernel(%arg0: i32, %arg1: i32, %arg2: memref<16x144xbf16, #tpu.memory_space<vmem>>, %arg3: memref<144x128xbf16, #tpu.memory_space<vmem>>, %arg4: memref<1x128xf32, #tpu.memory_space<vmem>>, %arg5: memref<1x128xf32, #tpu.memory_space<vmem>>, %arg6: memref<16x128xbf16, #tpu.memory_space<vmem>>) attributes {dimension_semantics = [#tpu.dimension_semantics<parallel>, #tpu.dimension_semantics<parallel>], iteration_bounds = array<i64: 1, 1>, scalar_prefetch = 0 : i64, scratch_operands = 0 : i64, tpu.core_type = #tpu.core_type<tc>, window_params = [{transform_indices = @transform_0, window_bounds = array<i64: 16, 144>}, {transform_indices = @transform_1, window_bounds = array<i64: 144, 128>}, {transform_indices = @transform_2, window_bounds = array<i64: 1, 128>}, {transform_indices = @transform_3, window_bounds = array<i64: 1, 128>}, {transform_indices = @transform_4, window_bounds = array<i64: 16, 128>}]} {
    %c0 = arith.constant 0 : index
    %c0_0 = arith.constant 0 : index
    %0 = vector.load %arg2[%c0, %c0_0] : memref<16x144xbf16, #tpu.memory_space<vmem>>, vector<16x144xbf16>
    %cst = arith.constant 0.000000e+00 : bf16
    %1 = vector.broadcast %cst : bf16 to vector<16x144xbf16>
    %2 = arith.maximumf %0, %1 : vector<16x144xbf16>
    %c0_1 = arith.constant 0 : index
    %c0_2 = arith.constant 0 : index
    %3 = vector.load %arg3[%c0_1, %c0_2] : memref<144x128xbf16, #tpu.memory_space<vmem>>, vector<144x128xbf16>
    %cst_3 = arith.constant dense<0.000000e+00> : vector<16x128xf32>
    %4 = tpu.matmul %2, %3, %cst_3 {dimension_numbers = #tpu.dot_dimension_numbers<[1], [0], [0], [1], [0, 0, 1, 1], [], []>} : vector<16x144xbf16>, vector<144x128xbf16>, vector<16x128xf32> -> vector<16x128xf32>
    %c0_4 = arith.constant 0 : index
    %c0_5 = arith.constant 0 : index
    %5 = vector.load %arg4[%c0_4, %c0_5] : memref<1x128xf32, #tpu.memory_space<vmem>>, vector<1x128xf32>
    %6 = vector.broadcast %5 : vector<1x128xf32> to vector<16x128xf32>
    %7 = arith.mulf %4, %6 : vector<16x128xf32>
    %c0_6 = arith.constant 0 : index
    %c0_7 = arith.constant 0 : index
    %8 = vector.load %arg5[%c0_6, %c0_7] : memref<1x128xf32, #tpu.memory_space<vmem>>, vector<1x128xf32>
    %9 = vector.broadcast %8 : vector<1x128xf32> to vector<16x128xf32>
    %10 = arith.addf %7, %9 : vector<16x128xf32>
    %11 = arith.truncf %10 : vector<16x128xf32> to vector<16x128xbf16>
    %c0_8 = arith.constant 0 : index
    %c0_9 = arith.constant 0 : index
    %12 = vector.load %arg6[%c0_8, %c0_9] : memref<16x128xbf16, #tpu.memory_space<vmem>>, vector<16x128xbf16>
    tpu.vector_store %arg6[%c0_8, %c0_9], %11 {strides = array<i32>} : memref<16x128xbf16, #tpu.memory_space<vmem>>, vector<16x128xbf16>,
    return
  }
  func.func @transform_0(%arg0: i32, %arg1: i32) -> (i32, i32) {
    %c0_i32 = arith.constant 0 : i32
    %c0_i32_0 = arith.constant 0 : i32
    return %arg0, %c0_i32 : i32, i32
  }
  func.func @transform_1(%arg0: i32, %arg1: i32) -> (i32, i32) {
    %c0_i32 = arith.constant 0 : i32
    %c0_i32_0 = arith.constant 0 : i32
    return %c0_i32, %arg1 : i32, i32
  }
  func.func @transform_2(%arg0: i32, %arg1: i32) -> (i32, i32) {
    %c0_i32 = arith.constant 0 : i32
    %c0_i32_0 = arith.constant 0 : i32
    return %c0_i32, %arg1 : i32, i32
  }
  func.func @transform_3(%arg0: i32, %arg1: i32) -> (i32, i32) {
    %c0_i32 = arith.constant 0 : i32
    %c0_i32_0 = arith.constant 0 : i32
    return %c0_i32, %arg1 : i32, i32
  }
  func.func @transform_4(%arg0: i32, %arg1: i32) -> (i32, i32) {
    %c0_i32 = arith.constant 0 : i32
    return %arg0, %arg1 : i32, i32
  }
}

module attributes {stable_mosaic.version = 11 : i64} {
  func.func @kernel(%arg0: i32, %arg1: i32, %arg2: memref<16x144xbf16, #tpu.memory_space<vmem>>, %arg3: memref<144x128xbf16, #tpu.memory_space<vmem>>, %arg4: memref<16x144xbf16, #tpu.memory_space<vmem>>, %arg5: memref<144x128xbf16, #tpu.memory_space<vmem>>, %arg6: memref<1x128xf32, #tpu.memory_space<vmem>>, %arg7: memref<1x128xf32, #tpu.memory_space<vmem>>, %arg8: memref<16x128xbf16, #tpu.memory_space<vmem>>) attributes {dimension_semantics = [#tpu.dimension_semantics<parallel>, #tpu.dimension_semantics<parallel>], iteration_bounds = array<i64: 1, 1>, scalar_prefetch = 0 : i64, scratch_operands = 0 : i64, tpu.core_type = #tpu.core_type<tc>, window_params = [{transform_indices = @transform_0, window_bounds = array<i64: 16, 144>}, {transform_indices = @transform_1, window_bounds = array<i64: 144, 128>}, {transform_indices = @transform_2, window_bounds = array<i64: 16, 144>}, {transform_indices = @transform_3, window_bounds = array<i64: 144, 128>}, {transform_indices = @transform_4, window_bounds = array<i64: 1, 128>}, {transform_indices = @transform_5, window_bounds = array<i64: 1, 128>}, {transform_indices = @transform_6, window_bounds = array<i64: 16, 128>}]} {
    %c0 = arith.constant 0 : index
    %c0_0 = arith.constant 0 : index
    %0 = vector.load %arg2[%c0, %c0_0] : memref<16x144xbf16, #tpu.memory_space<vmem>>, vector<16x144xbf16>
    %cst = arith.constant 0.000000e+00 : bf16
    %1 = vector.broadcast %cst : bf16 to vector<16x144xbf16>
    %2 = arith.maximumf %0, %1 : vector<16x144xbf16>
    %c0_1 = arith.constant 0 : index
    %c0_2 = arith.constant 0 : index
    %3 = vector.load %arg3[%c0_1, %c0_2] : memref<144x128xbf16, #tpu.memory_space<vmem>>, vector<144x128xbf16>
    %cst_3 = arith.constant dense<0.000000e+00> : vector<16x128xf32>
    %4 = tpu.matmul %2, %3, %cst_3 {dimension_numbers = #tpu.dot_dimension_numbers<[1], [0], [0], [1], [0, 0, 1, 1], [], []>} : vector<16x144xbf16>, vector<144x128xbf16>, vector<16x128xf32> -> vector<16x128xf32>
    %c0_4 = arith.constant 0 : index
    %c0_5 = arith.constant 0 : index
    %5 = vector.load %arg4[%c0_4, %c0_5] : memref<16x144xbf16, #tpu.memory_space<vmem>>, vector<16x144xbf16>
    %cst_6 = arith.constant 0.000000e+00 : bf16
    %6 = vector.broadcast %cst_6 : bf16 to vector<16x144xbf16>
    %7 = arith.maximumf %5, %6 : vector<16x144xbf16>
    %c0_7 = arith.constant 0 : index
    %c0_8 = arith.constant 0 : index
    %8 = vector.load %arg5[%c0_7, %c0_8] : memref<144x128xbf16, #tpu.memory_space<vmem>>, vector<144x128xbf16>
    %cst_9 = arith.constant dense<0.000000e+00> : vector<16x128xf32>
    %9 = tpu.matmul %7, %8, %cst_9 {dimension_numbers = #tpu.dot_dimension_numbers<[1], [0], [0], [1], [0, 0, 1, 1], [], []>} : vector<16x144xbf16>, vector<144x128xbf16>, vector<16x128xf32> -> vector<16x128xf32>
    %10 = arith.addf %4, %9 : vector<16x128xf32>
    %c0_10 = arith.constant 0 : index
    %c0_11 = arith.constant 0 : index
    %11 = vector.load %arg6[%c0_10, %c0_11] : memref<1x128xf32, #tpu.memory_space<vmem>>, vector<1x128xf32>
    %12 = vector.broadcast %11 : vector<1x128xf32> to vector<16x128xf32>
    %13 = arith.mulf %10, %12 : vector<16x128xf32>
    %c0_12 = arith.constant 0 : index
    %c0_13 = arith.constant 0 : index
    %14 = vector.load %arg7[%c0_12, %c0_13] : memref<1x128xf32, #tpu.memory_space<vmem>>, vector<1x128xf32>
    %15 = vector.broadcast %14 : vector<1x128xf32> to vector<16x128xf32>
    %16 = arith.addf %13, %15 : vector<16x128xf32>
    %17 = arith.truncf %16 : vector<16x128xf32> to vector<16x128xbf16>
    %c0_14 = arith.constant 0 : index
    %c0_15 = arith.constant 0 : index
    %18 = vector.load %arg8[%c0_14, %c0_15] : memref<16x128xbf16, #tpu.memory_space<vmem>>, vector<16x128xbf16>
    tpu.vector_store %arg8[%c0_14, %c0_15], %17 {strides = array<i32>} : memref<16x128xbf16, #tpu.memory_space<vmem>>, vector<16x128xbf16>,
    return
  }
  func.func @transform_0(%arg0: i32, %arg1: i32) -> (i32, i32) {
    %c0_i32 = arith.constant 0 : i32
    %c0_i32_0 = arith.constant 0 : i32
    return %arg0, %c0_i32 : i32, i32
  }
  func.func @transform_1(%arg0: i32, %arg1: i32) -> (i32, i32) {
    %c0_i32 = arith.constant 0 : i32
    %c0_i32_0 = arith.constant 0 : i32
    return %c0_i32, %arg1 : i32, i32
  }
  func.func @transform_2(%arg0: i32, %arg1: i32) -> (i32, i32) {
    %c0_i32 = arith.constant 0 : i32
    %c0_i32_0 = arith.constant 0 : i32
    return %arg0, %c0_i32 : i32, i32
  }
  func.func @transform_3(%arg0: i32, %arg1: i32) -> (i32, i32) {
    %c0_i32 = arith.constant 0 : i32
    %c0_i32_0 = arith.constant 0 : i32
    return %c0_i32, %arg1 : i32, i32
  }
  func.func @transform_4(%arg0: i32, %arg1: i32) -> (i32, i32) {
    %c0_i32 = arith.constant 0 : i32
    %c0_i32_0 = arith.constant 0 : i32
    return %c0_i32, %arg1 : i32, i32
  }
  func.func @transform_5(%arg0: i32, %arg1: i32) -> (i32, i32) {
    %c0_i32 = arith.constant 0 : i32
    %c0_i32_0 = arith.constant 0 : i32
    return %c0_i32, %arg1 : i32, i32
  }
  func.func @transform_6(%arg0: i32, %arg1: i32) -> (i32, i32) {
    %c0_i32 = arith.constant 0 : i32
    return %arg0, %arg1 : i32, i32
  }
}

module attributes {stable_mosaic.version = 11 : i64} {
  func.func @kernel(%arg0: i32, %arg1: i32, %arg2: memref<32x144xbf16, #tpu.memory_space<vmem>>, %arg3: memref<144x128xbf16, #tpu.memory_space<vmem>>, %arg4: memref<32x144xbf16, #tpu.memory_space<vmem>>, %arg5: memref<144x128xbf16, #tpu.memory_space<vmem>>, %arg6: memref<1x128xf32, #tpu.memory_space<vmem>>, %arg7: memref<1x128xf32, #tpu.memory_space<vmem>>, %arg8: memref<32x128xbf16, #tpu.memory_space<vmem>>) attributes {dimension_semantics = [#tpu.dimension_semantics<parallel>, #tpu.dimension_semantics<parallel>], iteration_bounds = array<i64: 1, 1>, scalar_prefetch = 0 : i64, scratch_operands = 0 : i64, tpu.core_type = #tpu.core_type<tc>, window_params = [{transform_indices = @transform_0, window_bounds = array<i64: 32, 144>}, {transform_indices = @transform_1, window_bounds = array<i64: 144, 128>}, {transform_indices = @transform_2, window_bounds = array<i64: 32, 144>}, {transform_indices = @transform_3, window_bounds = array<i64: 144, 128>}, {transform_indices = @transform_4, window_bounds = array<i64: 1, 128>}, {transform_indices = @transform_5, window_bounds = array<i64: 1, 128>}, {transform_indices = @transform_6, window_bounds = array<i64: 32, 128>}]} {
    %c0 = arith.constant 0 : index
    %c0_0 = arith.constant 0 : index
    %0 = vector.load %arg2[%c0, %c0_0] : memref<32x144xbf16, #tpu.memory_space<vmem>>, vector<32x144xbf16>
    %cst = arith.constant 0.000000e+00 : bf16
    %1 = vector.broadcast %cst : bf16 to vector<32x144xbf16>
    %2 = arith.maximumf %0, %1 : vector<32x144xbf16>
    %c0_1 = arith.constant 0 : index
    %c0_2 = arith.constant 0 : index
    %3 = vector.load %arg3[%c0_1, %c0_2] : memref<144x128xbf16, #tpu.memory_space<vmem>>, vector<144x128xbf16>
    %cst_3 = arith.constant dense<0.000000e+00> : vector<32x128xf32>
    %4 = tpu.matmul %2, %3, %cst_3 {dimension_numbers = #tpu.dot_dimension_numbers<[1], [0], [0], [1], [0, 0, 1, 1], [], []>} : vector<32x144xbf16>, vector<144x128xbf16>, vector<32x128xf32> -> vector<32x128xf32>
    %c0_4 = arith.constant 0 : index
    %c0_5 = arith.constant 0 : index
    %5 = vector.load %arg4[%c0_4, %c0_5] : memref<32x144xbf16, #tpu.memory_space<vmem>>, vector<32x144xbf16>
    %cst_6 = arith.constant 0.000000e+00 : bf16
    %6 = vector.broadcast %cst_6 : bf16 to vector<32x144xbf16>
    %7 = arith.maximumf %5, %6 : vector<32x144xbf16>
    %c0_7 = arith.constant 0 : index
    %c0_8 = arith.constant 0 : index
    %8 = vector.load %arg5[%c0_7, %c0_8] : memref<144x128xbf16, #tpu.memory_space<vmem>>, vector<144x128xbf16>
    %cst_9 = arith.constant dense<0.000000e+00> : vector<32x128xf32>
    %9 = tpu.matmul %7, %8, %cst_9 {dimension_numbers = #tpu.dot_dimension_numbers<[1], [0], [0], [1], [0, 0, 1, 1], [], []>} : vector<32x144xbf16>, vector<144x128xbf16>, vector<32x128xf32> -> vector<32x128xf32>
    %10 = arith.addf %4, %9 : vector<32x128xf32>
    %c0_10 = arith.constant 0 : index
    %c0_11 = arith.constant 0 : index
    %11 = vector.load %arg6[%c0_10, %c0_11] : memref<1x128xf32, #tpu.memory_space<vmem>>, vector<1x128xf32>
    %12 = vector.broadcast %11 : vector<1x128xf32> to vector<32x128xf32>
    %13 = arith.mulf %10, %12 : vector<32x128xf32>
    %c0_12 = arith.constant 0 : index
    %c0_13 = arith.constant 0 : index
    %14 = vector.load %arg7[%c0_12, %c0_13] : memref<1x128xf32, #tpu.memory_space<vmem>>, vector<1x128xf32>
    %15 = vector.broadcast %14 : vector<1x128xf32> to vector<32x128xf32>
    %16 = arith.addf %13, %15 : vector<32x128xf32>
    %17 = arith.truncf %16 : vector<32x128xf32> to vector<32x128xbf16>
    %c0_14 = arith.constant 0 : index
    %c0_15 = arith.constant 0 : index
    %18 = vector.load %arg8[%c0_14, %c0_15] : memref<32x128xbf16, #tpu.memory_space<vmem>>, vector<32x128xbf16>
    tpu.vector_store %arg8[%c0_14, %c0_15], %17 {strides = array<i32>} : memref<32x128xbf16, #tpu.memory_space<vmem>>, vector<32x128xbf16>,
    return
  }
  func.func @transform_0(%arg0: i32, %arg1: i32) -> (i32, i32) {
    %c0_i32 = arith.constant 0 : i32
    %c0_i32_0 = arith.constant 0 : i32
    return %arg0, %c0_i32 : i32, i32
  }
  func.func @transform_1(%arg0: i32, %arg1: i32) -> (i32, i32) {
    %c0_i32 = arith.constant 0 : i32
    %c0_i32_0 = arith.constant 0 : i32
    return %c0_i32, %arg1 : i32, i32
  }
  func.func @transform_2(%arg0: i32, %arg1: i32) -> (i32, i32) {
    %c0_i32 = arith.constant 0 : i32
    %c0_i32_0 = arith.constant 0 : i32
    return %arg0, %c0_i32 : i32, i32
  }
  func.func @transform_3(%arg0: i32, %arg1: i32) -> (i32, i32) {
    %c0_i32 = arith.constant 0 : i32
    %c0_i32_0 = arith.constant 0 : i32
    return %c0_i32, %arg1 : i32, i32
  }
  func.func @transform_4(%arg0: i32, %arg1: i32) -> (i32, i32) {
    %c0_i32 = arith.constant 0 : i32
    %c0_i32_0 = arith.constant 0 : i32
    return %c0_i32, %arg1 : i32, i32
  }
  func.func @transform_5(%arg0: i32, %arg1: i32) -> (i32, i32) {
    %c0_i32 = arith.constant 0 : i32
    %c0_i32_0 = arith.constant 0 : i32
    return %c0_i32, %arg1 : i32, i32
  }
  func.func @transform_6(%arg0: i32, %arg1: i32) -> (i32, i32) {
    %c0_i32 = arith.constant 0 : i32
    return %arg0, %arg1 : i32, i32
  }
}

module attributes {stable_mosaic.version = 11 : i64} {
  func.func @kernel(%arg0: i32, %arg1: i32, %arg2: memref<64x72xbf16, #tpu.memory_space<vmem>>, %arg3: memref<72x128xbf16, #tpu.memory_space<vmem>>, %arg4: memref<64x72xbf16, #tpu.memory_space<vmem>>, %arg5: memref<72x128xbf16, #tpu.memory_space<vmem>>, %arg6: memref<1x128xf32, #tpu.memory_space<vmem>>, %arg7: memref<1x128xf32, #tpu.memory_space<vmem>>, %arg8: memref<64x128xbf16, #tpu.memory_space<vmem>>) attributes {dimension_semantics = [#tpu.dimension_semantics<parallel>, #tpu.dimension_semantics<parallel>], iteration_bounds = array<i64: 2, 1>, scalar_prefetch = 0 : i64, scratch_operands = 0 : i64, tpu.core_type = #tpu.core_type<tc>, window_params = [{transform_indices = @transform_0, window_bounds = array<i64: 64, 72>}, {transform_indices = @transform_1, window_bounds = array<i64: 72, 128>}, {transform_indices = @transform_2, window_bounds = array<i64: 64, 72>}, {transform_indices = @transform_3, window_bounds = array<i64: 72, 128>}, {transform_indices = @transform_4, window_bounds = array<i64: 1, 128>}, {transform_indices = @transform_5, window_bounds = array<i64: 1, 128>}, {transform_indices = @transform_6, window_bounds = array<i64: 64, 128>}]} {
    %c0 = arith.constant 0 : index
    %c0_0 = arith.constant 0 : index
    %0 = vector.load %arg2[%c0, %c0_0] : memref<64x72xbf16, #tpu.memory_space<vmem>>, vector<64x72xbf16>
    %cst = arith.constant 0.000000e+00 : bf16
    %1 = vector.broadcast %cst : bf16 to vector<64x72xbf16>
    %2 = arith.maximumf %0, %1 : vector<64x72xbf16>
    %c0_1 = arith.constant 0 : index
    %c0_2 = arith.constant 0 : index
    %3 = vector.load %arg3[%c0_1, %c0_2] : memref<72x128xbf16, #tpu.memory_space<vmem>>, vector<72x128xbf16>
    %cst_3 = arith.constant dense<0.000000e+00> : vector<64x128xf32>
    %4 = tpu.matmul %2, %3, %cst_3 {dimension_numbers = #tpu.dot_dimension_numbers<[1], [0], [0], [1], [0, 0, 1, 1], [], []>} : vector<64x72xbf16>, vector<72x128xbf16>, vector<64x128xf32> -> vector<64x128xf32>
    %c0_4 = arith.constant 0 : index
    %c0_5 = arith.constant 0 : index
    %5 = vector.load %arg4[%c0_4, %c0_5] : memref<64x72xbf16, #tpu.memory_space<vmem>>, vector<64x72xbf16>
    %cst_6 = arith.constant 0.000000e+00 : bf16
    %6 = vector.broadcast %cst_6 : bf16 to vector<64x72xbf16>
    %7 = arith.maximumf %5, %6 : vector<64x72xbf16>
    %c0_7 = arith.constant 0 : index
    %c0_8 = arith.constant 0 : index
    %8 = vector.load %arg5[%c0_7, %c0_8] : memref<72x128xbf16, #tpu.memory_space<vmem>>, vector<72x128xbf16>
    %cst_9 = arith.constant dense<0.000000e+00> : vector<64x128xf32>
    %9 = tpu.matmul %7, %8, %cst_9 {dimension_numbers = #tpu.dot_dimension_numbers<[1], [0], [0], [1], [0, 0, 1, 1], [], []>} : vector<64x72xbf16>, vector<72x128xbf16>, vector<64x128xf32> -> vector<64x128xf32>
    %10 = arith.addf %4, %9 : vector<64x128xf32>
    %c0_10 = arith.constant 0 : index
    %c0_11 = arith.constant 0 : index
    %11 = vector.load %arg6[%c0_10, %c0_11] : memref<1x128xf32, #tpu.memory_space<vmem>>, vector<1x128xf32>
    %12 = vector.broadcast %11 : vector<1x128xf32> to vector<64x128xf32>
    %13 = arith.mulf %10, %12 : vector<64x128xf32>
    %c0_12 = arith.constant 0 : index
    %c0_13 = arith.constant 0 : index
    %14 = vector.load %arg7[%c0_12, %c0_13] : memref<1x128xf32, #tpu.memory_space<vmem>>, vector<1x128xf32>
    %15 = vector.broadcast %14 : vector<1x128xf32> to vector<64x128xf32>
    %16 = arith.addf %13, %15 : vector<64x128xf32>
    %17 = arith.truncf %16 : vector<64x128xf32> to vector<64x128xbf16>
    %c0_14 = arith.constant 0 : index
    %c0_15 = arith.constant 0 : index
    %18 = vector.load %arg8[%c0_14, %c0_15] : memref<64x128xbf16, #tpu.memory_space<vmem>>, vector<64x128xbf16>
    tpu.vector_store %arg8[%c0_14, %c0_15], %17 {strides = array<i32>} : memref<64x128xbf16, #tpu.memory_space<vmem>>, vector<64x128xbf16>,
    return
  }
  func.func @transform_0(%arg0: i32, %arg1: i32) -> (i32, i32) {
    %c0_i32 = arith.constant 0 : i32
    %c0_i32_0 = arith.constant 0 : i32
    return %arg0, %c0_i32 : i32, i32
  }
  func.func @transform_1(%arg0: i32, %arg1: i32) -> (i32, i32) {
    %c0_i32 = arith.constant 0 : i32
    %c0_i32_0 = arith.constant 0 : i32
    return %c0_i32, %arg1 : i32, i32
  }
  func.func @transform_2(%arg0: i32, %arg1: i32) -> (i32, i32) {
    %c0_i32 = arith.constant 0 : i32
    %c0_i32_0 = arith.constant 0 : i32
    return %arg0, %c0_i32 : i32, i32
  }
  func.func @transform_3(%arg0: i32, %arg1: i32) -> (i32, i32) {
    %c0_i32 = arith.constant 0 : i32
    %c0_i32_0 = arith.constant 0 : i32
    return %c0_i32, %arg1 : i32, i32
  }
  func.func @transform_4(%arg0: i32, %arg1: i32) -> (i32, i32) {
    %c0_i32 = arith.constant 0 : i32
    %c0_i32_0 = arith.constant 0 : i32
    return %c0_i32, %arg1 : i32, i32
  }
  func.func @transform_5(%arg0: i32, %arg1: i32) -> (i32, i32) {
    %c0_i32 = arith.constant 0 : i32
    %c0_i32_0 = arith.constant 0 : i32
    return %c0_i32, %arg1 : i32, i32
  }
  func.func @transform_6(%arg0: i32, %arg1: i32) -> (i32, i32) {
    %c0_i32 = arith.constant 0 : i32
    return %arg0, %arg1 : i32, i32
  }
}

</mosaic_0001>

<llo_original>
// kernel: ublock_apply_nchw.8
$region0: #{ublock_apply_nchw.8}
  #allocation0 [shape = 'u32[]', space=smem, size = 0x4, offset = 0x4, fixed_abs, tag = 'smem constant byte address 0x4 - core index']
  #allocation1 [shape = 'u32[144,128]{1,0:T(1,128)}', space=vmem, size = 0x12000, scoped, tag = 'internal scratch']
  %s0 = inlined_call_operand.vmem [shape: bf16[128,64], index: 0, kind: input, shape index: {}]
  %s1 = inlined_call_operand.vmem [shape: bf16[64,128], index: 1, kind: input, shape index: {}]
  %s2 = inlined_call_operand.vmem [shape: bf16[128,128], index: 2, kind: output, shape index: {}]
  %s3 = sld [smem:[#allocation0]]
  $region41: #{ublock_apply_nchw.8} parent=0
    _
  %s5 = ssub.s32 1, %s3
  %s6 = scalar_select 0, %s5, %s3
  loop: start=0, step=1, limit=4
  $region2: #{ublock_apply_nchw.8} parent=0 // loop_pre_header
    _
  $region3: #{ublock_apply_nchw.8} parent=0 // loop_header
    %s8 = sphi 0, %s12
    %p9 = scmp.ge.s32.totalorder %s8, 4
    %s15 = sphi 0, %s27
    %s16 = sphi 0, %s23
    %s17 = sphi 0, %s15
    %s18 = sphi 0, %s16
    %s19 = sphi 0, %s17
    %s20 = sphi 0, %s18
    %s30 = sphi 0, %s32
    %s33 = sphi 0, %s30
    %s34 = sphi 0, %s33
    %s50 = sphi 0, %s34
    %s56 = sphi 0, %s58
    %s59 = sphi 0, %s56
    %s60 = sphi 0, %s59
    %s76 = sphi 0, %s60
    %s84 = sphi 0, %s86
    %s87 = sphi 0, %s84
    %s88 = sphi 0, %s87
    %s104 = sphi 0, %s88
  $region4: #{ublock_apply_nchw.8} parent=0 // loop_header_branch
    %11 = sbr.rel (%p9) target = $region8
  $region5: #{ublock_apply_nchw.8} parent=0 // loop_body
    %s13 = ssub.s32 %s8, 1
    %s14 = ssub.s32 %s8, 2
    %s21 = sadd.s32 1, %s16
    %p22 = scmp.ge.s32.totalorder %s21, 1
    %s23 = scalar_select %p22, 0, %s21
    %s24 = sadd.s32 1, %s15
    %s25 = scalar_select %p22, %s24, %s15
    %p26 = scmp.ge.s32.totalorder %s25, 2
    %s27 = scalar_select %p26, 0, %s25
    %s28 = ssub.s32 %s15, %s27
    %p29 = scmp.eq.s32.totalorder %s28, 0
    %s31 = sadd.s32 %s30, 1
    %s32 = scalar_select %p29, %s30, %s31
    %p35 = pneg %p29
    %p36 = scmp.eq.s32.totalorder %s8, 1
    %p37 = por %p35, %p36
    %p38 = scmp.ne.s32.totalorder %s30, %s33
    %p39 = scmp.eq.s32.totalorder %s8, 0
    %p40 = por %p38, %p39
    %p41 = scmp.ne.s32.totalorder %s30, %s33
    %p42 = scmp.eq.s32.totalorder %s13, 1
    %p43 = por %p41, %p42
    %p44 = scmp.ne.s32.totalorder %s33, %s34
    %p45 = scmp.eq.s32.totalorder %s13, 0
    %p46 = por %p44, %p45
    %p47 = scmp.ne.s32.totalorder %s33, %s34
    %p48 = scmp.eq.s32.totalorder %s14, 1
    %p49 = por %p47, %p48
    %p51 = scmp.ne.s32.totalorder %s34, %s50
    %p52 = scmp.eq.s32.totalorder %s14, 0
    %p53 = por %p51, %p52
    %s54 = ssub.s32 %s16, %s23
    %p55 = scmp.eq.s32.totalorder %s54, 0
    %s57 = sadd.s32 %s56, 1
    %s58 = scalar_select %p55, %s56, %s57
    %p61 = pneg %p55
    %p62 = scmp.eq.s32.totalorder %s8, 1
    %p63 = por %p61, %p62
    %p64 = scmp.ne.s32.totalorder %s56, %s59
    %p65 = scmp.eq.s32.totalorder %s8, 0
    %p66 = por %p64, %p65
    %p67 = scmp.ne.s32.totalorder %s56, %s59
    %p68 = scmp.eq.s32.totalorder %s13, 1
    %p69 = por %p67, %p68
    %p70 = scmp.ne.s32.totalorder %s59, %s60
    %p71 = scmp.eq.s32.totalorder %s13, 0
    %p72 = por %p70, %p71
    %p73 = scmp.ne.s32.totalorder %s59, %s60
    %p74 = scmp.eq.s32.totalorder %s14, 1
    %p75 = por %p73, %p74
    %p77 = scmp.ne.s32.totalorder %s60, %s76
    %p78 = scmp.eq.s32.totalorder %s14, 0
    %p79 = por %p77, %p78
    %s80 = ssub.s32 %s15, %s27
    %s81 = ssub.s32 %s16, %s23
    %s82 = sor.u32 %s80, %s81
    %p83 = scmp.eq.s32.totalorder %s82, 0
    %s85 = sadd.s32 %s84, 1
    %s86 = scalar_select %p83, %s84, %s85
    %p89 = pneg %p83
    %p90 = scmp.eq.s32.totalorder %s8, 1
    %p91 = por %p89, %p90
    %p92 = scmp.ne.s32.totalorder %s84, %s87
    %p93 = scmp.eq.s32.totalorder %s8, 0
    %p94 = por %p92, %p93
    %p95 = scmp.ne.s32.totalorder %s84, %s87
    %p96 = scmp.eq.s32.totalorder %s13, 1
    %p97 = por %p95, %p96
    %p98 = scmp.ne.s32.totalorder %s87, %s88
    %p99 = scmp.eq.s32.totalorder %s13, 0
    %p100 = por %p98, %p99
    %p101 = scmp.ne.s32.totalorder %s87, %s88
    %p102 = scmp.eq.s32.totalorder %s14, 1
    %p103 = por %p101, %p102
    %p105 = scmp.ne.s32.totalorder %s88, %s104
    %p106 = scmp.eq.s32.totalorder %s14, 0
    %p107 = por %p105, %p106
    %p108 = scmp.le.s32.totalorder 1, %s8
    %p109 = scmp.lt.s32.totalorder %s8, 3
    %p110 = pnand %p108, %p109
    %p111 = pneg %p110
    // Predicated region
    $region9: #{ublock_apply_nchw.8} parent=5 // pred_check
      _
    $region10: #{ublock_apply_nchw.8} parent=5 // pred_check_branch
      %113 = sbr.rel (%p110) target = $region12
    $region11: #{ublock_apply_nchw.8} parent=5 // pred_region
      %s114 = ssub.s32 %s8, 1
      // Predicated region
      $region13: #{ublock_apply_nchw.8} parent=11 // pred_check
        %p115 = pneg %p72
      $region14: #{ublock_apply_nchw.8} parent=11 // pred_check_branch
        %117 = sbr.rel (%p115) target = $region16
      $region15: #{ublock_apply_nchw.8} parent=11 // pred_region
        %p118 = scmp.lt.s32.totalorder %s18, 0
        %s119 = scalar_select %p118, %s18, 0
        %s120 = smul.addr %s119, 4
        %s121 = scalar_lea.vmem %s1, %s120
      $region16: #{ublock_apply_nchw.8} parent=11 // pred_fallthru
        _
    $region12: #{ublock_apply_nchw.8} parent=5 // pred_fallthru
      _
    %p122 = scmp.lt.s32.totalorder %s8, 2
    // Predicated region
    $region17: #{ublock_apply_nchw.8} parent=5 // pred_check
      %p123 = pneg %p122
    $region18: #{ublock_apply_nchw.8} parent=5 // pred_check_branch
      %125 = sbr.rel (%p123) target = $region20
    $region19: #{ublock_apply_nchw.8} parent=5 // pred_region
      // Predicated region
      $region21: #{ublock_apply_nchw.8} parent=19 // pred_check
        %p126 = pneg %p40
      $region22: #{ublock_apply_nchw.8} parent=19 // pred_check_branch
        %128 = sbr.rel (%p126) target = $region24
      $region23: #{ublock_apply_nchw.8} parent=19 // pred_region
        %s129 = smul.u32 8, %s15
        %p130 = scmp.lt.s32.totalorder %s129, 15
        %s131 = scalar_select %p130, %s129, 15
        %s132 = smul.addr %s131, 4
        %s133 = scalar_lea.vmem %s0, %s132
        %s134 = smul.u32 8, %s15
      $region24: #{ublock_apply_nchw.8} parent=19 // pred_fallthru
        _
    $region20: #{ublock_apply_nchw.8} parent=5 // pred_fallthru
      _
    %p135 = scmp.le.s32.totalorder 1, %s8
    %p136 = scmp.lt.s32.totalorder %s8, 3
    %p137 = pnand %p135, %p136
    %p138 = pneg %p137
    // Predicated region
    $region25: #{ublock_apply_nchw.8} parent=5 // pred_check
      _
    $region26: #{ublock_apply_nchw.8} parent=5 // pred_check_branch
      %140 = sbr.rel (%p137) target = $region28
    $region27: #{ublock_apply_nchw.8} parent=5 // pred_region
      %s141 = ssub.s32 %s8, 1
      %s142 = smul.u32 8, %s17
      %p143 = scmp.lt.s32.totalorder %s142, 15
      %s144 = scalar_select %p143, %s142, 15
      %s145 = smul.addr %s144, 4
      %s146 = scalar_lea.vmem %s0, %s145
      %p147 = pneg %p46
      %p148 = pneg %p43
      %p149 = scmp.lt.s32.totalorder %s18, 0
      %s150 = scalar_select %p149, %s18, 0
      %s151 = smul.addr %s150, 4
      %s152 = scalar_lea.vmem %s1, %s151
      %p153 = pneg %p72
      %p154 = pneg %p69
      %p155 = pneg %p100
      %p156 = pneg %p97
      %s157 = smul.u32 8, %s17
      %p158 = scmp.lt.s32.totalorder %s157, 15
      %s159 = scalar_select %p158, %s157, 15
      %p160 = scmp.lt.s32.totalorder %s18, 0
      %s161 = scalar_select %p160, %s18, 0
      %s162 = sadd.s32 %s161, %s159
      %s163 = smul.addr %s162, 4
      %s164 = scalar_lea.vmem %s2, %s163
      %s165 = smul.u32 8, %s17
      %p166 = scmp.lt.s32.totalorder %s165, 15
      %s167 = scalar_select %p166, %s165, 15
      %s168 = smul.addr %s167, 4
      %s169 = scalar_lea.vmem %s0, %s168
      %s170 = smul.u32 8, %s17
      %p171 = scmp.lt.s32.totalorder %s18, 0
      %s172 = scalar_select %p171, %s18, 0
      %s173 = smul.addr %s172, 4
      %s174 = scalar_lea.vmem %s1, %s173
      %s175 = smul.u32 8, %s17
      %p176 = scmp.lt.s32.totalorder %s175, 15
      %s177 = scalar_select %p176, %s175, 15
      %p178 = scmp.lt.s32.totalorder %s18, 0
      %s179 = scalar_select %p178, %s18, 0
      %s180 = sadd.s32 %s179, %s177
      %s181 = smul.addr %s180, 4
      %s182 = scalar_lea.vmem %s2, %s181
      %s183 = smul.u32 8, %s17
      %v185 = vld [vmem:[%s169] sm:$0xf]
      %v186 = vld [vmem:[%s169 + $0x4] sm:$0xf]
      %v187 = vld [vmem:[%s169 + $0x8] sm:$0xf]
      %v188 = vld [vmem:[%s169 + $0xc] sm:$0xf]
      %v189 = vld [vmem:[%s169 + $0x10] sm:$0xf]
      %v190 = vld [vmem:[%s169 + $0x14] sm:$0xf]
      %v191 = vld [vmem:[%s169 + $0x18] sm:$0xf]
      %v192 = vld [vmem:[%s169 + $0x1c] sm:$0xf]
      %v193 = vld [vmem:[%s174] sm:$0xf]
      %v194 = vld [vmem:[%s174 + $0x4] sm:$0xf]
      %v195 = vld [vmem:[%s174 + $0x8] sm:$0xf]
      %v196 = vld [vmem:[%s174 + $0xc] sm:$0xf]
      %v197 = vld [vmem:[%s174 + $0x10] sm:$0xf]
      %v198 = vld [vmem:[%s174 + $0x14] sm:$0xf]
      %v199 = vld [vmem:[%s174 + $0x18] sm:$0xf]
      %v200 = vld [vmem:[%s174 + $0x1c] sm:$0xf]
      %v209 = vunpack.c.l.b16 %v185
      %v210 = vunpack.c.l.b16 %v186
      %v211 = vunpack.c.l.b16 %v187
      %v212 = vunpack.c.l.b16 %v188
      %v213 = vunpack.c.l.b16 %v189
      %v214 = vunpack.c.l.b16 %v190
      %v215 = vunpack.c.l.b16 %v191
      %v216 = vunpack.c.l.b16 %v192
      %v217 = vpack.c.b16 %v210, %v209
      %v218 = vpack.c.b16 %v212, %v211
      %v219 = vpack.c.b16 %v214, %v213
      %v220 = vpack.c.b16 %v216, %v215
      %v229 = vunpack.c.l.b16 %v193
      %v230 = vunpack.c.l.b16 %v194
      %v231 = vunpack.c.l.b16 %v195
      %v232 = vunpack.c.l.b16 %v196
      %v233 = vunpack.c.l.b16 %v197
      %v234 = vunpack.c.l.b16 %v198
      %v235 = vunpack.c.l.b16 %v199
      %v236 = vunpack.c.l.b16 %v200
      %v237 = vpack.c.b16 %v230, %v229
      %v238 = vpack.c.b16 %v232, %v231
      %v239 = vpack.c.b16 %v234, %v233
      %v240 = vpack.c.b16 %v236, %v235
      %vm245 = vcmask 523264
      %v247 = vsel %vm245, %v217, 0
      %v250 = vsel %vm245, %v218, 0
      %v253 = vsel %vm245, %v219, 0
      %v256 = vsel %vm245, %v220, 0
      %258 = vmatprep.subr.bf16.mxu0 0
      %259 = vmatpush1.bf16.msra.mxu0 0
      %260 = vmatprep.subr.bf16.mxu0 0
      %261 = vmatpush1.bf16.msra.mxu0 0
      %262 = vmatprep.subr.bf16.mxu0 0
      %263 = vmatpush1.bf16.msra.mxu0 0
      %264 = vmatprep.subr.bf16.mxu0 0
      %265 = vmatpush1.bf16.msra.mxu0 0
      %266 = vmatprep.subr.bf16.mxu0 0
      %267 = vmatpush1.bf16.msra.mxu0 %v240
      %268 = vmatprep.subr.bf16.mxu0 0
      %269 = vmatpush1.bf16.msra.mxu0 %v239
      %270 = vmatprep.subr.bf16.mxu0 0
      %271 = vmatpush1.bf16.msra.mxu0 %v238
      %272 = vmatprep.subr.bf16.mxu0 0
      %273 = vmatpush1.bf16.msra.mxu0 %v237
      %274 = vmatprep.subr.bf16.mxu0 0
      %275 = vmatpush2.bf16.msra.mxu0 0
      %276 = vmatprep.subr.bf16.mxu0 0
      %277 = vmatpush2.bf16.msra.mxu0 0
      %278 = vmatprep.subr.bf16.mxu0 0
      %279 = vmatpush2.bf16.msra.mxu0 0
      %280 = vmatprep.subr.bf16.mxu0 0
      %281 = vmatpush2.bf16.msra.mxu0 0
      %282 = vmatprep.subr.bf16.mxu0 0
      %283 = vmatpush2.bf16.msra.mxu0 0
      %284 = vmatprep.subr.bf16.mxu0 0
      %285 = vmatpush2.bf16.msra.mxu0 0
      %286 = vmatprep.subr.bf16.mxu0 0
      %287 = vmatpush2.bf16.msra.mxu0 0
      %288 = vmatprep.subr.bf16.mxu0 0
      %289 = vmatpush2.bf16.msra.mxu0 0
      %290 = vmatprep.mubr.bf16.mxu0 0
      %291 = vmatmul.mubr.bf16.gmra.mxu0 %v247
      %v292 = vpop.f32.mrf.mxu0
      %v293 = vadd.f32 0.0, %v292
      %v294 = vpop.f32.mrf.mxu0
      %v295 = vpop.f32.mrf.mxu0
      %v296 = vadd.f32 0.0, %v295
      %v297 = vpop.f32.mrf.mxu0
      %298 = vmatprep.mubr.bf16.mxu0 0
      %299 = vmatmul.mubr.bf16.gmra.mxu0 %v250
      %v300 = vpop.f32.mrf.mxu0
      %v301 = vadd.f32 0.0, %v300
      %v302 = vpop.f32.mrf.mxu0
      %v303 = vpop.f32.mrf.mxu0
      %v304 = vadd.f32 0.0, %v303
      %v305 = vpop.f32.mrf.mxu0
      %306 = vmatprep.mubr.bf16.mxu0 0
      %307 = vmatmul.mubr.bf16.gmra.mxu0 %v253
      %v308 = vpop.f32.mrf.mxu0
      %v309 = vadd.f32 0.0, %v308
      %v310 = vpop.f32.mrf.mxu0
      %v311 = vpop.f32.mrf.mxu0
      %v312 = vadd.f32 0.0, %v311
      %v313 = vpop.f32.mrf.mxu0
      %314 = vmatprep.mubr.bf16.mxu0 0
      %315 = vmatmul.mubr.bf16.gmra.mxu0 %v256
      %v316 = vpop.f32.mrf.mxu0
      %v317 = vadd.f32 0.0, %v316
      %v318 = vpop.f32.mrf.mxu0
      %v319 = vpop.f32.mrf.mxu0
      %v320 = vadd.f32 0.0, %v319
      %v321 = vpop.f32.mrf.mxu0
      %322 = vdwg.mxu0
      %v323 = vpack.c.bf16 %v296, %v293
      %v324 = vpack.c.bf16 %v304, %v301
      %v325 = vpack.c.bf16 %v312, %v309
      %v326 = vpack.c.bf16 %v320, %v317
      %v331 = vunpack.c.l.b16 %v323
      %v332 = vunpack.c.h.b16 %v323
      %v333 = vunpack.c.l.b16 %v324
      %v334 = vunpack.c.h.b16 %v324
      %v335 = vunpack.c.l.b16 %v325
      %v336 = vunpack.c.h.b16 %v325
      %v337 = vunpack.c.l.b16 %v326
      %v338 = vunpack.c.h.b16 %v326
      %v339 = vpack.c.b16 %v331, %v331
      %v340 = vpack.c.b16 %v332, %v332
      %v341 = vpack.c.b16 %v333, %v333
      %v342 = vpack.c.b16 %v334, %v334
      %v343 = vpack.c.b16 %v335, %v335
      %v344 = vpack.c.b16 %v336, %v336
      %v345 = vpack.c.b16 %v337, %v337
      %v346 = vpack.c.b16 %v338, %v338
      %355 = vst [vmem:[%s182] sm:$0xf] %v339
      %356 = vst [vmem:[%s182 + $0x4] sm:$0xf] %v340
      %357 = vst [vmem:[%s182 + $0x8] sm:$0xf] %v341
      %358 = vst [vmem:[%s182 + $0xc] sm:$0xf] %v342
      %359 = vst [vmem:[%s182 + $0x10] sm:$0xf] %v343
      %360 = vst [vmem:[%s182 + $0x14] sm:$0xf] %v344
      %361 = vst [vmem:[%s182 + $0x18] sm:$0xf] %v345
      %362 = vst [vmem:[%s182 + $0x1c] sm:$0xf] %v346
      %s363 = smul.u32 8, %s17
      %p364 = scmp.lt.s32.totalorder %s363, 15
      %s365 = scalar_select %p364, %s363, 15
      %p366 = scmp.lt.s32.totalorder %s18, 0
      %s367 = scalar_select %p366, %s18, 0
      %s368 = sadd.s32 %s367, %s365
      %s369 = smul.addr %s368, 4
      %s370 = scalar_lea.vmem %s2, %s369
      // Predicated region
      $region29: #{ublock_apply_nchw.8} parent=27 // pred_check
        %p371 = pneg %p97
      $region30: #{ublock_apply_nchw.8} parent=27 // pred_check_branch
        %373 = sbr.rel (%p371) target = $region32
      $region31: #{ublock_apply_nchw.8} parent=27 // pred_region
        %s374 = smul.u32 8, %s17
      $region32: #{ublock_apply_nchw.8} parent=27 // pred_fallthru
        _
    $region28: #{ublock_apply_nchw.8} parent=5 // pred_fallthru
      _
    %p375 = scmp.le.s32.totalorder 2, %s8
    // Predicated region
    $region33: #{ublock_apply_nchw.8} parent=5 // pred_check
      %p376 = pneg %p375
    $region34: #{ublock_apply_nchw.8} parent=5 // pred_check_branch
      %378 = sbr.rel (%p376) target = $region36
    $region35: #{ublock_apply_nchw.8} parent=5 // pred_region
      %s379 = ssub.s32 %s8, 2
      // Predicated region
      $region37: #{ublock_apply_nchw.8} parent=35 // pred_check
        %p380 = pneg %p103
      $region38: #{ublock_apply_nchw.8} parent=35 // pred_check_branch
        %382 = sbr.rel (%p380) target = $region40
      $region39: #{ublock_apply_nchw.8} parent=35 // pred_region
        %s383 = smul.u32 8, %s19
        %p384 = scmp.lt.s32.totalorder %s383, 15
        %s385 = scalar_select %p384, %s383, 15
        %p386 = scmp.lt.s32.totalorder %s20, 0
        %s387 = scalar_select %p386, %s20, 0
        %s388 = sadd.s32 %s387, %s385
        %s389 = smul.addr %s388, 4
        %s390 = scalar_lea.vmem %s2, %s389
      $region40: #{ublock_apply_nchw.8} parent=35 // pred_fallthru
        _
    $region36: #{ublock_apply_nchw.8} parent=5 // pred_fallthru
      _
  $region6: #{ublock_apply_nchw.8} parent=0 // loop_footer
    %s12 = sadd.s32 1, %s8
  $region7: #{ublock_apply_nchw.8} parent=0 // loop_footer_branch
    %7 = sbr.rel target = $region3
  $region8: #{ublock_apply_nchw.8} parent=0 // loop_exit
    _

// kernel: tile.73
$region0: #{tile.73}
  #allocation0 [shape = 's32[1]{0}', space=sflag, size = 0x4, scoped, tag = 'scoped memory for tile.73']
  %s0 = inlined_call_operand.vmem [shape: f32[8], index: 0, kind: input, shape index: {}]
  %s1 = inlined_call_operand.vmem [shape: f32[16,8], index: 1, kind: output, shape index: {}]
  // Predicated region
  $region2: #{tile.73} parent=0 // pred_check
    _
  $region3: #{tile.73} parent=0 // pred_check_branch
    %3 = sbr.rel (0) target = $region5
  $region4: #{tile.73} parent=0 // pred_region
    _
  $region5: #{tile.73} parent=0 // pred_fallthru
    _
  %v4 = vld [vmem:[%s0] ss:$0 sm:$0xff]
  %5 = vst [vmem:[%s1] sm:$0xff] %v4
  %s6 = scalar_lea.vmem %s1, 8
  %7 = vst [vmem:[%s6] sm:$0xff] %v4

// kernel: tile.78
$region0: #{tile.78}
  %s0 = inlined_call_operand.vmem [shape: f32[16,8], index: 0, kind: input, shape index: {}]
  %s1 = inlined_call_operand.vmem [shape: f32[1,128], index: 1, kind: output, shape index: {}]
  $region1: #{tile.78} parent=0
    #allocation0 [shape = 'u8[4096]{0}', space=vmem, size = 0x1000, scoped, tag = 'scoped mem for output reshape']
    %v2 = vld [vmem:[%s0] sm:$0x1]
    %vm3 = vcmask 64512
    %4 = vst.msk [vmem:[#allocation0] sm:$0x1] %vm3, %v2
    %s5 = scalar_lea.vmem %s0, 15
    %v6 = vld [vmem:[%s5] sm:$0x1]
    %7 = vrot.lane.b32.xlu0 %v6, 120
    %v8 = vpop.permute.xlu0 %7
    %vm9 = vcmask 1048512
    %10 = vst.msk [vmem:[#allocation0] sm:$0x1] %vm9, %v8
    %s11 = scalar_lea.vmem %s0, 14
    %v12 = vld [vmem:[%s11] sm:$0x1]
    %13 = vrot.lane.b32.xlu0 %v12, 112
    %v14 = vpop.permute.xlu0 %13
    %vm15 = vcmask 982912
    %16 = vst.msk [vmem:[#allocation0] sm:$0x1] %vm15, %v14
    %s17 = scalar_lea.vmem %s0, 13
    %v18 = vld [vmem:[%s17] sm:$0x1]
    %19 = vrot.lane.b32.xlu0 %v18, 104
    %v20 = vpop.permute.xlu0 %19
    %vm21 = vcmask 917312
    %22 = vst.msk [vmem:[#allocation0] sm:$0x1] %vm21, %v20
    %s23 = scalar_lea.vmem %s0, 12
    %v24 = vld [vmem:[%s23] sm:$0x1]
    %25 = vrot.lane.b32.xlu0 %v24, 96
    %v26 = vpop.permute.xlu0 %25
    %vm27 = vcmask 851712
    %28 = vst.msk [vmem:[#allocation0] sm:$0x1] %vm27, %v26
    %s29 = scalar_lea.vmem %s0, 11
    %v30 = vld [vmem:[%s29] sm:$0x1]
    %31 = vrot.lane.b32.xlu0 %v30, 88
    %v32 = vpop.permute.xlu0 %31
    %vm33 = vcmask 786112
    %34 = vst.msk [vmem:[#allocation0] sm:$0x1] %vm33, %v32
    %s35 = scalar_lea.vmem %s0, 10
    %v36 = vld [vmem:[%s35] sm:$0x1]
    %37 = vrot.lane.b32.xlu0 %v36, 80
    %v38 = vpop.permute.xlu0 %37
    %vm39 = vcmask 720512
    %40 = vst.msk [vmem:[#allocation0] sm:$0x1] %vm39, %v38
    %s41 = scalar_lea.vmem %s0, 9
    %v42 = vld [vmem:[%s41] sm:$0x1]
    %43 = vrot.lane.b32.xlu0 %v42, 72
    %v44 = vpop.permute.xlu0 %43
    %vm45 = vcmask 654912
    %46 = vst.msk [vmem:[#allocation0] sm:$0x1] %vm45, %v44
    %s47 = scalar_lea.vmem %s0, 8
    %v48 = vld [vmem:[%s47] sm:$0x1]
    %49 = vrot.lane.b32.xlu0 %v48, 64
    %v50 = vpop.permute.xlu0 %49
    %vm51 = vcmask 589312
    %52 = vst.msk [vmem:[#allocation0] sm:$0x1] %vm51, %v50
    %s53 = scalar_lea.vmem %s0, 7
    %v54 = vld [vmem:[%s53] sm:$0x1]
    %55 = vrot.lane.b32.xlu0 %v54, 56
    %v56 = vpop.permute.xlu0 %55
    %vm57 = vcmask 523712
    %58 = vst.msk [vmem:[#allocation0] sm:$0x1] %vm57, %v56
    %s59 = scalar_lea.vmem %s0, 6
    %v60 = vld [vmem:[%s59] sm:$0x1]
    %61 = vrot.lane.b32.xlu0 %v60, 48
    %v62 = vpop.permute.xlu0 %61
    %vm63 = vcmask 458112
    %64 = vst.msk [vmem:[#allocation0] sm:$0x1] %vm63, %v62
    %s65 = scalar_lea.vmem %s0, 5
    %v66 = vld [vmem:[%s65] sm:$0x1]
    %67 = vrot.lane.b32.xlu0 %v66, 40
    %v68 = vpop.permute.xlu0 %67
    %vm69 = vcmask 392512
    %70 = vst.msk [vmem:[#allocation0] sm:$0x1] %vm69, %v68
    %s71 = scalar_lea.vmem %s0, 4
    %v72 = vld [vmem:[%s71] sm:$0x1]
    %73 = vrot.lane.b32.xlu0 %v72, 32
    %v74 = vpop.permute.xlu0 %73
    %vm75 = vcmask 326912
    %76 = vst.msk [vmem:[#allocation0] sm:$0x1] %vm75, %v74
    %s77 = scalar_lea.vmem %s0, 3
    %v78 = vld [vmem:[%s77] sm:$0x1]
    %79 = vrot.lane.b32.xlu0 %v78, 24
    %v80 = vpop.permute.xlu0 %79
    %vm81 = vcmask 261312
    %82 = vst.msk [vmem:[#allocation0] sm:$0x1] %vm81, %v80
    %s83 = scalar_lea.vmem %s0, 2
    %v84 = vld [vmem:[%s83] sm:$0x1]
    %85 = vrot.lane.b32.xlu0 %v84, 16
    %v86 = vpop.permute.xlu0 %85
    %vm87 = vcmask 195712
    %88 = vst.msk [vmem:[#allocation0] sm:$0x1] %vm87, %v86
    %s89 = scalar_lea.vmem %s0, 1
    %v90 = vld [vmem:[%s89] sm:$0x1]
    %91 = vrot.lane.b32.xlu0 %v90, 8
    %v92 = vpop.permute.xlu0 %91
    %vm93 = vcmask 130112
    %94 = vst.msk [vmem:[#allocation0] sm:$0x1] %vm93, %v92
    %s96 = sshll.u32 1, 1
    %s97 = ssub.s32 %s96, 1
    %v99 = vld [vmem:[#allocation0] sm:%s97]
    %s100 = sshll.u32 1, 1
    %s101 = ssub.s32 %s100, 1
    %102 = vst [vmem:[%s1] sm:%s101] %v99

// kernel: ublock_apply_nchw.9
$region0: #{ublock_apply_nchw.9}
  #allocation0 [shape = 'u32[]', space=smem, size = 0x4, offset = 0x4, fixed_abs, tag = 'smem constant byte address 0x4 - core index']
  #allocation1 [shape = 'u32[144,128]{1,0:T(1,128)}', space=vmem, size = 0x12000, scoped, tag = 'internal scratch']
  %s0 = inlined_call_operand.vmem [shape: bf16[32,128], index: 0, kind: input, shape index: {}]
  %s1 = inlined_call_operand.vmem [shape: bf16[128,128], index: 1, kind: input, shape index: {}]
  %s2 = inlined_call_operand.vmem [shape: f32[1,128], index: 2, kind: input, shape index: {}]
  %s3 = inlined_call_operand.vmem [shape: f32[1,128], index: 3, kind: input, shape index: {}]
  %s4 = inlined_call_operand.vmem [shape: bf16[32,128], index: 4, kind: output, shape index: {}]
  %s5 = sld [smem:[#allocation0]]
  $region26: #{ublock_apply_nchw.9} parent=0
    _
  %s7 = ssub.s32 1, %s5
  %s8 = scalar_select 0, %s7, %s5
  // Predicated region
  $region2: #{ublock_apply_nchw.9} parent=0 // pred_check
    _
  $region3: #{ublock_apply_nchw.9} parent=0 // pred_check_branch
    %10 = sbr.rel (0) target = $region5
  $region4: #{ublock_apply_nchw.9} parent=0 // pred_region
    _
  $region5: #{ublock_apply_nchw.9} parent=0 // pred_fallthru
    _
  // Predicated region
  $region6: #{ublock_apply_nchw.9} parent=0 // pred_check
    _
  $region7: #{ublock_apply_nchw.9} parent=0 // pred_check_branch
    %12 = sbr.rel (0) target = $region9
  $region8: #{ublock_apply_nchw.9} parent=0 // pred_region
    _
  $region9: #{ublock_apply_nchw.9} parent=0 // pred_fallthru
    _
  // Predicated region
  $region10: #{ublock_apply_nchw.9} parent=0 // pred_check
    _
  $region11: #{ublock_apply_nchw.9} parent=0 // pred_check_branch
    %14 = sbr.rel (0) target = $region13
  $region12: #{ublock_apply_nchw.9} parent=0 // pred_region
    _
  $region13: #{ublock_apply_nchw.9} parent=0 // pred_fallthru
    _
  // Predicated region
  $region14: #{ublock_apply_nchw.9} parent=0 // pred_check
    _
  $region15: #{ublock_apply_nchw.9} parent=0 // pred_check_branch
    %16 = sbr.rel (0) target = $region17
  $region16: #{ublock_apply_nchw.9} parent=0 // pred_region
    _
  $region17: #{ublock_apply_nchw.9} parent=0 // pred_fallthru
    _
  %v18 = vld [vmem:[%s0] sm:$0xf]
  %v19 = vld [vmem:[%s0 + $0x4] sm:$0xf]
  %v20 = vld [vmem:[%s0 + $0x8] sm:$0xf]
  %v21 = vld [vmem:[%s0 + $0xc] sm:$0xf]
  %v22 = vunpack.c.l.bf16 %v18
  %v23 = vunpack.c.l.bf16 %v19
  %v24 = vunpack.c.l.bf16 %v20
  %v25 = vunpack.c.l.bf16 %v21
  %v26 = vld [vmem:[%s2] sm:$0x1]
  %v28 = vlaneseq
  %v29 = vshrl.u32 %v28, 7
  %v30 = vsub.s32 0, %v29
  %v31 = vrot.slane %v26, %v30
  %v33 = vmul.f32 %v22, %v31
  %v34 = vmul.f32 %v23, %v31
  %v35 = vmul.f32 %v24, %v31
  %v36 = vmul.f32 %v25, %v31
  %v37 = vld [vmem:[%s3] sm:$0x1]
  %v39 = vlaneseq
  %v40 = vshrl.u32 %v39, 7
  %v41 = vsub.s32 0, %v40
  %v42 = vrot.slane %v37, %v41
  %v44 = vadd.f32 %v33, %v42
  %v45 = vadd.f32 %v34, %v42
  %v46 = vadd.f32 %v35, %v42
  %v47 = vadd.f32 %v36, %v42
  %vm48 = vcmp.ge.f32.partialorder %v44, 0.0
  %vm49 = vcmp.ge.f32.partialorder %v45, 0.0
  %vm50 = vcmp.ge.f32.partialorder %v46, 0.0
  %vm51 = vcmp.ge.f32.partialorder %v47, 0.0
  %v52 = vmul.f32 %v44, 0.2
  %v53 = vmul.f32 %v45, 0.2
  %v54 = vmul.f32 %v46, 0.2
  %v55 = vmul.f32 %v47, 0.2
  %v56 = vsel %vm48, %v44, %v52
  %v57 = vsel %vm49, %v45, %v53
  %v58 = vsel %vm50, %v46, %v54
  %v59 = vsel %vm51, %v47, %v55
  %v60 = vpack.c.bf16 %v57, %v56
  %v61 = vpack.c.bf16 %v59, %v58
  %v62 = vld [vmem:[%s1] sm:$0xf]
  %v63 = vld [vmem:[%s1 + $0x4] sm:$0xf]
  %v64 = vld [vmem:[%s1 + $0x8] sm:$0xf]
  %v65 = vld [vmem:[%s1 + $0xc] sm:$0xf]
  %v66 = vld [vmem:[%s1 + $0x10] sm:$0xf]
  %v67 = vld [vmem:[%s1 + $0x14] sm:$0xf]
  %v68 = vld [vmem:[%s1 + $0x18] sm:$0xf]
  %v69 = vld [vmem:[%s1 + $0x1c] sm:$0xf]
  %v70 = vld [vmem:[%s1 + $0x20] sm:$0xf]
  %v71 = vld [vmem:[%s1 + $0x24] sm:$0xf]
  %v72 = vld [vmem:[%s1 + $0x28] sm:$0xf]
  %v73 = vld [vmem:[%s1 + $0x2c] sm:$0xf]
  %v74 = vld [vmem:[%s1 + $0x30] sm:$0xf]
  %v75 = vld [vmem:[%s1 + $0x34] sm:$0xf]
  %v76 = vld [vmem:[%s1 + $0x38] sm:$0xf]
  %v77 = vld [vmem:[%s1 + $0x3c] sm:$0xf]
  %v94 = vunpack.c.l.b16 %v62
  %v95 = vunpack.c.l.b16 %v63
  %v96 = vunpack.c.l.b16 %v64
  %v97 = vunpack.c.l.b16 %v65
  %v98 = vunpack.c.l.b16 %v66
  %v99 = vunpack.c.l.b16 %v67
  %v100 = vunpack.c.l.b16 %v68
  %v101 = vunpack.c.l.b16 %v69
  %v102 = vunpack.c.l.b16 %v70
  %v103 = vunpack.c.l.b16 %v71
  %v104 = vunpack.c.l.b16 %v72
  %v105 = vunpack.c.l.b16 %v73
  %v106 = vunpack.c.l.b16 %v74
  %v107 = vunpack.c.l.b16 %v75
  %v108 = vunpack.c.l.b16 %v76
  %v109 = vunpack.c.l.b16 %v77
  %v110 = vpack.c.b16 %v95, %v94
  %v111 = vpack.c.b16 %v97, %v96
  %v112 = vpack.c.b16 %v99, %v98
  %v113 = vpack.c.b16 %v101, %v100
  %v114 = vpack.c.b16 %v103, %v102
  %v115 = vpack.c.b16 %v105, %v104
  %v116 = vpack.c.b16 %v107, %v106
  %v117 = vpack.c.b16 %v109, %v108
  %126 = vmatprep.subr.bf16.mxu0 0
  %127 = vmatpush1.bf16.msra.mxu0 %v117
  %128 = vmatprep.subr.bf16.mxu0 0
  %129 = vmatpush1.bf16.msra.mxu0 %v116
  %130 = vmatprep.subr.bf16.mxu0 0
  %131 = vmatpush1.bf16.msra.mxu0 %v115
  %132 = vmatprep.subr.bf16.mxu0 0
  %133 = vmatpush1.bf16.msra.mxu0 %v114
  %134 = vmatprep.subr.bf16.mxu0 0
  %135 = vmatpush1.bf16.msra.mxu0 %v113
  %136 = vmatprep.subr.bf16.mxu0 0
  %137 = vmatpush1.bf16.msra.mxu0 %v112
  %138 = vmatprep.subr.bf16.mxu0 0
  %139 = vmatpush1.bf16.msra.mxu0 %v111
  %140 = vmatprep.subr.bf16.mxu0 0
  %141 = vmatpush1.bf16.msra.mxu0 %v110
  %142 = vmatprep.subr.bf16.mxu0 0
  %143 = vmatpush2.bf16.msra.mxu0 0
  %144 = vmatprep.subr.bf16.mxu0 0
  %145 = vmatpush2.bf16.msra.mxu0 0
  %146 = vmatprep.subr.bf16.mxu0 0
  %147 = vmatpush2.bf16.msra.mxu0 0
  %148 = vmatprep.subr.bf16.mxu0 0
  %149 = vmatpush2.bf16.msra.mxu0 0
  %150 = vmatprep.subr.bf16.mxu0 0
  %151 = vmatpush2.bf16.msra.mxu0 0
  %152 = vmatprep.subr.bf16.mxu0 0
  %153 = vmatpush2.bf16.msra.mxu0 0
  %154 = vmatprep.subr.bf16.mxu0 0
  %155 = vmatpush2.bf16.msra.mxu0 0
  %156 = vmatprep.subr.bf16.mxu0 0
  %157 = vmatpush2.bf16.msra.mxu0 0
  %158 = vmatprep.mubr.bf16.mxu0 0
  %159 = vmatmul.mubr.bf16.gmra.mxu0 %v60
  %v160 = vpop.f32.mrf.mxu0
  %v161 = vadd.f32 0.0, %v160
  %v162 = vpop.f32.mrf.mxu0
  %v163 = vpop.f32.mrf.mxu0
  %v164 = vadd.f32 0.0, %v163
  %v165 = vpop.f32.mrf.mxu0
  %166 = vmatprep.mubr.bf16.mxu0 0
  %167 = vmatmul.mubr.bf16.gmra.mxu0 %v61
  %v168 = vpop.f32.mrf.mxu0
  %v169 = vadd.f32 0.0, %v168
  %v170 = vpop.f32.mrf.mxu0
  %v171 = vpop.f32.mrf.mxu0
  %v172 = vadd.f32 0.0, %v171
  %v173 = vpop.f32.mrf.mxu0
  %174 = vdwg.mxu0
  %v175 = vpack.c.bf16 %v164, %v161
  %v176 = vpack.c.bf16 %v172, %v169
  %v179 = vunpack.c.l.b16 %v175
  %v180 = vunpack.c.h.b16 %v175
  %v181 = vunpack.c.l.b16 %v176
  %v182 = vunpack.c.h.b16 %v176
  %v183 = vpack.c.b16 %v179, %v179
  %v184 = vpack.c.b16 %v180, %v180
  %v185 = vpack.c.b16 %v181, %v181
  %v186 = vpack.c.b16 %v182, %v182
  %191 = vst [vmem:[%s4] sm:$0xf] %v183
  %192 = vst [vmem:[%s4 + $0x4] sm:$0xf] %v184
  %193 = vst [vmem:[%s4 + $0x8] sm:$0xf] %v185
  %194 = vst [vmem:[%s4 + $0xc] sm:$0xf] %v186
  // Predicated region
  $region18: #{ublock_apply_nchw.9} parent=0 // pred_check
    _
  $region19: #{ublock_apply_nchw.9} parent=0 // pred_check_branch
    %196 = sbr.rel (0) target = $region21
  $region20: #{ublock_apply_nchw.9} parent=0 // pred_region
    _
  $region21: #{ublock_apply_nchw.9} parent=0 // pred_fallthru
    _
  // Predicated region
  $region22: #{ublock_apply_nchw.9} parent=0 // pred_check
    _
  $region23: #{ublock_apply_nchw.9} parent=0 // pred_check_branch
    %198 = sbr.rel (0) target = $region25
  $region24: #{ublock_apply_nchw.9} parent=0 // pred_region
    _
  $region25: #{ublock_apply_nchw.9} parent=0 // pred_fallthru
    _

// kernel: tile.83
$region0: #{tile.83}
  #allocation0 [shape = 's32[1]{0}', space=sflag, size = 0x4, scoped, tag = 'scoped memory for tile.83']
  %s0 = inlined_call_operand.vmem [shape: f32[16], index: 0, kind: input, shape index: {}]
  %s1 = inlined_call_operand.vmem [shape: f32[16,16], index: 1, kind: output, shape index: {}]
  // Predicated region
  $region2: #{tile.83} parent=0 // pred_check
    _
  $region3: #{tile.83} parent=0 // pred_check_branch
    %3 = sbr.rel (0) target = $region5
  $region4: #{tile.83} parent=0 // pred_region
    _
  $region5: #{tile.83} parent=0 // pred_fallthru
    _
  %v4 = vld [vmem:[%s0] ss:$0 sm:$0xff]
  %5 = vst [vmem:[%s1] sm:$0xff] %v4
  %s6 = scalar_lea.vmem %s1, 8
  %7 = vst [vmem:[%s6] sm:$0xff] %v4

// kernel: tile.88
$region0: #{tile.88}
  %s0 = inlined_call_operand.vmem [shape: f32[16,16], index: 0, kind: input, shape index: {}]
  %s1 = inlined_call_operand.vmem [shape: f32[1,256], index: 1, kind: output, shape index: {}]
  $region1: #{tile.88} parent=0
    #allocation0 [shape = 'u8[8192]{0}', space=vmem, size = 0x2000, scoped, tag = 'scoped mem for output reshape']
    %s2 = smov 3
    %v3 = vld [vmem:[%s0] ss:$8 sm:%s2]
    %vm4 = vcmask 130048
    %5 = vst.msk [vmem:[#allocation0] ss:$8 sm:$0x3] %vm4, %v3
    %s6 = scalar_lea.vmem %s0, 7
    %s7 = smov 3
    %v8 = vld [vmem:[%s6] ss:$8 sm:%s7]
    %9 = vrot.lane.b32.xlu0 %v8, 112
    %v10 = vpop.permute.xlu0 %9
    %vm11 = vcmask 1048448
    %12 = vst.msk [vmem:[#allocation0] ss:$8 sm:$0x3] %vm11, %v10
    %s13 = scalar_lea.vmem %s0, 6
    %s14 = smov 3
    %v15 = vld [vmem:[%s13] ss:$8 sm:%s14]
    %16 = vrot.lane.b32.xlu0 %v15, 96
    %v17 = vpop.permute.xlu0 %16
    %vm18 = vcmask 917248
    %19 = vst.msk [vmem:[#allocation0] ss:$8 sm:$0x3] %vm18, %v17
    %s20 = scalar_lea.vmem %s0, 5
    %s21 = smov 3
    %v22 = vld [vmem:[%s20] ss:$8 sm:%s21]
    %23 = vrot.lane.b32.xlu0 %v22, 80
    %v24 = vpop.permute.xlu0 %23
    %vm25 = vcmask 786048
    %26 = vst.msk [vmem:[#allocation0] ss:$8 sm:$0x3] %vm25, %v24
    %s27 = scalar_lea.vmem %s0, 4
    %s28 = smov 3
    %v29 = vld [vmem:[%s27] ss:$8 sm:%s28]
    %30 = vrot.lane.b32.xlu0 %v29, 64
    %v31 = vpop.permute.xlu0 %30
    %vm32 = vcmask 654848
    %33 = vst.msk [vmem:[#allocation0] ss:$8 sm:$0x3] %vm32, %v31
    %s34 = scalar_lea.vmem %s0, 3
    %s35 = smov 3
    %v36 = vld [vmem:[%s34] ss:$8 sm:%s35]
    %37 = vrot.lane.b32.xlu0 %v36, 48
    %v38 = vpop.permute.xlu0 %37
    %vm39 = vcmask 523648
    %40 = vst.msk [vmem:[#allocation0] ss:$8 sm:$0x3] %vm39, %v38
    %s41 = scalar_lea.vmem %s0, 2
    %s42 = smov 3
    %v43 = vld [vmem:[%s41] ss:$8 sm:%s42]
    %44 = vrot.lane.b32.xlu0 %v43, 32
    %v45 = vpop.permute.xlu0 %44
    %vm46 = vcmask 392448
    %47 = vst.msk [vmem:[#allocation0] ss:$8 sm:$0x3] %vm46, %v45
    %s48 = scalar_lea.vmem %s0, 1
    %s49 = smov 3
    %v50 = vld [vmem:[%s48] ss:$8 sm:%s49]
    %51 = vrot.lane.b32.xlu0 %v50, 16
    %v52 = vpop.permute.xlu0 %51
    %vm53 = vcmask 261248
    %54 = vst.msk [vmem:[#allocation0] ss:$8 sm:$0x3] %vm53, %v52
    %s56 = sshll.u32 1, 1
    %s57 = ssub.s32 %s56, 1
    %v59 = vld [vmem:[#allocation0] sm:%s57]
    %s60 = sshll.u32 1, 1
    %s61 = ssub.s32 %s60, 1
    %62 = vst [vmem:[%s1] sm:%s61] %v59
    %s63 = scalar_lea.vmem [#allocation0], 8
    %v64 = vld [vmem:[%s63] sm:%s57]
    %s65 = sshll.u32 1, 1
    %s66 = ssub.s32 %s65, 1
    %s67 = scalar_lea.vmem %s1, 1
    %68 = vst [vmem:[%s67] sm:%s66] %v64

// kernel: ublock_apply_nchw.10
$region0: #{ublock_apply_nchw.10}
  #allocation0 [shape = 'u32[]', space=smem, size = 0x4, offset = 0x4, fixed_abs, tag = 'smem constant byte address 0x4 - core index']
  #allocation1 [shape = 'u32[144,128]{1,0:T(1,128)}', space=vmem, size = 0x12000, scoped, tag = 'internal scratch']
  %s0 = inlined_call_operand.vmem [shape: bf16[16,256], index: 0, kind: input, shape index: {}]
  %s1 = inlined_call_operand.vmem [shape: bf16[256,128], index: 1, kind: input, shape index: {}]
  %s2 = inlined_call_operand.vmem [shape: f32[1,256], index: 2, kind: input, shape index: {}]
  %s3 = inlined_call_operand.vmem [shape: f32[1,256], index: 3, kind: input, shape index: {}]
  %s4 = inlined_call_operand.vmem [shape: bf16[16,128], index: 4, kind: output, shape index: {}]
  %s5 = sld [smem:[#allocation0]]
  $region26: #{ublock_apply_nchw.10} parent=0
    _
  %s7 = ssub.s32 1, %s5
  %s8 = scalar_select 0, %s7, %s5
  // Predicated region
  $region2: #{ublock_apply_nchw.10} parent=0 // pred_check
    _
  $region3: #{ublock_apply_nchw.10} parent=0 // pred_check_branch
    %10 = sbr.rel (0) target = $region5
  $region4: #{ublock_apply_nchw.10} parent=0 // pred_region
    _
  $region5: #{ublock_apply_nchw.10} parent=0 // pred_fallthru
    _
  // Predicated region
  $region6: #{ublock_apply_nchw.10} parent=0 // pred_check
    _
  $region7: #{ublock_apply_nchw.10} parent=0 // pred_check_branch
    %12 = sbr.rel (0) target = $region9
  $region8: #{ublock_apply_nchw.10} parent=0 // pred_region
    _
  $region9: #{ublock_apply_nchw.10} parent=0 // pred_fallthru
    _
  // Predicated region
  $region10: #{ublock_apply_nchw.10} parent=0 // pred_check
    _
  $region11: #{ublock_apply_nchw.10} parent=0 // pred_check_branch
    %14 = sbr.rel (0) target = $region13
  $region12: #{ublock_apply_nchw.10} parent=0 // pred_region
    _
  $region13: #{ublock_apply_nchw.10} parent=0 // pred_fallthru
    _
  // Predicated region
  $region14: #{ublock_apply_nchw.10} parent=0 // pred_check
    _
  $region15: #{ublock_apply_nchw.10} parent=0 // pred_check_branch
    %16 = sbr.rel (0) target = $region17
  $region16: #{ublock_apply_nchw.10} parent=0 // pred_region
    _
  $region17: #{ublock_apply_nchw.10} parent=0 // pred_fallthru
    _
  %v18 = vld [vmem:[%s0] sm:$0xff]
  %v19 = vld [vmem:[%s0 + $0x8] sm:$0xff]
  %v20 = vunpack.c.l.bf16 %v18
  %v21 = vunpack.c.h.bf16 %v18
  %v22 = vunpack.c.l.bf16 %v19
  %v23 = vunpack.c.h.bf16 %v19
  %v24 = vld [vmem:[%s2] sm:$0x3]
  %v26 = vlaneseq
  %v27 = vshrl.u32 %v26, 7
  %v28 = vsub.s32 0, %v27
  %v29 = vrot.slane %v24, %v28
  %v30 = vlaneseq
  %v31 = vshrl.u32 %v30, 7
  %v32 = vsub.s32 1, %v31
  %v33 = vrot.slane %v24, %v32
  %v36 = vmul.f32 %v20, %v29
  %v37 = vmul.f32 %v21, %v33
  %v38 = vmul.f32 %v22, %v29
  %v39 = vmul.f32 %v23, %v33
  %v40 = vld [vmem:[%s3] sm:$0x3]
  %v42 = vlaneseq
  %v43 = vshrl.u32 %v42, 7
  %v44 = vsub.s32 0, %v43
  %v45 = vrot.slane %v40, %v44
  %v46 = vlaneseq
  %v47 = vshrl.u32 %v46, 7
  %v48 = vsub.s32 1, %v47
  %v49 = vrot.slane %v40, %v48
  %v52 = vadd.f32 %v36, %v45
  %v53 = vadd.f32 %v37, %v49
  %v54 = vadd.f32 %v38, %v45
  %v55 = vadd.f32 %v39, %v49
  %vm56 = vcmp.ge.f32.partialorder %v52, 0.0
  %vm57 = vcmp.ge.f32.partialorder %v53, 0.0
  %vm58 = vcmp.ge.f32.partialorder %v54, 0.0
  %vm59 = vcmp.ge.f32.partialorder %v55, 0.0
  %v60 = vmul.f32 %v52, 0.2
  %v61 = vmul.f32 %v53, 0.2
  %v62 = vmul.f32 %v54, 0.2
  %v63 = vmul.f32 %v55, 0.2
  %v64 = vsel %vm56, %v52, %v60
  %v65 = vsel %vm57, %v53, %v61
  %v66 = vsel %vm58, %v54, %v62
  %v67 = vsel %vm59, %v55, %v63
  %v68 = vpack.c.bf16 %v66, %v64
  %v69 = vpack.c.bf16 %v67, %v65
  %v70 = vld [vmem:[%s1] sm:$0xf]
  %v71 = vld [vmem:[%s1 + $0x4] sm:$0xf]
  %v72 = vld [vmem:[%s1 + $0x8] sm:$0xf]
  %v73 = vld [vmem:[%s1 + $0xc] sm:$0xf]
  %v74 = vld [vmem:[%s1 + $0x10] sm:$0xf]
  %v75 = vld [vmem:[%s1 + $0x14] sm:$0xf]
  %v76 = vld [vmem:[%s1 + $0x18] sm:$0xf]
  %v77 = vld [vmem:[%s1 + $0x1c] sm:$0xf]
  %v78 = vld [vmem:[%s1 + $0x20] sm:$0xf]
  %v79 = vld [vmem:[%s1 + $0x24] sm:$0xf]
  %v80 = vld [vmem:[%s1 + $0x28] sm:$0xf]
  %v81 = vld [vmem:[%s1 + $0x2c] sm:$0xf]
  %v82 = vld [vmem:[%s1 + $0x30] sm:$0xf]
  %v83 = vld [vmem:[%s1 + $0x34] sm:$0xf]
  %v84 = vld [vmem:[%s1 + $0x38] sm:$0xf]
  %v85 = vld [vmem:[%s1 + $0x3c] sm:$0xf]
  %v86 = vld [vmem:[%s1 + $0x40] sm:$0xf]
  %v87 = vld [vmem:[%s1 + $0x44] sm:$0xf]
  %v88 = vld [vmem:[%s1 + $0x48] sm:$0xf]
  %v89 = vld [vmem:[%s1 + $0x4c] sm:$0xf]
  %v90 = vld [vmem:[%s1 + $0x50] sm:$0xf]
  %v91 = vld [vmem:[%s1 + $0x54] sm:$0xf]
  %v92 = vld [vmem:[%s1 + $0x58] sm:$0xf]
  %v93 = vld [vmem:[%s1 + $0x5c] sm:$0xf]
  %v94 = vld [vmem:[%s1 + $0x60] sm:$0xf]
  %v95 = vld [vmem:[%s1 + $0x64] sm:$0xf]
  %v96 = vld [vmem:[%s1 + $0x68] sm:$0xf]
  %v97 = vld [vmem:[%s1 + $0x6c] sm:$0xf]
  %v98 = vld [vmem:[%s1 + $0x70] sm:$0xf]
  %v99 = vld [vmem:[%s1 + $0x74] sm:$0xf]
  %v100 = vld [vmem:[%s1 + $0x78] sm:$0xf]
  %v101 = vld [vmem:[%s1 + $0x7c] sm:$0xf]
  %v134 = vunpack.c.l.b16 %v70
  %v135 = vunpack.c.l.b16 %v71
  %v136 = vunpack.c.l.b16 %v72
  %v137 = vunpack.c.l.b16 %v73
  %v138 = vunpack.c.l.b16 %v74
  %v139 = vunpack.c.l.b16 %v75
  %v140 = vunpack.c.l.b16 %v76
  %v141 = vunpack.c.l.b16 %v77
  %v142 = vunpack.c.l.b16 %v78
  %v143 = vunpack.c.l.b16 %v79
  %v144 = vunpack.c.l.b16 %v80
  %v145 = vunpack.c.l.b16 %v81
  %v146 = vunpack.c.l.b16 %v82
  %v147 = vunpack.c.l.b16 %v83
  %v148 = vunpack.c.l.b16 %v84
  %v149 = vunpack.c.l.b16 %v85
  %v150 = vunpack.c.l.b16 %v86
  %v151 = vunpack.c.l.b16 %v87
  %v152 = vunpack.c.l.b16 %v88
  %v153 = vunpack.c.l.b16 %v89
  %v154 = vunpack.c.l.b16 %v90
  %v155 = vunpack.c.l.b16 %v91
  %v156 = vunpack.c.l.b16 %v92
  %v157 = vunpack.c.l.b16 %v93
  %v158 = vunpack.c.l.b16 %v94
  %v159 = vunpack.c.l.b16 %v95
  %v160 = vunpack.c.l.b16 %v96
  %v161 = vunpack.c.l.b16 %v97
  %v162 = vunpack.c.l.b16 %v98
  %v163 = vunpack.c.l.b16 %v99
  %v164 = vunpack.c.l.b16 %v100
  %v165 = vunpack.c.l.b16 %v101
  %v166 = vpack.c.b16 %v135, %v134
  %v167 = vpack.c.b16 %v137, %v136
  %v168 = vpack.c.b16 %v139, %v138
  %v169 = vpack.c.b16 %v141, %v140
  %v170 = vpack.c.b16 %v143, %v142
  %v171 = vpack.c.b16 %v145, %v144
  %v172 = vpack.c.b16 %v147, %v146
  %v173 = vpack.c.b16 %v149, %v148
  %v174 = vpack.c.b16 %v151, %v150
  %v175 = vpack.c.b16 %v153, %v152
  %v176 = vpack.c.b16 %v155, %v154
  %v177 = vpack.c.b16 %v157, %v156
  %v178 = vpack.c.b16 %v159, %v158
  %v179 = vpack.c.b16 %v161, %v160
  %v180 = vpack.c.b16 %v163, %v162
  %v181 = vpack.c.b16 %v165, %v164
  %198 = vmatprep.subr.bf16.mxu0 0
  %199 = vmatpush1.bf16.msra.mxu0 %v173
  %200 = vmatprep.subr.bf16.mxu0 0
  %201 = vmatpush1.bf16.msra.mxu0 %v172
  %202 = vmatprep.subr.bf16.mxu0 0
  %203 = vmatpush1.bf16.msra.mxu0 %v171
  %204 = vmatprep.subr.bf16.mxu0 0
  %205 = vmatpush1.bf16.msra.mxu0 %v170
  %206 = vmatprep.subr.bf16.mxu0 0
  %207 = vmatpush1.bf16.msra.mxu0 %v169
  %208 = vmatprep.subr.bf16.mxu0 0
  %209 = vmatpush1.bf16.msra.mxu0 %v168
  %210 = vmatprep.subr.bf16.mxu0 0
  %211 = vmatpush1.bf16.msra.mxu0 %v167
  %212 = vmatprep.subr.bf16.mxu0 0
  %213 = vmatpush1.bf16.msra.mxu0 %v166
  %214 = vmatprep.subr.bf16.mxu0 0
  %215 = vmatpush2.bf16.msra.mxu0 %v181
  %216 = vmatprep.subr.bf16.mxu0 0
  %217 = vmatpush2.bf16.msra.mxu0 %v180
  %218 = vmatprep.subr.bf16.mxu0 0
  %219 = vmatpush2.bf16.msra.mxu0 %v179
  %220 = vmatprep.subr.bf16.mxu0 0
  %221 = vmatpush2.bf16.msra.mxu0 %v178
  %222 = vmatprep.subr.bf16.mxu0 0
  %223 = vmatpush2.bf16.msra.mxu0 %v177
  %224 = vmatprep.subr.bf16.mxu0 0
  %225 = vmatpush2.bf16.msra.mxu0 %v176
  %226 = vmatprep.subr.bf16.mxu0 0
  %227 = vmatpush2.bf16.msra.mxu0 %v175
  %228 = vmatprep.subr.bf16.mxu0 0
  %229 = vmatpush2.bf16.msra.mxu0 %v174
  %230 = vmatprep.mubr.bf16.mxu0 %v69
  %231 = vmatmul.mubr.bf16.gmra.mxu0 %v68
  %v232 = vpop.f32.mrf.mxu0
  %v233 = vadd.f32 0.0, %v232
  %v234 = vpop.f32.mrf.mxu0
  %v235 = vpop.f32.mrf.mxu0
  %v236 = vadd.f32 0.0, %v235
  %v237 = vpop.f32.mrf.mxu0
  %238 = vdwg.mxu0
  %v239 = vpack.c.bf16 %v236, %v233
  %v241 = vunpack.c.l.b16 %v239
  %v242 = vunpack.c.h.b16 %v239
  %v243 = vpack.c.b16 %v241, %v241
  %v244 = vpack.c.b16 %v242, %v242
  %247 = vst [vmem:[%s4] sm:$0xf] %v243
  %248 = vst [vmem:[%s4 + $0x4] sm:$0xf] %v244
  // Predicated region
  $region18: #{ublock_apply_nchw.10} parent=0 // pred_check
    _
  $region19: #{ublock_apply_nchw.10} parent=0 // pred_check_branch
    %250 = sbr.rel (0) target = $region21
  $region20: #{ublock_apply_nchw.10} parent=0 // pred_region
    _
  $region21: #{ublock_apply_nchw.10} parent=0 // pred_fallthru
    _
  // Predicated region
  $region22: #{ublock_apply_nchw.10} parent=0 // pred_check
    _
  $region23: #{ublock_apply_nchw.10} parent=0 // pred_check_branch
    %252 = sbr.rel (0) target = $region25
  $region24: #{ublock_apply_nchw.10} parent=0 // pred_region
    _
  $region25: #{ublock_apply_nchw.10} parent=0 // pred_fallthru
    _

// kernel: ublock_apply_nchw.11
$region0: #{ublock_apply_nchw.11}
  #allocation0 [shape = 'u32[]', space=smem, size = 0x4, offset = 0x4, fixed_abs, tag = 'smem constant byte address 0x4 - core index']
  #allocation1 [shape = 'u32[144,128]{1,0:T(1,128)}', space=vmem, size = 0x12000, scoped, tag = 'internal scratch']
  %s0 = inlined_call_operand.vmem [shape: bf16[16,256], index: 0, kind: input, shape index: {}]
  %s1 = inlined_call_operand.vmem [shape: bf16[256,128], index: 1, kind: input, shape index: {}]
  %s2 = inlined_call_operand.vmem [shape: f32[1,256], index: 2, kind: input, shape index: {}]
  %s3 = inlined_call_operand.vmem [shape: f32[1,256], index: 3, kind: input, shape index: {}]
  %s4 = inlined_call_operand.vmem [shape: f32[1,128], index: 4, kind: input, shape index: {}]
  %s5 = inlined_call_operand.vmem [shape: bf16[16,128], index: 5, kind: output, shape index: {}]
  %s6 = sld [smem:[#allocation0]]
  $region30: #{ublock_apply_nchw.11} parent=0
    _
  %s8 = ssub.s32 1, %s6
  %s9 = scalar_select 0, %s8, %s6
  // Predicated region
  $region2: #{ublock_apply_nchw.11} parent=0 // pred_check
    _
  $region3: #{ublock_apply_nchw.11} parent=0 // pred_check_branch
    %11 = sbr.rel (0) target = $region5
  $region4: #{ublock_apply_nchw.11} parent=0 // pred_region
    _
  $region5: #{ublock_apply_nchw.11} parent=0 // pred_fallthru
    _
  // Predicated region
  $region6: #{ublock_apply_nchw.11} parent=0 // pred_check
    _
  $region7: #{ublock_apply_nchw.11} parent=0 // pred_check_branch
    %13 = sbr.rel (0) target = $region9
  $region8: #{ublock_apply_nchw.11} parent=0 // pred_region
    _
  $region9: #{ublock_apply_nchw.11} parent=0 // pred_fallthru
    _
  // Predicated region
  $region10: #{ublock_apply_nchw.11} parent=0 // pred_check
    _
  $region11: #{ublock_apply_nchw.11} parent=0 // pred_check_branch
    %15 = sbr.rel (0) target = $region13
  $region12: #{ublock_apply_nchw.11} parent=0 // pred_region
    _
  $region13: #{ublock_apply_nchw.11} parent=0 // pred_fallthru
    _
  // Predicated region
  $region14: #{ublock_apply_nchw.11} parent=0 // pred_check
    _
  $region15: #{ublock_apply_nchw.11} parent=0 // pred_check_branch
    %17 = sbr.rel (0) target = $region17
  $region16: #{ublock_apply_nchw.11} parent=0 // pred_region
    _
  $region17: #{ublock_apply_nchw.11} parent=0 // pred_fallthru
    _
  // Predicated region
  $region18: #{ublock_apply_nchw.11} parent=0 // pred_check
    _
  $region19: #{ublock_apply_nchw.11} parent=0 // pred_check_branch
    %19 = sbr.rel (0) target = $region21
  $region20: #{ublock_apply_nchw.11} parent=0 // pred_region
    _
  $region21: #{ublock_apply_nchw.11} parent=0 // pred_fallthru
    _
  %v21 = vld [vmem:[%s0] sm:$0xff]
  %v22 = vld [vmem:[%s0 + $0x8] sm:$0xff]
  %v23 = vunpack.c.l.bf16 %v21
  %v24 = vunpack.c.h.bf16 %v21
  %v25 = vunpack.c.l.bf16 %v22
  %v26 = vunpack.c.h.bf16 %v22
  %v27 = vld [vmem:[%s2] sm:$0x3]
  %v29 = vlaneseq
  %v30 = vshrl.u32 %v29, 7
  %v31 = vsub.s32 0, %v30
  %v32 = vrot.slane %v27, %v31
  %v33 = vlaneseq
  %v34 = vshrl.u32 %v33, 7
  %v35 = vsub.s32 1, %v34
  %v36 = vrot.slane %v27, %v35
  %v39 = vmul.f32 %v23, %v32
  %v40 = vmul.f32 %v24, %v36
  %v41 = vmul.f32 %v25, %v32
  %v42 = vmul.f32 %v26, %v36
  %v43 = vld [vmem:[%s3] sm:$0x3]
  %v45 = vlaneseq
  %v46 = vshrl.u32 %v45, 7
  %v47 = vsub.s32 0, %v46
  %v48 = vrot.slane %v43, %v47
  %v49 = vlaneseq
  %v50 = vshrl.u32 %v49, 7
  %v51 = vsub.s32 1, %v50
  %v52 = vrot.slane %v43, %v51
  %v55 = vadd.f32 %v39, %v48
  %v56 = vadd.f32 %v40, %v52
  %v57 = vadd.f32 %v41, %v48
  %v58 = vadd.f32 %v42, %v52
  %vm59 = vcmp.ge.f32.partialorder %v55, 0.0
  %vm60 = vcmp.ge.f32.partialorder %v56, 0.0
  %vm61 = vcmp.ge.f32.partialorder %v57, 0.0
  %vm62 = vcmp.ge.f32.partialorder %v58, 0.0
  %v63 = vmul.f32 %v55, 0.2
  %v64 = vmul.f32 %v56, 0.2
  %v65 = vmul.f32 %v57, 0.2
  %v66 = vmul.f32 %v58, 0.2
  %v67 = vsel %vm59, %v55, %v63
  %v68 = vsel %vm60, %v56, %v64
  %v69 = vsel %vm61, %v57, %v65
  %v70 = vsel %vm62, %v58, %v66
  %v71 = vpack.c.bf16 %v69, %v67
  %v72 = vpack.c.bf16 %v70, %v68
  %v73 = vld [vmem:[%s1] sm:$0xf]
  %v74 = vld [vmem:[%s1 + $0x4] sm:$0xf]
  %v75 = vld [vmem:[%s1 + $0x8] sm:$0xf]
  %v76 = vld [vmem:[%s1 + $0xc] sm:$0xf]
  %v77 = vld [vmem:[%s1 + $0x10] sm:$0xf]
  %v78 = vld [vmem:[%s1 + $0x14] sm:$0xf]
  %v79 = vld [vmem:[%s1 + $0x18] sm:$0xf]
  %v80 = vld [vmem:[%s1 + $0x1c] sm:$0xf]
  %v81 = vld [vmem:[%s1 + $0x20] sm:$0xf]
  %v82 = vld [vmem:[%s1 + $0x24] sm:$0xf]
  %v83 = vld [vmem:[%s1 + $0x28] sm:$0xf]
  %v84 = vld [vmem:[%s1 + $0x2c] sm:$0xf]
  %v85 = vld [vmem:[%s1 + $0x30] sm:$0xf]
  %v86 = vld [vmem:[%s1 + $0x34] sm:$0xf]
  %v87 = vld [vmem:[%s1 + $0x38] sm:$0xf]
  %v88 = vld [vmem:[%s1 + $0x3c] sm:$0xf]
  %v89 = vld [vmem:[%s1 + $0x40] sm:$0xf]
  %v90 = vld [vmem:[%s1 + $0x44] sm:$0xf]
  %v91 = vld [vmem:[%s1 + $0x48] sm:$0xf]
  %v92 = vld [vmem:[%s1 + $0x4c] sm:$0xf]
  %v93 = vld [vmem:[%s1 + $0x50] sm:$0xf]
  %v94 = vld [vmem:[%s1 + $0x54] sm:$0xf]
  %v95 = vld [vmem:[%s1 + $0x58] sm:$0xf]
  %v96 = vld [vmem:[%s1 + $0x5c] sm:$0xf]
  %v97 = vld [vmem:[%s1 + $0x60] sm:$0xf]
  %v98 = vld [vmem:[%s1 + $0x64] sm:$0xf]
  %v99 = vld [vmem:[%s1 + $0x68] sm:$0xf]
  %v100 = vld [vmem:[%s1 + $0x6c] sm:$0xf]
  %v101 = vld [vmem:[%s1 + $0x70] sm:$0xf]
  %v102 = vld [vmem:[%s1 + $0x74] sm:$0xf]
  %v103 = vld [vmem:[%s1 + $0x78] sm:$0xf]
  %v104 = vld [vmem:[%s1 + $0x7c] sm:$0xf]
  %v105 = vld [vmem:[%s4] sm:$0x1]
  %v107 = vlaneseq
  %v108 = vshrl.u32 %v107, 7
  %v109 = vsub.s32 0, %v108
  %v110 = vrot.slane %v105, %v109
  %v144 = vunpack.c.l.b16 %v73
  %v145 = vunpack.c.l.b16 %v74
  %v146 = vunpack.c.l.b16 %v75
  %v147 = vunpack.c.l.b16 %v76
  %v148 = vunpack.c.l.b16 %v77
  %v149 = vunpack.c.l.b16 %v78
  %v150 = vunpack.c.l.b16 %v79
  %v151 = vunpack.c.l.b16 %v80
  %v152 = vunpack.c.l.b16 %v81
  %v153 = vunpack.c.l.b16 %v82
  %v154 = vunpack.c.l.b16 %v83
  %v155 = vunpack.c.l.b16 %v84
  %v156 = vunpack.c.l.b16 %v85
  %v157 = vunpack.c.l.b16 %v86
  %v158 = vunpack.c.l.b16 %v87
  %v159 = vunpack.c.l.b16 %v88
  %v160 = vunpack.c.l.b16 %v89
  %v161 = vunpack.c.l.b16 %v90
  %v162 = vunpack.c.l.b16 %v91
  %v163 = vunpack.c.l.b16 %v92
  %v164 = vunpack.c.l.b16 %v93
  %v165 = vunpack.c.l.b16 %v94
  %v166 = vunpack.c.l.b16 %v95
  %v167 = vunpack.c.l.b16 %v96
  %v168 = vunpack.c.l.b16 %v97
  %v169 = vunpack.c.l.b16 %v98
  %v170 = vunpack.c.l.b16 %v99
  %v171 = vunpack.c.l.b16 %v100
  %v172 = vunpack.c.l.b16 %v101
  %v173 = vunpack.c.l.b16 %v102
  %v174 = vunpack.c.l.b16 %v103
  %v175 = vunpack.c.l.b16 %v104
  %v176 = vpack.c.b16 %v145, %v144
  %v177 = vpack.c.b16 %v147, %v146
  %v178 = vpack.c.b16 %v149, %v148
  %v179 = vpack.c.b16 %v151, %v150
  %v180 = vpack.c.b16 %v153, %v152
  %v181 = vpack.c.b16 %v155, %v154
  %v182 = vpack.c.b16 %v157, %v156
  %v183 = vpack.c.b16 %v159, %v158
  %v184 = vpack.c.b16 %v161, %v160
  %v185 = vpack.c.b16 %v163, %v162
  %v186 = vpack.c.b16 %v165, %v164
  %v187 = vpack.c.b16 %v167, %v166
  %v188 = vpack.c.b16 %v169, %v168
  %v189 = vpack.c.b16 %v171, %v170
  %v190 = vpack.c.b16 %v173, %v172
  %v191 = vpack.c.b16 %v175, %v174
  %208 = vmatprep.subr.bf16.mxu0 0
  %209 = vmatpush1.bf16.msra.mxu0 %v183
  %210 = vmatprep.subr.bf16.mxu0 0
  %211 = vmatpush1.bf16.msra.mxu0 %v182
  %212 = vmatprep.subr.bf16.mxu0 0
  %213 = vmatpush1.bf16.msra.mxu0 %v181
  %214 = vmatprep.subr.bf16.mxu0 0
  %215 = vmatpush1.bf16.msra.mxu0 %v180
  %216 = vmatprep.subr.bf16.mxu0 0
  %217 = vmatpush1.bf16.msra.mxu0 %v179
  %218 = vmatprep.subr.bf16.mxu0 0
  %219 = vmatpush1.bf16.msra.mxu0 %v178
  %220 = vmatprep.subr.bf16.mxu0 0
  %221 = vmatpush1.bf16.msra.mxu0 %v177
  %222 = vmatprep.subr.bf16.mxu0 0
  %223 = vmatpush1.bf16.msra.mxu0 %v176
  %224 = vmatprep.subr.bf16.mxu0 0
  %225 = vmatpush2.bf16.msra.mxu0 %v191
  %226 = vmatprep.subr.bf16.mxu0 0
  %227 = vmatpush2.bf16.msra.mxu0 %v190
  %228 = vmatprep.subr.bf16.mxu0 0
  %229 = vmatpush2.bf16.msra.mxu0 %v189
  %230 = vmatprep.subr.bf16.mxu0 0
  %231 = vmatpush2.bf16.msra.mxu0 %v188
  %232 = vmatprep.subr.bf16.mxu0 0
  %233 = vmatpush2.bf16.msra.mxu0 %v187
  %234 = vmatprep.subr.bf16.mxu0 0
  %235 = vmatpush2.bf16.msra.mxu0 %v186
  %236 = vmatprep.subr.bf16.mxu0 0
  %237 = vmatpush2.bf16.msra.mxu0 %v185
  %238 = vmatprep.subr.bf16.mxu0 0
  %239 = vmatpush2.bf16.msra.mxu0 %v184
  %240 = vmatprep.mubr.bf16.mxu0 %v72
  %241 = vmatmul.mubr.bf16.gmra.mxu0 %v71
  %v242 = vpop.f32.mrf.mxu0
  %v243 = vadd.f32 %v110, %v242
  %v244 = vpop.f32.mrf.mxu0
  %v245 = vpop.f32.mrf.mxu0
  %v246 = vadd.f32 %v110, %v245
  %v247 = vpop.f32.mrf.mxu0
  %248 = vdwg.mxu0
  %v249 = vpack.c.bf16 %v246, %v243
  %v251 = vunpack.c.l.b16 %v249
  %v252 = vunpack.c.h.b16 %v249
  %v253 = vpack.c.b16 %v251, %v251
  %v254 = vpack.c.b16 %v252, %v252
  %257 = vst [vmem:[%s5] sm:$0xf] %v253
  %258 = vst [vmem:[%s5 + $0x4] sm:$0xf] %v254
  // Predicated region
  $region22: #{ublock_apply_nchw.11} parent=0 // pred_check
    _
  $region23: #{ublock_apply_nchw.11} parent=0 // pred_check_branch
    %260 = sbr.rel (0) target = $region25
  $region24: #{ublock_apply_nchw.11} parent=0 // pred_region
    _
  $region25: #{ublock_apply_nchw.11} parent=0 // pred_fallthru
    _
  // Predicated region
  $region26: #{ublock_apply_nchw.11} parent=0 // pred_check
    _
  $region27: #{ublock_apply_nchw.11} parent=0 // pred_check_branch
    %262 = sbr.rel (0) target = $region29
  $region28: #{ublock_apply_nchw.11} parent=0 // pred_region
    _
  $region29: #{ublock_apply_nchw.11} parent=0 // pred_fallthru
    _

// kernel: tile.103
$region0: #{tile.103}
  #allocation0 [shape = 's32[1]{0}', space=sflag, size = 0x4, scoped, tag = 'scoped memory for tile.103']
  %s0 = inlined_call_operand.vmem [shape: f32[16], index: 0, kind: input, shape index: {}]
  %s1 = inlined_call_operand.vmem [shape: f32[4,16], index: 1, kind: output, shape index: {}]
  // Predicated region
  $region2: #{tile.103} parent=0 // pred_check
    _
  $region3: #{tile.103} parent=0 // pred_check_branch
    %3 = sbr.rel (0) target = $region5
  $region4: #{tile.103} parent=0 // pred_region
    _
  $region5: #{tile.103} parent=0 // pred_fallthru
    _
  %v4 = vld [vmem:[%s0] ss:$0 sm:$0xff]
  %5 = vst [vmem:[%s1] sm:$0xf] %v4

// kernel: tile.108
$region0: #{tile.108}
  %s0 = inlined_call_operand.vmem [shape: f32[4,16], index: 0, kind: input, shape index: {}]
  %s1 = inlined_call_operand.vmem [shape: f32[1,64], index: 1, kind: output, shape index: {}]
  $region1: #{tile.108} parent=0
    #allocation0 [shape = 'u8[4096]{0}', space=vmem, size = 0x1000, scoped, tag = 'scoped mem for output reshape']
    #allocation1 [shape = 'u8[4096]{0}', space=vmem, size = 0x1000, scoped, tag = 'scoped mem for input reshape']
    %s3 = sshll.u32 1, 4
    %s4 = ssub.s32 %s3, 1
    %v5 = vld [vmem:[%s0] sm:%s4]
    %6 = vst [vmem:[#allocation1] sm:%s4] %v5
    %v7 = vld [vmem:[#allocation1] sm:$0x1]
    %vm8 = vcmask 130048
    %9 = vst.msk [vmem:[#allocation0] sm:$0x1] %vm8, %v7
    %s10 = scalar_lea.vmem [#allocation1], 3
    %v11 = vld [vmem:[%s10] sm:$0x1]
    %12 = vrot.lane.b32.xlu0 %v11, 48
    %v13 = vpop.permute.xlu0 %12
    %vm14 = vcmask 523648
    %15 = vst.msk [vmem:[#allocation0] sm:$0x1] %vm14, %v13
    %s16 = scalar_lea.vmem [#allocation1], 2
    %v17 = vld [vmem:[%s16] sm:$0x1]
    %18 = vrot.lane.b32.xlu0 %v17, 32
    %v19 = vpop.permute.xlu0 %18
    %vm20 = vcmask 392448
    %21 = vst.msk [vmem:[#allocation0] sm:$0x1] %vm20, %v19
    %s22 = scalar_lea.vmem [#allocation1], 1
    %v23 = vld [vmem:[%s22] sm:$0x1]
    %24 = vrot.lane.b32.xlu0 %v23, 16
    %v25 = vpop.permute.xlu0 %24
    %vm26 = vcmask 261248
    %27 = vst.msk [vmem:[#allocation0] sm:$0x1] %vm26, %v25
    %s29 = sshll.u32 1, 1
    %s30 = ssub.s32 %s29, 1
    %v32 = vld [vmem:[#allocation0] sm:%s30]
    %s33 = sshll.u32 1, 1
    %s34 = ssub.s32 %s33, 1
    %35 = vst [vmem:[%s1] sm:%s34] %v32

// kernel: ublock_apply_nchw.12
$region0: #{ublock_apply_nchw.12}
  #allocation0 [shape = 'u32[]', space=smem, size = 0x4, offset = 0x4, fixed_abs, tag = 'smem constant byte address 0x4 - core index']
  #allocation1 [shape = 'u32[144,128]{1,0:T(1,128)}', space=vmem, size = 0x12000, scoped, tag = 'internal scratch']
  %s0 = inlined_call_operand.vmem [shape: bf16[16,144], index: 0, kind: input, shape index: {}]
  %s1 = inlined_call_operand.vmem [shape: bf16[144,128], index: 1, kind: input, shape index: {}]
  %s2 = inlined_call_operand.vmem [shape: f32[1,128], index: 2, kind: input, shape index: {}]
  %s3 = inlined_call_operand.vmem [shape: f32[1,128], index: 3, kind: input, shape index: {}]
  %s4 = inlined_call_operand.vmem [shape: bf16[16,128], index: 4, kind: output, shape index: {}]
  %s5 = sld [smem:[#allocation0]]
  $region26: #{ublock_apply_nchw.12} parent=0
    _
  %s7 = ssub.s32 1, %s5
  %s8 = scalar_select 0, %s7, %s5
  // Predicated region
  $region2: #{ublock_apply_nchw.12} parent=0 // pred_check
    _
  $region3: #{ublock_apply_nchw.12} parent=0 // pred_check_branch
    %10 = sbr.rel (0) target = $region5
  $region4: #{ublock_apply_nchw.12} parent=0 // pred_region
    _
  $region5: #{ublock_apply_nchw.12} parent=0 // pred_fallthru
    _
  // Predicated region
  $region6: #{ublock_apply_nchw.12} parent=0 // pred_check
    _
  $region7: #{ublock_apply_nchw.12} parent=0 // pred_check_branch
    %12 = sbr.rel (0) target = $region9
  $region8: #{ublock_apply_nchw.12} parent=0 // pred_region
    _
  $region9: #{ublock_apply_nchw.12} parent=0 // pred_fallthru
    _
  // Predicated region
  $region10: #{ublock_apply_nchw.12} parent=0 // pred_check
    _
  $region11: #{ublock_apply_nchw.12} parent=0 // pred_check_branch
    %14 = sbr.rel (0) target = $region13
  $region12: #{ublock_apply_nchw.12} parent=0 // pred_region
    _
  $region13: #{ublock_apply_nchw.12} parent=0 // pred_fallthru
    _
  // Predicated region
  $region14: #{ublock_apply_nchw.12} parent=0 // pred_check
    _
  $region15: #{ublock_apply_nchw.12} parent=0 // pred_check_branch
    %16 = sbr.rel (0) target = $region17
  $region16: #{ublock_apply_nchw.12} parent=0 // pred_region
    _
  $region17: #{ublock_apply_nchw.12} parent=0 // pred_fallthru
    _
  %v18 = vld [vmem:[%s0] sm:$0xff]
  %v19 = vld [vmem:[%s0 + $0x8] sm:$0xff]
  %v20 = vmax.bf16 %v18, 0
  %v21 = vmax.bf16 %v19, 0
  %v22 = vld [vmem:[%s1] sm:$0xf]
  %v23 = vld [vmem:[%s1 + $0x4] sm:$0xf]
  %v24 = vld [vmem:[%s1 + $0x8] sm:$0xf]
  %v25 = vld [vmem:[%s1 + $0xc] sm:$0xf]
  %v26 = vld [vmem:[%s1 + $0x10] sm:$0xf]
  %v27 = vld [vmem:[%s1 + $0x14] sm:$0xf]
  %v28 = vld [vmem:[%s1 + $0x18] sm:$0xf]
  %v29 = vld [vmem:[%s1 + $0x1c] sm:$0xf]
  %v30 = vld [vmem:[%s1 + $0x20] sm:$0xf]
  %v31 = vld [vmem:[%s1 + $0x24] sm:$0xf]
  %v32 = vld [vmem:[%s1 + $0x28] sm:$0xf]
  %v33 = vld [vmem:[%s1 + $0x2c] sm:$0xf]
  %v34 = vld [vmem:[%s1 + $0x30] sm:$0xf]
  %v35 = vld [vmem:[%s1 + $0x34] sm:$0xf]
  %v36 = vld [vmem:[%s1 + $0x38] sm:$0xf]
  %v37 = vld [vmem:[%s1 + $0x3c] sm:$0xf]
  %v38 = vld [vmem:[%s1 + $0x40] sm:$0xf]
  %v39 = vld [vmem:[%s1 + $0x44] sm:$0xf]
  %v42 = vunpack.c.l.b16 %v20
  %v43 = vunpack.c.h.b16 %v20
  %v44 = vunpack.c.l.b16 %v21
  %v45 = vunpack.c.h.b16 %v21
  %v46 = vpack.c.b16 %v44, %v42
  %v47 = vpack.c.b16 %v45, %v43
  %v67 = vunpack.c.l.b16 %v22
  %v68 = vunpack.c.l.b16 %v23
  %v69 = vunpack.c.l.b16 %v24
  %v70 = vunpack.c.l.b16 %v25
  %v71 = vunpack.c.l.b16 %v26
  %v72 = vunpack.c.l.b16 %v27
  %v73 = vunpack.c.l.b16 %v28
  %v74 = vunpack.c.l.b16 %v29
  %v75 = vunpack.c.l.b16 %v30
  %v76 = vunpack.c.l.b16 %v31
  %v77 = vunpack.c.l.b16 %v32
  %v78 = vunpack.c.l.b16 %v33
  %v79 = vunpack.c.l.b16 %v34
  %v80 = vunpack.c.l.b16 %v35
  %v81 = vunpack.c.l.b16 %v36
  %v82 = vunpack.c.l.b16 %v37
  %v83 = vunpack.c.l.b16 %v38
  %v84 = vunpack.c.l.b16 %v39
  %v85 = vpack.c.b16 %v68, %v67
  %v86 = vpack.c.b16 %v70, %v69
  %v87 = vpack.c.b16 %v72, %v71
  %v88 = vpack.c.b16 %v74, %v73
  %v89 = vpack.c.b16 %v76, %v75
  %v90 = vpack.c.b16 %v78, %v77
  %v91 = vpack.c.b16 %v80, %v79
  %v92 = vpack.c.b16 %v82, %v81
  %v93 = vpack.c.b16 %v84, %v83
  %vm103 = vcmask 130048
  %v105 = vsel %vm103, %v47, 0
  %107 = vmatprep.subr.bf16.mxu0 0
  %108 = vmatpush1.bf16.msra.mxu0 %v92
  %109 = vmatprep.subr.bf16.mxu0 0
  %110 = vmatpush1.bf16.msra.mxu0 %v91
  %111 = vmatprep.subr.bf16.mxu0 0
  %112 = vmatpush1.bf16.msra.mxu0 %v90
  %113 = vmatprep.subr.bf16.mxu0 0
  %114 = vmatpush1.bf16.msra.mxu0 %v89
  %115 = vmatprep.subr.bf16.mxu0 0
  %116 = vmatpush1.bf16.msra.mxu0 %v88
  %117 = vmatprep.subr.bf16.mxu0 0
  %118 = vmatpush1.bf16.msra.mxu0 %v87
  %119 = vmatprep.subr.bf16.mxu0 0
  %120 = vmatpush1.bf16.msra.mxu0 %v86
  %121 = vmatprep.subr.bf16.mxu0 0
  %122 = vmatpush1.bf16.msra.mxu0 %v85
  %123 = vmatprep.subr.bf16.mxu0 0
  %124 = vmatpush2.bf16.msra.mxu0 0
  %125 = vmatprep.subr.bf16.mxu0 0
  %126 = vmatpush2.bf16.msra.mxu0 0
  %127 = vmatprep.subr.bf16.mxu0 0
  %128 = vmatpush2.bf16.msra.mxu0 0
  %129 = vmatprep.subr.bf16.mxu0 0
  %130 = vmatpush2.bf16.msra.mxu0 0
  %131 = vmatprep.subr.bf16.mxu0 0
  %132 = vmatpush2.bf16.msra.mxu0 0
  %133 = vmatprep.subr.bf16.mxu0 0
  %134 = vmatpush2.bf16.msra.mxu0 0
  %135 = vmatprep.subr.bf16.mxu0 0
  %136 = vmatpush2.bf16.msra.mxu0 0
  %137 = vmatprep.subr.bf16.mxu0 0
  %138 = vmatpush2.bf16.msra.mxu0 %v93
  %139 = vmatprep.mubr.bf16.mxu0 %v105
  %140 = vmatmul.mubr.bf16.gmra.mxu0 %v46
  %v141 = vpop.f32.mrf.mxu0
  %v142 = vadd.f32 0.0, %v141
  %v143 = vpop.f32.mrf.mxu0
  %v144 = vpop.f32.mrf.mxu0
  %v145 = vadd.f32 0.0, %v144
  %v146 = vpop.f32.mrf.mxu0
  %147 = vdwg.mxu0
  %v148 = vld [vmem:[%s2] sm:$0x1]
  %v150 = vlaneseq
  %v151 = vshrl.u32 %v150, 7
  %v152 = vsub.s32 0, %v151
  %v153 = vrot.slane %v148, %v152
  %v155 = vmul.f32 %v142, %v153
  %v156 = vmul.f32 %v145, %v153
  %v157 = vld [vmem:[%s3] sm:$0x1]
  %v159 = vlaneseq
  %v160 = vshrl.u32 %v159, 7
  %v161 = vsub.s32 0, %v160
  %v162 = vrot.slane %v157, %v161
  %v164 = vadd.f32 %v155, %v162
  %v165 = vadd.f32 %v156, %v162
  %v166 = vpack.c.bf16 %v165, %v164
  %v168 = vunpack.c.l.b16 %v166
  %v169 = vunpack.c.h.b16 %v166
  %v170 = vpack.c.b16 %v168, %v168
  %v171 = vpack.c.b16 %v169, %v169
  %174 = vst [vmem:[%s4] sm:$0xf] %v170
  %175 = vst [vmem:[%s4 + $0x4] sm:$0xf] %v171
  // Predicated region
  $region18: #{ublock_apply_nchw.12} parent=0 // pred_check
    _
  $region19: #{ublock_apply_nchw.12} parent=0 // pred_check_branch
    %177 = sbr.rel (0) target = $region21
  $region20: #{ublock_apply_nchw.12} parent=0 // pred_region
    _
  $region21: #{ublock_apply_nchw.12} parent=0 // pred_fallthru
    _
  // Predicated region
  $region22: #{ublock_apply_nchw.12} parent=0 // pred_check
    _
  $region23: #{ublock_apply_nchw.12} parent=0 // pred_check_branch
    %179 = sbr.rel (0) target = $region25
  $region24: #{ublock_apply_nchw.12} parent=0 // pred_region
    _
  $region25: #{ublock_apply_nchw.12} parent=0 // pred_fallthru
    _

// kernel: ublock_apply_nchw.13
$region0: #{ublock_apply_nchw.13}
  #allocation0 [shape = 'u32[]', space=smem, size = 0x4, offset = 0x4, fixed_abs, tag = 'smem constant byte address 0x4 - core index']
  #allocation1 [shape = 'u32[144,128]{1,0:T(1,128)}', space=vmem, size = 0x12000, scoped, tag = 'internal scratch']
  %s0 = inlined_call_operand.vmem [shape: bf16[16,144], index: 0, kind: input, shape index: {}]
  %s1 = inlined_call_operand.vmem [shape: bf16[144,128], index: 1, kind: input, shape index: {}]
  %s2 = inlined_call_operand.vmem [shape: bf16[16,144], index: 2, kind: input, shape index: {}]
  %s3 = inlined_call_operand.vmem [shape: bf16[144,128], index: 3, kind: input, shape index: {}]
  %s4 = inlined_call_operand.vmem [shape: f32[1,128], index: 4, kind: input, shape index: {}]
  %s5 = inlined_call_operand.vmem [shape: f32[1,128], index: 5, kind: input, shape index: {}]
  %s6 = inlined_call_operand.vmem [shape: bf16[16,128], index: 6, kind: output, shape index: {}]
  %s7 = sld [smem:[#allocation0]]
  $region34: #{ublock_apply_nchw.13} parent=0
    _
  %s9 = ssub.s32 1, %s7
  %s10 = scalar_select 0, %s9, %s7
  // Predicated region
  $region2: #{ublock_apply_nchw.13} parent=0 // pred_check
    _
  $region3: #{ublock_apply_nchw.13} parent=0 // pred_check_branch
    %12 = sbr.rel (0) target = $region5
  $region4: #{ublock_apply_nchw.13} parent=0 // pred_region
    _
  $region5: #{ublock_apply_nchw.13} parent=0 // pred_fallthru
    _
  // Predicated region
  $region6: #{ublock_apply_nchw.13} parent=0 // pred_check
    _
  $region7: #{ublock_apply_nchw.13} parent=0 // pred_check_branch
    %14 = sbr.rel (0) target = $region9
  $region8: #{ublock_apply_nchw.13} parent=0 // pred_region
    _
  $region9: #{ublock_apply_nchw.13} parent=0 // pred_fallthru
    _
  // Predicated region
  $region10: #{ublock_apply_nchw.13} parent=0 // pred_check
    _
  $region11: #{ublock_apply_nchw.13} parent=0 // pred_check_branch
    %16 = sbr.rel (0) target = $region13
  $region12: #{ublock_apply_nchw.13} parent=0 // pred_region
    _
  $region13: #{ublock_apply_nchw.13} parent=0 // pred_fallthru
    _
  // Predicated region
  $region14: #{ublock_apply_nchw.13} parent=0 // pred_check
    _
  $region15: #{ublock_apply_nchw.13} parent=0 // pred_check_branch
    %18 = sbr.rel (0) target = $region17
  $region16: #{ublock_apply_nchw.13} parent=0 // pred_region
    _
  $region17: #{ublock_apply_nchw.13} parent=0 // pred_fallthru
    _
  // Predicated region
  $region18: #{ublock_apply_nchw.13} parent=0 // pred_check
    _
  $region19: #{ublock_apply_nchw.13} parent=0 // pred_check_branch
    %20 = sbr.rel (0) target = $region21
  $region20: #{ublock_apply_nchw.13} parent=0 // pred_region
    _
  $region21: #{ublock_apply_nchw.13} parent=0 // pred_fallthru
    _
  // Predicated region
  $region22: #{ublock_apply_nchw.13} parent=0 // pred_check
    _
  $region23: #{ublock_apply_nchw.13} parent=0 // pred_check_branch
    %22 = sbr.rel (0) target = $region25
  $region24: #{ublock_apply_nchw.13} parent=0 // pred_region
    _
  $region25: #{ublock_apply_nchw.13} parent=0 // pred_fallthru
    _
  %v24 = vld [vmem:[%s0] sm:$0xff]
  %v25 = vld [vmem:[%s0 + $0x8] sm:$0xff]
  %v26 = vmax.bf16 %v24, 0
  %v27 = vmax.bf16 %v25, 0
  %v28 = vld [vmem:[%s1] sm:$0xf]
  %v29 = vld [vmem:[%s1 + $0x4] sm:$0xf]
  %v30 = vld [vmem:[%s1 + $0x8] sm:$0xf]
  %v31 = vld [vmem:[%s1 + $0xc] sm:$0xf]
  %v32 = vld [vmem:[%s1 + $0x10] sm:$0xf]
  %v33 = vld [vmem:[%s1 + $0x14] sm:$0xf]
  %v34 = vld [vmem:[%s1 + $0x18] sm:$0xf]
  %v35 = vld [vmem:[%s1 + $0x1c] sm:$0xf]
  %v36 = vld [vmem:[%s1 + $0x20] sm:$0xf]
  %v37 = vld [vmem:[%s1 + $0x24] sm:$0xf]
  %v38 = vld [vmem:[%s1 + $0x28] sm:$0xf]
  %v39 = vld [vmem:[%s1 + $0x2c] sm:$0xf]
  %v40 = vld [vmem:[%s1 + $0x30] sm:$0xf]
  %v41 = vld [vmem:[%s1 + $0x34] sm:$0xf]
  %v42 = vld [vmem:[%s1 + $0x38] sm:$0xf]
  %v43 = vld [vmem:[%s1 + $0x3c] sm:$0xf]
  %v44 = vld [vmem:[%s1 + $0x40] sm:$0xf]
  %v45 = vld [vmem:[%s1 + $0x44] sm:$0xf]
  %v46 = vld [vmem:[%s2] sm:$0xff]
  %v47 = vld [vmem:[%s2 + $0x8] sm:$0xff]
  %v48 = vmax.bf16 %v46, 0
  %v49 = vmax.bf16 %v47, 0
  %v50 = vld [vmem:[%s3] sm:$0xf]
  %v51 = vld [vmem:[%s3 + $0x4] sm:$0xf]
  %v52 = vld [vmem:[%s3 + $0x8] sm:$0xf]
  %v53 = vld [vmem:[%s3 + $0xc] sm:$0xf]
  %v54 = vld [vmem:[%s3 + $0x10] sm:$0xf]
  %v55 = vld [vmem:[%s3 + $0x14] sm:$0xf]
  %v56 = vld [vmem:[%s3 + $0x18] sm:$0xf]
  %v57 = vld [vmem:[%s3 + $0x1c] sm:$0xf]
  %v58 = vld [vmem:[%s3 + $0x20] sm:$0xf]
  %v59 = vld [vmem:[%s3 + $0x24] sm:$0xf]
  %v60 = vld [vmem:[%s3 + $0x28] sm:$0xf]
  %v61 = vld [vmem:[%s3 + $0x2c] sm:$0xf]
  %v62 = vld [vmem:[%s3 + $0x30] sm:$0xf]
  %v63 = vld [vmem:[%s3 + $0x34] sm:$0xf]
  %v64 = vld [vmem:[%s3 + $0x38] sm:$0xf]
  %v65 = vld [vmem:[%s3 + $0x3c] sm:$0xf]
  %v66 = vld [vmem:[%s3 + $0x40] sm:$0xf]
  %v67 = vld [vmem:[%s3 + $0x44] sm:$0xf]
  %v70 = vunpack.c.l.b16 %v48
  %v71 = vunpack.c.h.b16 %v48
  %v72 = vunpack.c.l.b16 %v49
  %v73 = vunpack.c.h.b16 %v49
  %v74 = vpack.c.b16 %v72, %v70
  %v75 = vpack.c.b16 %v73, %v71
  %v95 = vunpack.c.l.b16 %v50
  %v96 = vunpack.c.l.b16 %v51
  %v97 = vunpack.c.l.b16 %v52
  %v98 = vunpack.c.l.b16 %v53
  %v99 = vunpack.c.l.b16 %v54
  %v100 = vunpack.c.l.b16 %v55
  %v101 = vunpack.c.l.b16 %v56
  %v102 = vunpack.c.l.b16 %v57
  %v103 = vunpack.c.l.b16 %v58
  %v104 = vunpack.c.l.b16 %v59
  %v105 = vunpack.c.l.b16 %v60
  %v106 = vunpack.c.l.b16 %v61
  %v107 = vunpack.c.l.b16 %v62
  %v108 = vunpack.c.l.b16 %v63
  %v109 = vunpack.c.l.b16 %v64
  %v110 = vunpack.c.l.b16 %v65
  %v111 = vunpack.c.l.b16 %v66
  %v112 = vunpack.c.l.b16 %v67
  %v113 = vpack.c.b16 %v96, %v95
  %v114 = vpack.c.b16 %v98, %v97
  %v115 = vpack.c.b16 %v100, %v99
  %v116 = vpack.c.b16 %v102, %v101
  %v117 = vpack.c.b16 %v104, %v103
  %v118 = vpack.c.b16 %v106, %v105
  %v119 = vpack.c.b16 %v108, %v107
  %v120 = vpack.c.b16 %v110, %v109
  %v121 = vpack.c.b16 %v112, %v111
  %vm131 = vcmask 130048
  %v133 = vsel %vm131, %v75, 0
  %135 = vmatprep.subr.bf16.mxu0 0
  %136 = vmatpush1.bf16.msra.mxu0 %v120
  %137 = vmatprep.subr.bf16.mxu0 0
  %138 = vmatpush1.bf16.msra.mxu0 %v119
  %139 = vmatprep.subr.bf16.mxu0 0
  %140 = vmatpush1.bf16.msra.mxu0 %v118
  %141 = vmatprep.subr.bf16.mxu0 0
  %142 = vmatpush1.bf16.msra.mxu0 %v117
  %143 = vmatprep.subr.bf16.mxu0 0
  %144 = vmatpush1.bf16.msra.mxu0 %v116
  %145 = vmatprep.subr.bf16.mxu0 0
  %146 = vmatpush1.bf16.msra.mxu0 %v115
  %147 = vmatprep.subr.bf16.mxu0 0
  %148 = vmatpush1.bf16.msra.mxu0 %v114
  %149 = vmatprep.subr.bf16.mxu0 0
  %150 = vmatpush1.bf16.msra.mxu0 %v113
  %151 = vmatprep.subr.bf16.mxu0 0
  %152 = vmatpush2.bf16.msra.mxu0 0
  %153 = vmatprep.subr.bf16.mxu0 0
  %154 = vmatpush2.bf16.msra.mxu0 0
  %155 = vmatprep.subr.bf16.mxu0 0
  %156 = vmatpush2.bf16.msra.mxu0 0
  %157 = vmatprep.subr.bf16.mxu0 0
  %158 = vmatpush2.bf16.msra.mxu0 0
  %159 = vmatprep.subr.bf16.mxu0 0
  %160 = vmatpush2.bf16.msra.mxu0 0
  %161 = vmatprep.subr.bf16.mxu0 0
  %162 = vmatpush2.bf16.msra.mxu0 0
  %163 = vmatprep.subr.bf16.mxu0 0
  %164 = vmatpush2.bf16.msra.mxu0 0
  %165 = vmatprep.subr.bf16.mxu0 0
  %166 = vmatpush2.bf16.msra.mxu0 %v121
  %167 = vmatprep.mubr.bf16.mxu0 %v133
  %168 = vmatmul.mubr.bf16.gmra.mxu0 %v74
  %v169 = vpop.f32.mrf.mxu0
  %v170 = vadd.f32 0.0, %v169
  %v171 = vpop.f32.mrf.mxu0
  %v172 = vpop.f32.mrf.mxu0
  %v173 = vadd.f32 0.0, %v172
  %v174 = vpop.f32.mrf.mxu0
  %175 = vdwg.mxu0
  %v178 = vunpack.c.l.b16 %v26
  %v179 = vunpack.c.h.b16 %v26
  %v180 = vunpack.c.l.b16 %v27
  %v181 = vunpack.c.h.b16 %v27
  %v182 = vpack.c.b16 %v180, %v178
  %v183 = vpack.c.b16 %v181, %v179
  %v203 = vunpack.c.l.b16 %v28
  %v204 = vunpack.c.l.b16 %v29
  %v205 = vunpack.c.l.b16 %v30
  %v206 = vunpack.c.l.b16 %v31
  %v207 = vunpack.c.l.b16 %v32
  %v208 = vunpack.c.l.b16 %v33
  %v209 = vunpack.c.l.b16 %v34
  %v210 = vunpack.c.l.b16 %v35
  %v211 = vunpack.c.l.b16 %v36
  %v212 = vunpack.c.l.b16 %v37
  %v213 = vunpack.c.l.b16 %v38
  %v214 = vunpack.c.l.b16 %v39
  %v215 = vunpack.c.l.b16 %v40
  %v216 = vunpack.c.l.b16 %v41
  %v217 = vunpack.c.l.b16 %v42
  %v218 = vunpack.c.l.b16 %v43
  %v219 = vunpack.c.l.b16 %v44
  %v220 = vunpack.c.l.b16 %v45
  %v221 = vpack.c.b16 %v204, %v203
  %v222 = vpack.c.b16 %v206, %v205
  %v223 = vpack.c.b16 %v208, %v207
  %v224 = vpack.c.b16 %v210, %v209
  %v225 = vpack.c.b16 %v212, %v211
  %v226 = vpack.c.b16 %v214, %v213
  %v227 = vpack.c.b16 %v216, %v215
  %v228 = vpack.c.b16 %v218, %v217
  %v229 = vpack.c.b16 %v220, %v219
  %v240 = vsel %vm131, %v183, 0
  %242 = vmatprep.subr.bf16.mxu0 0
  %243 = vmatpush1.bf16.msra.mxu0 %v228
  %244 = vmatprep.subr.bf16.mxu0 0
  %245 = vmatpush1.bf16.msra.mxu0 %v227
  %246 = vmatprep.subr.bf16.mxu0 0
  %247 = vmatpush1.bf16.msra.mxu0 %v226
  %248 = vmatprep.subr.bf16.mxu0 0
  %249 = vmatpush1.bf16.msra.mxu0 %v225
  %250 = vmatprep.subr.bf16.mxu0 0
  %251 = vmatpush1.bf16.msra.mxu0 %v224
  %252 = vmatprep.subr.bf16.mxu0 0
  %253 = vmatpush1.bf16.msra.mxu0 %v223
  %254 = vmatprep.subr.bf16.mxu0 0
  %255 = vmatpush1.bf16.msra.mxu0 %v222
  %256 = vmatprep.subr.bf16.mxu0 0
  %257 = vmatpush1.bf16.msra.mxu0 %v221
  %258 = vmatprep.subr.bf16.mxu0 0
  %259 = vmatpush2.bf16.msra.mxu0 0
  %260 = vmatprep.subr.bf16.mxu0 0
  %261 = vmatpush2.bf16.msra.mxu0 0
  %262 = vmatprep.subr.bf16.mxu0 0
  %263 = vmatpush2.bf16.msra.mxu0 0
  %264 = vmatprep.subr.bf16.mxu0 0
  %265 = vmatpush2.bf16.msra.mxu0 0
  %266 = vmatprep.subr.bf16.mxu0 0
  %267 = vmatpush2.bf16.msra.mxu0 0
  %268 = vmatprep.subr.bf16.mxu0 0
  %269 = vmatpush2.bf16.msra.mxu0 0
  %270 = vmatprep.subr.bf16.mxu0 0
  %271 = vmatpush2.bf16.msra.mxu0 0
  %272 = vmatprep.subr.bf16.mxu0 0
  %273 = vmatpush2.bf16.msra.mxu0 %v229
  %274 = vmatprep.mubr.bf16.mxu0 %v240
  %275 = vmatmul.mubr.bf16.gmra.mxu0 %v182
  %v276 = vpop.f32.mrf.mxu0
  %v277 = vadd.f32 %v170, %v276
  %v278 = vpop.f32.mrf.mxu0
  %v279 = vpop.f32.mrf.mxu0
  %v280 = vadd.f32 %v173, %v279
  %v281 = vpop.f32.mrf.mxu0
  %282 = vdwg.mxu0
  %v283 = vld [vmem:[%s4] sm:$0x1]
  %v285 = vlaneseq
  %v286 = vshrl.u32 %v285, 7
  %v287 = vsub.s32 0, %v286
  %v288 = vrot.slane %v283, %v287
  %v290 = vmul.f32 %v277, %v288
  %v291 = vmul.f32 %v280, %v288
  %v292 = vld [vmem:[%s5] sm:$0x1]
  %v294 = vlaneseq
  %v295 = vshrl.u32 %v294, 7
  %v296 = vsub.s32 0, %v295
  %v297 = vrot.slane %v292, %v296
  %v299 = vadd.f32 %v290, %v297
  %v300 = vadd.f32 %v291, %v297
  %v301 = vpack.c.bf16 %v300, %v299
  %v303 = vunpack.c.l.b16 %v301
  %v304 = vunpack.c.h.b16 %v301
  %v305 = vpack.c.b16 %v303, %v303
  %v306 = vpack.c.b16 %v304, %v304
  %309 = vst [vmem:[%s6] sm:$0xf] %v305
  %310 = vst [vmem:[%s6 + $0x4] sm:$0xf] %v306
  // Predicated region
  $region26: #{ublock_apply_nchw.13} parent=0 // pred_check
    _
  $region27: #{ublock_apply_nchw.13} parent=0 // pred_check_branch
    %312 = sbr.rel (0) target = $region29
  $region28: #{ublock_apply_nchw.13} parent=0 // pred_region
    _
  $region29: #{ublock_apply_nchw.13} parent=0 // pred_fallthru
    _
  // Predicated region
  $region30: #{ublock_apply_nchw.13} parent=0 // pred_check
    _
  $region31: #{ublock_apply_nchw.13} parent=0 // pred_check_branch
    %314 = sbr.rel (0) target = $region33
  $region32: #{ublock_apply_nchw.13} parent=0 // pred_region
    _
  $region33: #{ublock_apply_nchw.13} parent=0 // pred_fallthru
    _

// kernel: tile.123
$region0: #{tile.123}
  #allocation0 [shape = 's32[1]{0}', space=sflag, size = 0x4, scoped, tag = 'scoped memory for tile.123']
  %s0 = inlined_call_operand.vmem [shape: f32[8], index: 0, kind: input, shape index: {}]
  %s1 = inlined_call_operand.vmem [shape: f32[4,8], index: 1, kind: output, shape index: {}]
  // Predicated region
  $region2: #{tile.123} parent=0 // pred_check
    _
  $region3: #{tile.123} parent=0 // pred_check_branch
    %3 = sbr.rel (0) target = $region5
  $region4: #{tile.123} parent=0 // pred_region
    _
  $region5: #{tile.123} parent=0 // pred_fallthru
    _
  %v4 = vld [vmem:[%s0] ss:$0 sm:$0xff]
  %5 = vst [vmem:[%s1] sm:$0xf] %v4

// kernel: tile.128
$region0: #{tile.128}
  %s0 = inlined_call_operand.vmem [shape: f32[4,8], index: 0, kind: input, shape index: {}]
  %s1 = inlined_call_operand.vmem [shape: f32[1,32], index: 1, kind: output, shape index: {}]
  $region1: #{tile.128} parent=0
    #allocation0 [shape = 'u8[4096]{0}', space=vmem, size = 0x1000, scoped, tag = 'scoped mem for output reshape']
    #allocation1 [shape = 'u8[4096]{0}', space=vmem, size = 0x1000, scoped, tag = 'scoped mem for input reshape']
    %s3 = sshll.u32 1, 4
    %s4 = ssub.s32 %s3, 1
    %v5 = vld [vmem:[%s0] sm:%s4]
    %6 = vst [vmem:[#allocation1] sm:%s4] %v5
    %v7 = vld [vmem:[#allocation1] sm:$0x1]
    %vm8 = vcmask 64512
    %9 = vst.msk [vmem:[#allocation0] sm:$0x1] %vm8, %v7
    %s10 = scalar_lea.vmem [#allocation1], 3
    %v11 = vld [vmem:[%s10] sm:$0x1]
    %12 = vrot.lane.b32.xlu0 %v11, 24
    %v13 = vpop.permute.xlu0 %12
    %vm14 = vcmask 261312
    %15 = vst.msk [vmem:[#allocation0] sm:$0x1] %vm14, %v13
    %s16 = scalar_lea.vmem [#allocation1], 2
    %v17 = vld [vmem:[%s16] sm:$0x1]
    %18 = vrot.lane.b32.xlu0 %v17, 16
    %v19 = vpop.permute.xlu0 %18
    %vm20 = vcmask 195712
    %21 = vst.msk [vmem:[#allocation0] sm:$0x1] %vm20, %v19
    %s22 = scalar_lea.vmem [#allocation1], 1
    %v23 = vld [vmem:[%s22] sm:$0x1]
    %24 = vrot.lane.b32.xlu0 %v23, 8
    %v25 = vpop.permute.xlu0 %24
    %vm26 = vcmask 130112
    %27 = vst.msk [vmem:[#allocation0] sm:$0x1] %vm26, %v25
    %s29 = sshll.u32 1, 1
    %s30 = ssub.s32 %s29, 1
    %v32 = vld [vmem:[#allocation0] sm:%s30]
    %s33 = sshll.u32 1, 1
    %s34 = ssub.s32 %s33, 1
    %35 = vst [vmem:[%s1] sm:%s34] %v32

// kernel: ublock_apply_nchw.14
$region0: #{ublock_apply_nchw.14}
  #allocation0 [shape = 'u32[]', space=smem, size = 0x4, offset = 0x4, fixed_abs, tag = 'smem constant byte address 0x4 - core index']
  #allocation1 [shape = 'u32[144,128]{1,0:T(1,128)}', space=vmem, size = 0x12000, scoped, tag = 'internal scratch']
  %s0 = inlined_call_operand.vmem [shape: bf16[32,144], index: 0, kind: input, shape index: {}]
  %s1 = inlined_call_operand.vmem [shape: bf16[144,128], index: 1, kind: input, shape index: {}]
  %s2 = inlined_call_operand.vmem [shape: bf16[32,144], index: 2, kind: input, shape index: {}]
  %s3 = inlined_call_operand.vmem [shape: bf16[144,128], index: 3, kind: input, shape index: {}]
  %s4 = inlined_call_operand.vmem [shape: f32[1,128], index: 4, kind: input, shape index: {}]
  %s5 = inlined_call_operand.vmem [shape: f32[1,128], index: 5, kind: input, shape index: {}]
  %s6 = inlined_call_operand.vmem [shape: bf16[32,128], index: 6, kind: output, shape index: {}]
  %s7 = sld [smem:[#allocation0]]
  $region34: #{ublock_apply_nchw.14} parent=0
    _
  %s9 = ssub.s32 1, %s7
  %s10 = scalar_select 0, %s9, %s7
  // Predicated region
  $region2: #{ublock_apply_nchw.14} parent=0 // pred_check
    _
  $region3: #{ublock_apply_nchw.14} parent=0 // pred_check_branch
    %12 = sbr.rel (0) target = $region5
  $region4: #{ublock_apply_nchw.14} parent=0 // pred_region
    _
  $region5: #{ublock_apply_nchw.14} parent=0 // pred_fallthru
    _
  // Predicated region
  $region6: #{ublock_apply_nchw.14} parent=0 // pred_check
    _
  $region7: #{ublock_apply_nchw.14} parent=0 // pred_check_branch
    %14 = sbr.rel (0) target = $region9
  $region8: #{ublock_apply_nchw.14} parent=0 // pred_region
    _
  $region9: #{ublock_apply_nchw.14} parent=0 // pred_fallthru
    _
  // Predicated region
  $region10: #{ublock_apply_nchw.14} parent=0 // pred_check
    _
  $region11: #{ublock_apply_nchw.14} parent=0 // pred_check_branch
    %16 = sbr.rel (0) target = $region13
  $region12: #{ublock_apply_nchw.14} parent=0 // pred_region
    _
  $region13: #{ublock_apply_nchw.14} parent=0 // pred_fallthru
    _
  // Predicated region
  $region14: #{ublock_apply_nchw.14} parent=0 // pred_check
    _
  $region15: #{ublock_apply_nchw.14} parent=0 // pred_check_branch
    %18 = sbr.rel (0) target = $region17
  $region16: #{ublock_apply_nchw.14} parent=0 // pred_region
    _
  $region17: #{ublock_apply_nchw.14} parent=0 // pred_fallthru
    _
  // Predicated region
  $region18: #{ublock_apply_nchw.14} parent=0 // pred_check
    _
  $region19: #{ublock_apply_nchw.14} parent=0 // pred_check_branch
    %20 = sbr.rel (0) target = $region21
  $region20: #{ublock_apply_nchw.14} parent=0 // pred_region
    _
  $region21: #{ublock_apply_nchw.14} parent=0 // pred_fallthru
    _
  // Predicated region
  $region22: #{ublock_apply_nchw.14} parent=0 // pred_check
    _
  $region23: #{ublock_apply_nchw.14} parent=0 // pred_check_branch
    %22 = sbr.rel (0) target = $region25
  $region24: #{ublock_apply_nchw.14} parent=0 // pred_region
    _
  $region25: #{ublock_apply_nchw.14} parent=0 // pred_fallthru
    _
  %v24 = vld [vmem:[%s0] sm:$0xff]
  %v25 = vld [vmem:[%s0 + $0x8] sm:$0xff]
  %v26 = vld [vmem:[%s0 + $0x10] sm:$0xff]
  %v27 = vld [vmem:[%s0 + $0x18] sm:$0xff]
  %v28 = vmax.bf16 %v24, 0
  %v29 = vmax.bf16 %v25, 0
  %v30 = vmax.bf16 %v26, 0
  %v31 = vmax.bf16 %v27, 0
  %v32 = vld [vmem:[%s1] sm:$0xf]
  %v33 = vld [vmem:[%s1 + $0x4] sm:$0xf]
  %v34 = vld [vmem:[%s1 + $0x8] sm:$0xf]
  %v35 = vld [vmem:[%s1 + $0xc] sm:$0xf]
  %v36 = vld [vmem:[%s1 + $0x10] sm:$0xf]
  %v37 = vld [vmem:[%s1 + $0x14] sm:$0xf]
  %v38 = vld [vmem:[%s1 + $0x18] sm:$0xf]
  %v39 = vld [vmem:[%s1 + $0x1c] sm:$0xf]
  %v40 = vld [vmem:[%s1 + $0x20] sm:$0xf]
  %v41 = vld [vmem:[%s1 + $0x24] sm:$0xf]
  %v42 = vld [vmem:[%s1 + $0x28] sm:$0xf]
  %v43 = vld [vmem:[%s1 + $0x2c] sm:$0xf]
  %v44 = vld [vmem:[%s1 + $0x30] sm:$0xf]
  %v45 = vld [vmem:[%s1 + $0x34] sm:$0xf]
  %v46 = vld [vmem:[%s1 + $0x38] sm:$0xf]
  %v47 = vld [vmem:[%s1 + $0x3c] sm:$0xf]
  %v48 = vld [vmem:[%s1 + $0x40] sm:$0xf]
  %v49 = vld [vmem:[%s1 + $0x44] sm:$0xf]
  %v50 = vld [vmem:[%s2] sm:$0xff]
  %v51 = vld [vmem:[%s2 + $0x8] sm:$0xff]
  %v52 = vld [vmem:[%s2 + $0x10] sm:$0xff]
  %v53 = vld [vmem:[%s2 + $0x18] sm:$0xff]
  %v54 = vmax.bf16 %v50, 0
  %v55 = vmax.bf16 %v51, 0
  %v56 = vmax.bf16 %v52, 0
  %v57 = vmax.bf16 %v53, 0
  %v58 = vld [vmem:[%s3] sm:$0xf]
  %v59 = vld [vmem:[%s3 + $0x4] sm:$0xf]
  %v60 = vld [vmem:[%s3 + $0x8] sm:$0xf]
  %v61 = vld [vmem:[%s3 + $0xc] sm:$0xf]
  %v62 = vld [vmem:[%s3 + $0x10] sm:$0xf]
  %v63 = vld [vmem:[%s3 + $0x14] sm:$0xf]
  %v64 = vld [vmem:[%s3 + $0x18] sm:$0xf]
  %v65 = vld [vmem:[%s3 + $0x1c] sm:$0xf]
  %v66 = vld [vmem:[%s3 + $0x20] sm:$0xf]
  %v67 = vld [vmem:[%s3 + $0x24] sm:$0xf]
  %v68 = vld [vmem:[%s3 + $0x28] sm:$0xf]
  %v69 = vld [vmem:[%s3 + $0x2c] sm:$0xf]
  %v70 = vld [vmem:[%s3 + $0x30] sm:$0xf]
  %v71 = vld [vmem:[%s3 + $0x34] sm:$0xf]
  %v72 = vld [vmem:[%s3 + $0x38] sm:$0xf]
  %v73 = vld [vmem:[%s3 + $0x3c] sm:$0xf]
  %v74 = vld [vmem:[%s3 + $0x40] sm:$0xf]
  %v75 = vld [vmem:[%s3 + $0x44] sm:$0xf]
  %v80 = vunpack.c.l.b16 %v54
  %v81 = vunpack.c.h.b16 %v54
  %v82 = vunpack.c.l.b16 %v55
  %v83 = vunpack.c.h.b16 %v55
  %v84 = vunpack.c.l.b16 %v56
  %v85 = vunpack.c.h.b16 %v56
  %v86 = vunpack.c.l.b16 %v57
  %v87 = vunpack.c.h.b16 %v57
  %v88 = vpack.c.b16 %v82, %v80
  %v89 = vpack.c.b16 %v83, %v81
  %v90 = vpack.c.b16 %v86, %v84
  %v91 = vpack.c.b16 %v87, %v85
  %v112 = vunpack.c.l.b16 %v58
  %v113 = vunpack.c.l.b16 %v59
  %v114 = vunpack.c.l.b16 %v60
  %v115 = vunpack.c.l.b16 %v61
  %v116 = vunpack.c.l.b16 %v62
  %v117 = vunpack.c.l.b16 %v63
  %v118 = vunpack.c.l.b16 %v64
  %v119 = vunpack.c.l.b16 %v65
  %v120 = vunpack.c.l.b16 %v66
  %v121 = vunpack.c.l.b16 %v67
  %v122 = vunpack.c.l.b16 %v68
  %v123 = vunpack.c.l.b16 %v69
  %v124 = vunpack.c.l.b16 %v70
  %v125 = vunpack.c.l.b16 %v71
  %v126 = vunpack.c.l.b16 %v72
  %v127 = vunpack.c.l.b16 %v73
  %v128 = vunpack.c.l.b16 %v74
  %v129 = vunpack.c.l.b16 %v75
  %v130 = vpack.c.b16 %v113, %v112
  %v131 = vpack.c.b16 %v115, %v114
  %v132 = vpack.c.b16 %v117, %v116
  %v133 = vpack.c.b16 %v119, %v118
  %v134 = vpack.c.b16 %v121, %v120
  %v135 = vpack.c.b16 %v123, %v122
  %v136 = vpack.c.b16 %v125, %v124
  %v137 = vpack.c.b16 %v127, %v126
  %v138 = vpack.c.b16 %v129, %v128
  %vm148 = vcmask 130048
  %v150 = vsel %vm148, %v89, 0
  %v153 = vsel %vm148, %v91, 0
  %155 = vmatprep.subr.bf16.mxu0 0
  %156 = vmatpush1.bf16.msra.mxu0 %v137
  %157 = vmatprep.subr.bf16.mxu0 0
  %158 = vmatpush1.bf16.msra.mxu0 %v136
  %159 = vmatprep.subr.bf16.mxu0 0
  %160 = vmatpush1.bf16.msra.mxu0 %v135
  %161 = vmatprep.subr.bf16.mxu0 0
  %162 = vmatpush1.bf16.msra.mxu0 %v134
  %163 = vmatprep.subr.bf16.mxu0 0
  %164 = vmatpush1.bf16.msra.mxu0 %v133
  %165 = vmatprep.subr.bf16.mxu0 0
  %166 = vmatpush1.bf16.msra.mxu0 %v132
  %167 = vmatprep.subr.bf16.mxu0 0
  %168 = vmatpush1.bf16.msra.mxu0 %v131
  %169 = vmatprep.subr.bf16.mxu0 0
  %170 = vmatpush1.bf16.msra.mxu0 %v130
  %171 = vmatprep.subr.bf16.mxu0 0
  %172 = vmatpush2.bf16.msra.mxu0 0
  %173 = vmatprep.subr.bf16.mxu0 0
  %174 = vmatpush2.bf16.msra.mxu0 0
  %175 = vmatprep.subr.bf16.mxu0 0
  %176 = vmatpush2.bf16.msra.mxu0 0
  %177 = vmatprep.subr.bf16.mxu0 0
  %178 = vmatpush2.bf16.msra.mxu0 0
  %179 = vmatprep.subr.bf16.mxu0 0
  %180 = vmatpush2.bf16.msra.mxu0 0
  %181 = vmatprep.subr.bf16.mxu0 0
  %182 = vmatpush2.bf16.msra.mxu0 0
  %183 = vmatprep.subr.bf16.mxu0 0
  %184 = vmatpush2.bf16.msra.mxu0 0
  %185 = vmatprep.subr.bf16.mxu0 0
  %186 = vmatpush2.bf16.msra.mxu0 %v138
  %187 = vmatprep.mubr.bf16.mxu0 %v150
  %188 = vmatmul.mubr.bf16.gmra.mxu0 %v88
  %v189 = vpop.f32.mrf.mxu0
  %v190 = vadd.f32 0.0, %v189
  %v191 = vpop.f32.mrf.mxu0
  %v192 = vpop.f32.mrf.mxu0
  %v193 = vadd.f32 0.0, %v192
  %v194 = vpop.f32.mrf.mxu0
  %195 = vmatprep.mubr.bf16.mxu0 %v153
  %196 = vmatmul.mubr.bf16.gmra.mxu0 %v90
  %v197 = vpop.f32.mrf.mxu0
  %v198 = vadd.f32 0.0, %v197
  %v199 = vpop.f32.mrf.mxu0
  %v200 = vpop.f32.mrf.mxu0
  %v201 = vadd.f32 0.0, %v200
  %v202 = vpop.f32.mrf.mxu0
  %203 = vdwg.mxu0
  %v208 = vunpack.c.l.b16 %v28
  %v209 = vunpack.c.h.b16 %v28
  %v210 = vunpack.c.l.b16 %v29
  %v211 = vunpack.c.h.b16 %v29
  %v212 = vunpack.c.l.b16 %v30
  %v213 = vunpack.c.h.b16 %v30
  %v214 = vunpack.c.l.b16 %v31
  %v215 = vunpack.c.h.b16 %v31
  %v216 = vpack.c.b16 %v210, %v208
  %v217 = vpack.c.b16 %v211, %v209
  %v218 = vpack.c.b16 %v214, %v212
  %v219 = vpack.c.b16 %v215, %v213
  %v240 = vunpack.c.l.b16 %v32
  %v241 = vunpack.c.l.b16 %v33
  %v242 = vunpack.c.l.b16 %v34
  %v243 = vunpack.c.l.b16 %v35
  %v244 = vunpack.c.l.b16 %v36
  %v245 = vunpack.c.l.b16 %v37
  %v246 = vunpack.c.l.b16 %v38
  %v247 = vunpack.c.l.b16 %v39
  %v248 = vunpack.c.l.b16 %v40
  %v249 = vunpack.c.l.b16 %v41
  %v250 = vunpack.c.l.b16 %v42
  %v251 = vunpack.c.l.b16 %v43
  %v252 = vunpack.c.l.b16 %v44
  %v253 = vunpack.c.l.b16 %v45
  %v254 = vunpack.c.l.b16 %v46
  %v255 = vunpack.c.l.b16 %v47
  %v256 = vunpack.c.l.b16 %v48
  %v257 = vunpack.c.l.b16 %v49
  %v258 = vpack.c.b16 %v241, %v240
  %v259 = vpack.c.b16 %v243, %v242
  %v260 = vpack.c.b16 %v245, %v244
  %v261 = vpack.c.b16 %v247, %v246
  %v262 = vpack.c.b16 %v249, %v248
  %v263 = vpack.c.b16 %v251, %v250
  %v264 = vpack.c.b16 %v253, %v252
  %v265 = vpack.c.b16 %v255, %v254
  %v266 = vpack.c.b16 %v257, %v256
  %v277 = vsel %vm148, %v217, 0
  %v280 = vsel %vm148, %v219, 0
  %282 = vmatprep.subr.bf16.mxu0 0
  %283 = vmatpush1.bf16.msra.mxu0 %v265
  %284 = vmatprep.subr.bf16.mxu0 0
  %285 = vmatpush1.bf16.msra.mxu0 %v264
  %286 = vmatprep.subr.bf16.mxu0 0
  %287 = vmatpush1.bf16.msra.mxu0 %v263
  %288 = vmatprep.subr.bf16.mxu0 0
  %289 = vmatpush1.bf16.msra.mxu0 %v262
  %290 = vmatprep.subr.bf16.mxu0 0
  %291 = vmatpush1.bf16.msra.mxu0 %v261
  %292 = vmatprep.subr.bf16.mxu0 0
  %293 = vmatpush1.bf16.msra.mxu0 %v260
  %294 = vmatprep.subr.bf16.mxu0 0
  %295 = vmatpush1.bf16.msra.mxu0 %v259
  %296 = vmatprep.subr.bf16.mxu0 0
  %297 = vmatpush1.bf16.msra.mxu0 %v258
  %298 = vmatprep.subr.bf16.mxu0 0
  %299 = vmatpush2.bf16.msra.mxu0 0
  %300 = vmatprep.subr.bf16.mxu0 0
  %301 = vmatpush2.bf16.msra.mxu0 0
  %302 = vmatprep.subr.bf16.mxu0 0
  %303 = vmatpush2.bf16.msra.mxu0 0
  %304 = vmatprep.subr.bf16.mxu0 0
  %305 = vmatpush2.bf16.msra.mxu0 0
  %306 = vmatprep.subr.bf16.mxu0 0
  %307 = vmatpush2.bf16.msra.mxu0 0
  %308 = vmatprep.subr.bf16.mxu0 0
  %309 = vmatpush2.bf16.msra.mxu0 0
  %310 = vmatprep.subr.bf16.mxu0 0
  %311 = vmatpush2.bf16.msra.mxu0 0
  %312 = vmatprep.subr.bf16.mxu0 0
  %313 = vmatpush2.bf16.msra.mxu0 %v266
  %314 = vmatprep.mubr.bf16.mxu0 %v277
  %315 = vmatmul.mubr.bf16.gmra.mxu0 %v216
  %v316 = vpop.f32.mrf.mxu0
  %v317 = vadd.f32 %v190, %v316
  %v318 = vpop.f32.mrf.mxu0
  %v319 = vpop.f32.mrf.mxu0
  %v320 = vadd.f32 %v193, %v319
  %v321 = vpop.f32.mrf.mxu0
  %322 = vmatprep.mubr.bf16.mxu0 %v280
  %323 = vmatmul.mubr.bf16.gmra.mxu0 %v218
  %v324 = vpop.f32.mrf.mxu0
  %v325 = vadd.f32 %v198, %v324
  %v326 = vpop.f32.mrf.mxu0
  %v327 = vpop.f32.mrf.mxu0
  %v328 = vadd.f32 %v201, %v327
  %v329 = vpop.f32.mrf.mxu0
  %330 = vdwg.mxu0
  %v331 = vld [vmem:[%s4] sm:$0x1]
  %v333 = vlaneseq
  %v334 = vshrl.u32 %v333, 7
  %v335 = vsub.s32 0, %v334
  %v336 = vrot.slane %v331, %v335
  %v338 = vmul.f32 %v317, %v336
  %v339 = vmul.f32 %v320, %v336
  %v340 = vmul.f32 %v325, %v336
  %v341 = vmul.f32 %v328, %v336
  %v342 = vld [vmem:[%s5] sm:$0x1]
  %v344 = vlaneseq
  %v345 = vshrl.u32 %v344, 7
  %v346 = vsub.s32 0, %v345
  %v347 = vrot.slane %v342, %v346
  %v349 = vadd.f32 %v338, %v347
  %v350 = vadd.f32 %v339, %v347
  %v351 = vadd.f32 %v340, %v347
  %v352 = vadd.f32 %v341, %v347
  %v353 = vpack.c.bf16 %v350, %v349
  %v354 = vpack.c.bf16 %v352, %v351
  %v357 = vunpack.c.l.b16 %v353
  %v358 = vunpack.c.h.b16 %v353
  %v359 = vunpack.c.l.b16 %v354
  %v360 = vunpack.c.h.b16 %v354
  %v361 = vpack.c.b16 %v357, %v357
  %v362 = vpack.c.b16 %v358, %v358
  %v363 = vpack.c.b16 %v359, %v359
  %v364 = vpack.c.b16 %v360, %v360
  %369 = vst [vmem:[%s6] sm:$0xf] %v361
  %370 = vst [vmem:[%s6 + $0x4] sm:$0xf] %v362
  %371 = vst [vmem:[%s6 + $0x8] sm:$0xf] %v363
  %372 = vst [vmem:[%s6 + $0xc] sm:$0xf] %v364
  // Predicated region
  $region26: #{ublock_apply_nchw.14} parent=0 // pred_check
    _
  $region27: #{ublock_apply_nchw.14} parent=0 // pred_check_branch
    %374 = sbr.rel (0) target = $region29
  $region28: #{ublock_apply_nchw.14} parent=0 // pred_region
    _
  $region29: #{ublock_apply_nchw.14} parent=0 // pred_fallthru
    _
  // Predicated region
  $region30: #{ublock_apply_nchw.14} parent=0 // pred_check
    _
  $region31: #{ublock_apply_nchw.14} parent=0 // pred_check_branch
    %376 = sbr.rel (0) target = $region33
  $region32: #{ublock_apply_nchw.14} parent=0 // pred_region
    _
  $region33: #{ublock_apply_nchw.14} parent=0 // pred_fallthru
    _

// kernel: tile.133
$region0: #{tile.133}
  #allocation0 [shape = 's32[1]{0}', space=sflag, size = 0x4, scoped, tag = 'scoped memory for tile.133']
  %s0 = inlined_call_operand.vmem [shape: f32[4], index: 0, kind: input, shape index: {}]
  %s1 = inlined_call_operand.vmem [shape: f32[4,4], index: 1, kind: output, shape index: {}]
  // Predicated region
  $region2: #{tile.133} parent=0 // pred_check
    _
  $region3: #{tile.133} parent=0 // pred_check_branch
    %3 = sbr.rel (0) target = $region5
  $region4: #{tile.133} parent=0 // pred_region
    _
  $region5: #{tile.133} parent=0 // pred_fallthru
    _
  %v4 = vld [vmem:[%s0] ss:$0 sm:$0xff]
  %5 = vst [vmem:[%s1] sm:$0xf] %v4

// kernel: tile.138
$region0: #{tile.138}
  %s0 = inlined_call_operand.vmem [shape: f32[4,4], index: 0, kind: input, shape index: {}]
  %s1 = inlined_call_operand.vmem [shape: f32[1,16], index: 1, kind: output, shape index: {}]
  $region1: #{tile.138} parent=0
    #allocation0 [shape = 'u8[4096]{0}', space=vmem, size = 0x1000, scoped, tag = 'scoped mem for output reshape']
    #allocation1 [shape = 'u8[4096]{0}', space=vmem, size = 0x1000, scoped, tag = 'scoped mem for input reshape']
    %s3 = sshll.u32 1, 4
    %s4 = ssub.s32 %s3, 1
    %v5 = vld [vmem:[%s0] sm:%s4]
    %6 = vst [vmem:[#allocation1] sm:%s4] %v5
    %v7 = vld [vmem:[#allocation1] sm:$0x1]
    %vm8 = vcmask 31744
    %9 = vst.msk [vmem:[#allocation0] sm:$0x1] %vm8, %v7
    %s10 = scalar_lea.vmem [#allocation1], 3
    %v11 = vld [vmem:[%s10] sm:$0x1]
    %12 = vrot.lane.b32.xlu0 %v11, 12
    %v13 = vpop.permute.xlu0 %12
    %vm14 = vcmask 130144
    %15 = vst.msk [vmem:[#allocation0] sm:$0x1] %vm14, %v13
    %s16 = scalar_lea.vmem [#allocation1], 2
    %v17 = vld [vmem:[%s16] sm:$0x1]
    %18 = vrot.lane.b32.xlu0 %v17, 8
    %v19 = vpop.permute.xlu0 %18
    %vm20 = vcmask 97344
    %21 = vst.msk [vmem:[#allocation0] sm:$0x1] %vm20, %v19
    %s22 = scalar_lea.vmem [#allocation1], 1
    %v23 = vld [vmem:[%s22] sm:$0x1]
    %24 = vrot.lane.b32.xlu0 %v23, 4
    %v25 = vpop.permute.xlu0 %24
    %vm26 = vcmask 64544
    %27 = vst.msk [vmem:[#allocation0] sm:$0x1] %vm26, %v25
    %s29 = sshll.u32 1, 1
    %s30 = ssub.s32 %s29, 1
    %v32 = vld [vmem:[#allocation0] sm:%s30]
    %s33 = sshll.u32 1, 1
    %s34 = ssub.s32 %s33, 1
    %35 = vst [vmem:[%s1] sm:%s34] %v32

// kernel: ublock_apply_nchw.15
$region0: #{ublock_apply_nchw.15}
  #allocation0 [shape = 'u32[]', space=smem, size = 0x4, offset = 0x4, fixed_abs, tag = 'smem constant byte address 0x4 - core index']
  #allocation1 [shape = 'u32[144,128]{1,0:T(1,128)}', space=vmem, size = 0x12000, scoped, tag = 'internal scratch']
  %s0 = inlined_call_operand.vmem [shape: bf16[128,72], index: 0, kind: input, shape index: {}]
  %s1 = inlined_call_operand.vmem [shape: bf16[72,128], index: 1, kind: input, shape index: {}]
  %s2 = inlined_call_operand.vmem [shape: bf16[128,72], index: 2, kind: input, shape index: {}]
  %s3 = inlined_call_operand.vmem [shape: bf16[72,128], index: 3, kind: input, shape index: {}]
  %s4 = inlined_call_operand.vmem [shape: f32[1,128], index: 4, kind: input, shape index: {}]
  %s5 = inlined_call_operand.vmem [shape: f32[1,128], index: 5, kind: input, shape index: {}]
  %s6 = inlined_call_operand.vmem [shape: bf16[128,128], index: 6, kind: output, shape index: {}]
  %s7 = sld [smem:[#allocation0]]
  $region57: #{ublock_apply_nchw.15} parent=0
    _
  %s9 = ssub.s32 1, %s7
  %s10 = scalar_select 0, %s9, %s7
  loop: start=0, step=1, limit=4
  $region2: #{ublock_apply_nchw.15} parent=0 // loop_pre_header
    _
  $region3: #{ublock_apply_nchw.15} parent=0 // loop_header
    %s12 = sphi 0, %s16
    %p13 = scmp.ge.s32.totalorder %s12, 4
    %s19 = sphi 0, %s31
    %s20 = sphi 0, %s27
    %s21 = sphi 0, %s19
    %s22 = sphi 0, %s20
    %s23 = sphi 0, %s21
    %s24 = sphi 0, %s22
    %s34 = sphi 0, %s36
    %s37 = sphi 0, %s34
    %s38 = sphi 0, %s37
    %s54 = sphi 0, %s38
    %s60 = sphi 0, %s62
    %s63 = sphi 0, %s60
    %s64 = sphi 0, %s63
    %s80 = sphi 0, %s64
    %s86 = sphi 0, %s88
    %s89 = sphi 0, %s86
    %s90 = sphi 0, %s89
    %s106 = sphi 0, %s90
    %s112 = sphi 0, %s114
    %s115 = sphi 0, %s112
    %s116 = sphi 0, %s115
    %s132 = sphi 0, %s116
    %s138 = sphi 0, %s140
    %s141 = sphi 0, %s138
    %s142 = sphi 0, %s141
    %s158 = sphi 0, %s142
    %s164 = sphi 0, %s166
    %s167 = sphi 0, %s164
    %s168 = sphi 0, %s167
    %s184 = sphi 0, %s168
    %s192 = sphi 0, %s194
    %s195 = sphi 0, %s192
    %s196 = sphi 0, %s195
    %s212 = sphi 0, %s196
  $region4: #{ublock_apply_nchw.15} parent=0 // loop_header_branch
    %15 = sbr.rel (%p13) target = $region8
  $region5: #{ublock_apply_nchw.15} parent=0 // loop_body
    %s17 = ssub.s32 %s12, 1
    %s18 = ssub.s32 %s12, 2
    %s25 = sadd.s32 1, %s20
    %p26 = scmp.ge.s32.totalorder %s25, 1
    %s27 = scalar_select %p26, 0, %s25
    %s28 = sadd.s32 1, %s19
    %s29 = scalar_select %p26, %s28, %s19
    %p30 = scmp.ge.s32.totalorder %s29, 2
    %s31 = scalar_select %p30, 0, %s29
    %s32 = ssub.s32 %s19, %s31
    %p33 = scmp.eq.s32.totalorder %s32, 0
    %s35 = sadd.s32 %s34, 1
    %s36 = scalar_select %p33, %s34, %s35
    %p39 = pneg %p33
    %p40 = scmp.eq.s32.totalorder %s12, 1
    %p41 = por %p39, %p40
    %p42 = scmp.ne.s32.totalorder %s34, %s37
    %p43 = scmp.eq.s32.totalorder %s12, 0
    %p44 = por %p42, %p43
    %p45 = scmp.ne.s32.totalorder %s34, %s37
    %p46 = scmp.eq.s32.totalorder %s17, 1
    %p47 = por %p45, %p46
    %p48 = scmp.ne.s32.totalorder %s37, %s38
    %p49 = scmp.eq.s32.totalorder %s17, 0
    %p50 = por %p48, %p49
    %p51 = scmp.ne.s32.totalorder %s37, %s38
    %p52 = scmp.eq.s32.totalorder %s18, 1
    %p53 = por %p51, %p52
    %p55 = scmp.ne.s32.totalorder %s38, %s54
    %p56 = scmp.eq.s32.totalorder %s18, 0
    %p57 = por %p55, %p56
    %s58 = ssub.s32 %s20, %s27
    %p59 = scmp.eq.s32.totalorder %s58, 0
    %s61 = sadd.s32 %s60, 1
    %s62 = scalar_select %p59, %s60, %s61
    %p65 = pneg %p59
    %p66 = scmp.eq.s32.totalorder %s12, 1
    %p67 = por %p65, %p66
    %p68 = scmp.ne.s32.totalorder %s60, %s63
    %p69 = scmp.eq.s32.totalorder %s12, 0
    %p70 = por %p68, %p69
    %p71 = scmp.ne.s32.totalorder %s60, %s63
    %p72 = scmp.eq.s32.totalorder %s17, 1
    %p73 = por %p71, %p72
    %p74 = scmp.ne.s32.totalorder %s63, %s64
    %p75 = scmp.eq.s32.totalorder %s17, 0
    %p76 = por %p74, %p75
    %p77 = scmp.ne.s32.totalorder %s63, %s64
    %p78 = scmp.eq.s32.totalorder %s18, 1
    %p79 = por %p77, %p78
    %p81 = scmp.ne.s32.totalorder %s64, %s80
    %p82 = scmp.eq.s32.totalorder %s18, 0
    %p83 = por %p81, %p82
    %s84 = ssub.s32 %s19, %s31
    %p85 = scmp.eq.s32.totalorder %s84, 0
    %s87 = sadd.s32 %s86, 1
    %s88 = scalar_select %p85, %s86, %s87
    %p91 = pneg %p85
    %p92 = scmp.eq.s32.totalorder %s12, 1
    %p93 = por %p91, %p92
    %p94 = scmp.ne.s32.totalorder %s86, %s89
    %p95 = scmp.eq.s32.totalorder %s12, 0
    %p96 = por %p94, %p95
    %p97 = scmp.ne.s32.totalorder %s86, %s89
    %p98 = scmp.eq.s32.totalorder %s17, 1
    %p99 = por %p97, %p98
    %p100 = scmp.ne.s32.totalorder %s89, %s90
    %p101 = scmp.eq.s32.totalorder %s17, 0
    %p102 = por %p100, %p101
    %p103 = scmp.ne.s32.totalorder %s89, %s90
    %p104 = scmp.eq.s32.totalorder %s18, 1
    %p105 = por %p103, %p104
    %p107 = scmp.ne.s32.totalorder %s90, %s106
    %p108 = scmp.eq.s32.totalorder %s18, 0
    %p109 = por %p107, %p108
    %s110 = ssub.s32 %s20, %s27
    %p111 = scmp.eq.s32.totalorder %s110, 0
    %s113 = sadd.s32 %s112, 1
    %s114 = scalar_select %p111, %s112, %s113
    %p117 = pneg %p111
    %p118 = scmp.eq.s32.totalorder %s12, 1
    %p119 = por %p117, %p118
    %p120 = scmp.ne.s32.totalorder %s112, %s115
    %p121 = scmp.eq.s32.totalorder %s12, 0
    %p122 = por %p120, %p121
    %p123 = scmp.ne.s32.totalorder %s112, %s115
    %p124 = scmp.eq.s32.totalorder %s17, 1
    %p125 = por %p123, %p124
    %p126 = scmp.ne.s32.totalorder %s115, %s116
    %p127 = scmp.eq.s32.totalorder %s17, 0
    %p128 = por %p126, %p127
    %p129 = scmp.ne.s32.totalorder %s115, %s116
    %p130 = scmp.eq.s32.totalorder %s18, 1
    %p131 = por %p129, %p130
    %p133 = scmp.ne.s32.totalorder %s116, %s132
    %p134 = scmp.eq.s32.totalorder %s18, 0
    %p135 = por %p133, %p134
    %s136 = ssub.s32 %s20, %s27
    %p137 = scmp.eq.s32.totalorder %s136, 0
    %s139 = sadd.s32 %s138, 1
    %s140 = scalar_select %p137, %s138, %s139
    %p143 = pneg %p137
    %p144 = scmp.eq.s32.totalorder %s12, 1
    %p145 = por %p143, %p144
    %p146 = scmp.ne.s32.totalorder %s138, %s141
    %p147 = scmp.eq.s32.totalorder %s12, 0
    %p148 = por %p146, %p147
    %p149 = scmp.ne.s32.totalorder %s138, %s141
    %p150 = scmp.eq.s32.totalorder %s17, 1
    %p151 = por %p149, %p150
    %p152 = scmp.ne.s32.totalorder %s141, %s142
    %p153 = scmp.eq.s32.totalorder %s17, 0
    %p154 = por %p152, %p153
    %p155 = scmp.ne.s32.totalorder %s141, %s142
    %p156 = scmp.eq.s32.totalorder %s18, 1
    %p157 = por %p155, %p156
    %p159 = scmp.ne.s32.totalorder %s142, %s158
    %p160 = scmp.eq.s32.totalorder %s18, 0
    %p161 = por %p159, %p160
    %s162 = ssub.s32 %s20, %s27
    %p163 = scmp.eq.s32.totalorder %s162, 0
    %s165 = sadd.s32 %s164, 1
    %s166 = scalar_select %p163, %s164, %s165
    %p169 = pneg %p163
    %p170 = scmp.eq.s32.totalorder %s12, 1
    %p171 = por %p169, %p170
    %p172 = scmp.ne.s32.totalorder %s164, %s167
    %p173 = scmp.eq.s32.totalorder %s12, 0
    %p174 = por %p172, %p173
    %p175 = scmp.ne.s32.totalorder %s164, %s167
    %p176 = scmp.eq.s32.totalorder %s17, 1
    %p177 = por %p175, %p176
    %p178 = scmp.ne.s32.totalorder %s167, %s168
    %p179 = scmp.eq.s32.totalorder %s17, 0
    %p180 = por %p178, %p179
    %p181 = scmp.ne.s32.totalorder %s167, %s168
    %p182 = scmp.eq.s32.totalorder %s18, 1
    %p183 = por %p181, %p182
    %p185 = scmp.ne.s32.totalorder %s168, %s184
    %p186 = scmp.eq.s32.totalorder %s18, 0
    %p187 = por %p185, %p186
    %s188 = ssub.s32 %s19, %s31
    %s189 = ssub.s32 %s20, %s27
    %s190 = sor.u32 %s188, %s189
    %p191 = scmp.eq.s32.totalorder %s190, 0
    %s193 = sadd.s32 %s192, 1
    %s194 = scalar_select %p191, %s192, %s193
    %p197 = pneg %p191
    %p198 = scmp.eq.s32.totalorder %s12, 1
    %p199 = por %p197, %p198
    %p200 = scmp.ne.s32.totalorder %s192, %s195
    %p201 = scmp.eq.s32.totalorder %s12, 0
    %p202 = por %p200, %p201
    %p203 = scmp.ne.s32.totalorder %s192, %s195
    %p204 = scmp.eq.s32.totalorder %s17, 1
    %p205 = por %p203, %p204
    %p206 = scmp.ne.s32.totalorder %s195, %s196
    %p207 = scmp.eq.s32.totalorder %s17, 0
    %p208 = por %p206, %p207
    %p209 = scmp.ne.s32.totalorder %s195, %s196
    %p210 = scmp.eq.s32.totalorder %s18, 1
    %p211 = por %p209, %p210
    %p213 = scmp.ne.s32.totalorder %s196, %s212
    %p214 = scmp.eq.s32.totalorder %s18, 0
    %p215 = por %p213, %p214
    %p216 = scmp.le.s32.totalorder 1, %s12
    %p217 = scmp.lt.s32.totalorder %s12, 3
    %p218 = pnand %p216, %p217
    %p219 = pneg %p218
    // Predicated region
    $region9: #{ublock_apply_nchw.15} parent=5 // pred_check
      _
    $region10: #{ublock_apply_nchw.15} parent=5 // pred_check_branch
      %221 = sbr.rel (%p218) target = $region12
    $region11: #{ublock_apply_nchw.15} parent=5 // pred_region
      %s222 = ssub.s32 %s12, 1
      // Predicated region
      $region13: #{ublock_apply_nchw.15} parent=11 // pred_check
        %p223 = pneg %p76
      $region14: #{ublock_apply_nchw.15} parent=11 // pred_check_branch
        %225 = sbr.rel (%p223) target = $region16
      $region15: #{ublock_apply_nchw.15} parent=11 // pred_region
        %p226 = scmp.lt.s32.totalorder %s22, 0
        %s227 = scalar_select %p226, %s22, 0
        %s228 = smul.addr %s227, 4
        %s229 = scalar_lea.vmem %s1, %s228
      $region16: #{ublock_apply_nchw.15} parent=11 // pred_fallthru
        _
      // Predicated region
      $region17: #{ublock_apply_nchw.15} parent=11 // pred_check
        %p230 = pneg %p128
      $region18: #{ublock_apply_nchw.15} parent=11 // pred_check_branch
        %232 = sbr.rel (%p230) target = $region20
      $region19: #{ublock_apply_nchw.15} parent=11 // pred_region
        %p233 = scmp.lt.s32.totalorder %s22, 0
        %s234 = scalar_select %p233, %s22, 0
        %s235 = smul.addr %s234, 4
        %s236 = scalar_lea.vmem %s3, %s235
      $region20: #{ublock_apply_nchw.15} parent=11 // pred_fallthru
        _
      // Predicated region
      $region21: #{ublock_apply_nchw.15} parent=11 // pred_check
        %p237 = pneg %p154
      $region22: #{ublock_apply_nchw.15} parent=11 // pred_check_branch
        %239 = sbr.rel (%p237) target = $region24
      $region23: #{ublock_apply_nchw.15} parent=11 // pred_region
        %p240 = scmp.lt.s32.totalorder %s22, 0
        %s241 = scalar_select %p240, %s22, 0
        %s242 = scalar_lea.vmem %s4, %s241
      $region24: #{ublock_apply_nchw.15} parent=11 // pred_fallthru
        _
      // Predicated region
      $region25: #{ublock_apply_nchw.15} parent=11 // pred_check
        %p243 = pneg %p180
      $region26: #{ublock_apply_nchw.15} parent=11 // pred_check_branch
        %245 = sbr.rel (%p243) target = $region28
      $region27: #{ublock_apply_nchw.15} parent=11 // pred_region
        %p246 = scmp.lt.s32.totalorder %s22, 0
        %s247 = scalar_select %p246, %s22, 0
        %s248 = scalar_lea.vmem %s5, %s247
      $region28: #{ublock_apply_nchw.15} parent=11 // pred_fallthru
        _
    $region12: #{ublock_apply_nchw.15} parent=5 // pred_fallthru
      _
    %p249 = scmp.lt.s32.totalorder %s12, 2
    // Predicated region
    $region29: #{ublock_apply_nchw.15} parent=5 // pred_check
      %p250 = pneg %p249
    $region30: #{ublock_apply_nchw.15} parent=5 // pred_check_branch
      %252 = sbr.rel (%p250) target = $region32
    $region31: #{ublock_apply_nchw.15} parent=5 // pred_region
      // Predicated region
      $region33: #{ublock_apply_nchw.15} parent=31 // pred_check
        %p253 = pneg %p44
      $region34: #{ublock_apply_nchw.15} parent=31 // pred_check_branch
        %255 = sbr.rel (%p253) target = $region36
      $region35: #{ublock_apply_nchw.15} parent=31 // pred_region
        %s256 = smul.u32 8, %s19
        %p257 = scmp.lt.s32.totalorder %s256, 15
        %s258 = scalar_select %p257, %s256, 15
        %s259 = smul.addr %s258, 4
        %s260 = scalar_lea.vmem %s0, %s259
        %s261 = smul.u32 8, %s19
      $region36: #{ublock_apply_nchw.15} parent=31 // pred_fallthru
        _
      // Predicated region
      $region37: #{ublock_apply_nchw.15} parent=31 // pred_check
        %p262 = pneg %p96
      $region38: #{ublock_apply_nchw.15} parent=31 // pred_check_branch
        %264 = sbr.rel (%p262) target = $region40
      $region39: #{ublock_apply_nchw.15} parent=31 // pred_region
        %s265 = smul.u32 8, %s19
        %p266 = scmp.lt.s32.totalorder %s265, 15
        %s267 = scalar_select %p266, %s265, 15
        %s268 = smul.addr %s267, 4
        %s269 = scalar_lea.vmem %s2, %s268
        %s270 = smul.u32 8, %s19
      $region40: #{ublock_apply_nchw.15} parent=31 // pred_fallthru
        _
    $region32: #{ublock_apply_nchw.15} parent=5 // pred_fallthru
      _
    %p271 = scmp.le.s32.totalorder 1, %s12
    %p272 = scmp.lt.s32.totalorder %s12, 3
    %p273 = pnand %p271, %p272
    %p274 = pneg %p273
    // Predicated region
    $region41: #{ublock_apply_nchw.15} parent=5 // pred_check
      _
    $region42: #{ublock_apply_nchw.15} parent=5 // pred_check_branch
      %276 = sbr.rel (%p273) target = $region44
    $region43: #{ublock_apply_nchw.15} parent=5 // pred_region
      %s277 = ssub.s32 %s12, 1
      %s278 = smul.u32 8, %s21
      %p279 = scmp.lt.s32.totalorder %s278, 15
      %s280 = scalar_select %p279, %s278, 15
      %s281 = smul.addr %s280, 4
      %s282 = scalar_lea.vmem %s0, %s281
      %p283 = pneg %p50
      %p284 = pneg %p47
      %p285 = scmp.lt.s32.totalorder %s22, 0
      %s286 = scalar_select %p285, %s22, 0
      %s287 = smul.addr %s286, 4
      %s288 = scalar_lea.vmem %s1, %s287
      %p289 = pneg %p76
      %p290 = pneg %p73
      %s291 = smul.u32 8, %s21
      %p292 = scmp.lt.s32.totalorder %s291, 15
      %s293 = scalar_select %p292, %s291, 15
      %s294 = smul.addr %s293, 4
      %s295 = scalar_lea.vmem %s2, %s294
      %p296 = pneg %p102
      %p297 = pneg %p99
      %p298 = scmp.lt.s32.totalorder %s22, 0
      %s299 = scalar_select %p298, %s22, 0
      %s300 = smul.addr %s299, 4
      %s301 = scalar_lea.vmem %s3, %s300
      %p302 = pneg %p128
      %p303 = pneg %p125
      %p304 = scmp.lt.s32.totalorder %s22, 0
      %s305 = scalar_select %p304, %s22, 0
      %s306 = scalar_lea.vmem %s4, %s305
      %p307 = pneg %p154
      %p308 = pneg %p151
      %p309 = scmp.lt.s32.totalorder %s22, 0
      %s310 = scalar_select %p309, %s22, 0
      %s311 = scalar_lea.vmem %s5, %s310
      %p312 = pneg %p180
      %p313 = pneg %p177
      %p314 = pneg %p208
      %p315 = pneg %p205
      %s316 = smul.u32 8, %s21
      %p317 = scmp.lt.s32.totalorder %s316, 15
      %s318 = scalar_select %p317, %s316, 15
      %p319 = scmp.lt.s32.totalorder %s22, 0
      %s320 = scalar_select %p319, %s22, 0
      %s321 = sadd.s32 %s320, %s318
      %s322 = smul.addr %s321, 4
      %s323 = scalar_lea.vmem %s6, %s322
      %s324 = smul.u32 8, %s21
      %p325 = scmp.lt.s32.totalorder %s324, 15
      %s326 = scalar_select %p325, %s324, 15
      %s327 = smul.addr %s326, 4
      %s328 = scalar_lea.vmem %s0, %s327
      %s329 = smul.u32 8, %s21
      %p330 = scmp.lt.s32.totalorder %s22, 0
      %s331 = scalar_select %p330, %s22, 0
      %s332 = smul.addr %s331, 4
      %s333 = scalar_lea.vmem %s1, %s332
      %s334 = smul.u32 8, %s21
      %p335 = scmp.lt.s32.totalorder %s334, 15
      %s336 = scalar_select %p335, %s334, 15
      %s337 = smul.addr %s336, 4
      %s338 = scalar_lea.vmem %s2, %s337
      %s339 = smul.u32 8, %s21
      %p340 = scmp.lt.s32.totalorder %s22, 0
      %s341 = scalar_select %p340, %s22, 0
      %s342 = smul.addr %s341, 4
      %s343 = scalar_lea.vmem %s3, %s342
      %p344 = scmp.lt.s32.totalorder %s22, 0
      %s345 = scalar_select %p344, %s22, 0
      %s346 = scalar_lea.vmem %s4, %s345
      %p347 = scmp.lt.s32.totalorder %s22, 0
      %s348 = scalar_select %p347, %s22, 0
      %s349 = scalar_lea.vmem %s5, %s348
      %s350 = smul.u32 8, %s21
      %p351 = scmp.lt.s32.totalorder %s350, 15
      %s352 = scalar_select %p351, %s350, 15
      %p353 = scmp.lt.s32.totalorder %s22, 0
      %s354 = scalar_select %p353, %s22, 0
      %s355 = sadd.s32 %s354, %s352
      %s356 = smul.addr %s355, 4
      %s357 = scalar_lea.vmem %s6, %s356
      %s358 = smul.u32 8, %s21
      %v360 = vld [vmem:[%s328] sm:$0xf]
      %v361 = vld [vmem:[%s328 + $0x4] sm:$0xf]
      %v362 = vld [vmem:[%s328 + $0x8] sm:$0xf]
      %v363 = vld [vmem:[%s328 + $0xc] sm:$0xf]
      %v364 = vld [vmem:[%s328 + $0x10] sm:$0xf]
      %v365 = vld [vmem:[%s328 + $0x14] sm:$0xf]
      %v366 = vld [vmem:[%s328 + $0x18] sm:$0xf]
      %v367 = vld [vmem:[%s328 + $0x1c] sm:$0xf]
      %v368 = vmax.bf16 %v360, 0
      %v369 = vmax.bf16 %v361, 0
      %v370 = vmax.bf16 %v362, 0
      %v371 = vmax.bf16 %v363, 0
      %v372 = vmax.bf16 %v364, 0
      %v373 = vmax.bf16 %v365, 0
      %v374 = vmax.bf16 %v366, 0
      %v375 = vmax.bf16 %v367, 0
      %v376 = vld [vmem:[%s333] sm:$0xf]
      %v377 = vld [vmem:[%s333 + $0x4] sm:$0xf]
      %v378 = vld [vmem:[%s333 + $0x8] sm:$0xf]
      %v379 = vld [vmem:[%s333 + $0xc] sm:$0xf]
      %v380 = vld [vmem:[%s333 + $0x10] sm:$0xf]
      %v381 = vld [vmem:[%s333 + $0x14] sm:$0xf]
      %v382 = vld [vmem:[%s333 + $0x18] sm:$0xf]
      %v383 = vld [vmem:[%s333 + $0x1c] sm:$0xf]
      %v384 = vld [vmem:[%s333 + $0x20] sm:$0xf]
      %v385 = vld [vmem:[%s338] sm:$0xf]
      %v386 = vld [vmem:[%s338 + $0x4] sm:$0xf]
      %v387 = vld [vmem:[%s338 + $0x8] sm:$0xf]
      %v388 = vld [vmem:[%s338 + $0xc] sm:$0xf]
      %v389 = vld [vmem:[%s338 + $0x10] sm:$0xf]
      %v390 = vld [vmem:[%s338 + $0x14] sm:$0xf]
      %v391 = vld [vmem:[%s338 + $0x18] sm:$0xf]
      %v392 = vld [vmem:[%s338 + $0x1c] sm:$0xf]
      %v393 = vmax.bf16 %v385, 0
      %v394 = vmax.bf16 %v386, 0
      %v395 = vmax.bf16 %v387, 0
      %v396 = vmax.bf16 %v388, 0
      %v397 = vmax.bf16 %v389, 0
      %v398 = vmax.bf16 %v390, 0
      %v399 = vmax.bf16 %v391, 0
      %v400 = vmax.bf16 %v392, 0
      %v401 = vld [vmem:[%s343] sm:$0xf]
      %v402 = vld [vmem:[%s343 + $0x4] sm:$0xf]
      %v403 = vld [vmem:[%s343 + $0x8] sm:$0xf]
      %v404 = vld [vmem:[%s343 + $0xc] sm:$0xf]
      %v405 = vld [vmem:[%s343 + $0x10] sm:$0xf]
      %v406 = vld [vmem:[%s343 + $0x14] sm:$0xf]
      %v407 = vld [vmem:[%s343 + $0x18] sm:$0xf]
      %v408 = vld [vmem:[%s343 + $0x1c] sm:$0xf]
      %v409 = vld [vmem:[%s343 + $0x20] sm:$0xf]
      %v418 = vunpack.c.l.b16 %v393
      %v419 = vunpack.c.l.b16 %v394
      %v420 = vunpack.c.l.b16 %v395
      %v421 = vunpack.c.l.b16 %v396
      %v422 = vunpack.c.l.b16 %v397
      %v423 = vunpack.c.l.b16 %v398
      %v424 = vunpack.c.l.b16 %v399
      %v425 = vunpack.c.l.b16 %v400
      %v426 = vpack.c.b16 %v419, %v418
      %v427 = vpack.c.b16 %v421, %v420
      %v428 = vpack.c.b16 %v423, %v422
      %v429 = vpack.c.b16 %v425, %v424
      %v439 = vunpack.c.l.b16 %v401
      %v440 = vunpack.c.l.b16 %v402
      %v441 = vunpack.c.l.b16 %v403
      %v442 = vunpack.c.l.b16 %v404
      %v443 = vunpack.c.l.b16 %v405
      %v444 = vunpack.c.l.b16 %v406
      %v445 = vunpack.c.l.b16 %v407
      %v446 = vunpack.c.l.b16 %v408
      %v447 = vunpack.c.l.b16 %v409
      %v448 = vpack.c.b16 %v440, %v439
      %v449 = vpack.c.b16 %v442, %v441
      %v450 = vpack.c.b16 %v444, %v443
      %v451 = vpack.c.b16 %v446, %v445
      %v452 = vpack.c.b16 %v447, %v447
      %vm457 = vcmask 588800
      %v459 = vsel %vm457, %v426, 0
      %v462 = vsel %vm457, %v427, 0
      %v465 = vsel %vm457, %v428, 0
      %v468 = vsel %vm457, %v429, 0
      %vm470 = vcmask 1043456
      %v472 = vsel %vm470, %v452, 0
      %474 = vmatprep.subr.bf16.mxu0 0
      %475 = vmatpush1.bf16.msra.mxu0 0
      %476 = vmatprep.subr.bf16.mxu0 0
      %477 = vmatpush1.bf16.msra.mxu0 0
      %478 = vmatprep.subr.bf16.mxu0 0
      %479 = vmatpush1.bf16.msra.mxu0 0
      %480 = vmatprep.subr.bf16.mxu0 0
      %481 = vmatpush1.bf16.msra.mxu0 %v472
      %482 = vmatprep.subr.bf16.mxu0 0
      %483 = vmatpush1.bf16.msra.mxu0 %v451
      %484 = vmatprep.subr.bf16.mxu0 0
      %485 = vmatpush1.bf16.msra.mxu0 %v450
      %486 = vmatprep.subr.bf16.mxu0 0
      %487 = vmatpush1.bf16.msra.mxu0 %v449
      %488 = vmatprep.subr.bf16.mxu0 0
      %489 = vmatpush1.bf16.msra.mxu0 %v448
      %490 = vmatprep.subr.bf16.mxu0 0
      %491 = vmatpush2.bf16.msra.mxu0 0
      %492 = vmatprep.subr.bf16.mxu0 0
      %493 = vmatpush2.bf16.msra.mxu0 0
      %494 = vmatprep.subr.bf16.mxu0 0
      %495 = vmatpush2.bf16.msra.mxu0 0
      %496 = vmatprep.subr.bf16.mxu0 0
      %497 = vmatpush2.bf16.msra.mxu0 0
      %498 = vmatprep.subr.bf16.mxu0 0
      %499 = vmatpush2.bf16.msra.mxu0 0
      %500 = vmatprep.subr.bf16.mxu0 0
      %501 = vmatpush2.bf16.msra.mxu0 0
      %502 = vmatprep.subr.bf16.mxu0 0
      %503 = vmatpush2.bf16.msra.mxu0 0
      %504 = vmatprep.subr.bf16.mxu0 0
      %505 = vmatpush2.bf16.msra.mxu0 0
      %506 = vmatprep.mubr.bf16.mxu0 0
      %507 = vmatmul.mubr.bf16.gmra.mxu0 %v459
      %v508 = vpop.f32.mrf.mxu0
      %v509 = vadd.f32 0.0, %v508
      %v510 = vpop.f32.mrf.mxu0
      %v511 = vpop.f32.mrf.mxu0
      %v512 = vadd.f32 0.0, %v511
      %v513 = vpop.f32.mrf.mxu0
      %514 = vmatprep.mubr.bf16.mxu0 0
      %515 = vmatmul.mubr.bf16.gmra.mxu0 %v462
      %v516 = vpop.f32.mrf.mxu0
      %v517 = vadd.f32 0.0, %v516
      %v518 = vpop.f32.mrf.mxu0
      %v519 = vpop.f32.mrf.mxu0
      %v520 = vadd.f32 0.0, %v519
      %v521 = vpop.f32.mrf.mxu0
      %522 = vmatprep.mubr.bf16.mxu0 0
      %523 = vmatmul.mubr.bf16.gmra.mxu0 %v465
      %v524 = vpop.f32.mrf.mxu0
      %v525 = vadd.f32 0.0, %v524
      %v526 = vpop.f32.mrf.mxu0
      %v527 = vpop.f32.mrf.mxu0
      %v528 = vadd.f32 0.0, %v527
      %v529 = vpop.f32.mrf.mxu0
      %530 = vmatprep.mubr.bf16.mxu0 0
      %531 = vmatmul.mubr.bf16.gmra.mxu0 %v468
      %v532 = vpop.f32.mrf.mxu0
      %v533 = vadd.f32 0.0, %v532
      %v534 = vpop.f32.mrf.mxu0
      %v535 = vpop.f32.mrf.mxu0
      %v536 = vadd.f32 0.0, %v535
      %v537 = vpop.f32.mrf.mxu0
      %538 = vdwg.mxu0
      %v547 = vunpack.c.l.b16 %v368
      %v548 = vunpack.c.l.b16 %v369
      %v549 = vunpack.c.l.b16 %v370
      %v550 = vunpack.c.l.b16 %v371
      %v551 = vunpack.c.l.b16 %v372
      %v552 = vunpack.c.l.b16 %v373
      %v553 = vunpack.c.l.b16 %v374
      %v554 = vunpack.c.l.b16 %v375
      %v555 = vpack.c.b16 %v548, %v547
      %v556 = vpack.c.b16 %v550, %v549
      %v557 = vpack.c.b16 %v552, %v551
      %v558 = vpack.c.b16 %v554, %v553
      %v568 = vunpack.c.l.b16 %v376
      %v569 = vunpack.c.l.b16 %v377
      %v570 = vunpack.c.l.b16 %v378
      %v571 = vunpack.c.l.b16 %v379
      %v572 = vunpack.c.l.b16 %v380
      %v573 = vunpack.c.l.b16 %v381
      %v574 = vunpack.c.l.b16 %v382
      %v575 = vunpack.c.l.b16 %v383
      %v576 = vunpack.c.l.b16 %v384
      %v577 = vpack.c.b16 %v569, %v568
      %v578 = vpack.c.b16 %v571, %v570
      %v579 = vpack.c.b16 %v573, %v572
      %v580 = vpack.c.b16 %v575, %v574
      %v581 = vpack.c.b16 %v576, %v576
      %v587 = vsel %vm457, %v555, 0
      %v590 = vsel %vm457, %v556, 0
      %v593 = vsel %vm457, %v557, 0
      %v596 = vsel %vm457, %v558, 0
      %v599 = vsel %vm470, %v581, 0
      %601 = vmatprep.subr.bf16.mxu0 0
      %602 = vmatpush1.bf16.msra.mxu0 0
      %603 = vmatprep.subr.bf16.mxu0 0
      %604 = vmatpush1.bf16.msra.mxu0 0
      %605 = vmatprep.subr.bf16.mxu0 0
      %606 = vmatpush1.bf16.msra.mxu0 0
      %607 = vmatprep.subr.bf16.mxu0 0
      %608 = vmatpush1.bf16.msra.mxu0 %v599
      %609 = vmatprep.subr.bf16.mxu0 0
      %610 = vmatpush1.bf16.msra.mxu0 %v580
      %611 = vmatprep.subr.bf16.mxu0 0
      %612 = vmatpush1.bf16.msra.mxu0 %v579
      %613 = vmatprep.subr.bf16.mxu0 0
      %614 = vmatpush1.bf16.msra.mxu0 %v578
      %615 = vmatprep.subr.bf16.mxu0 0
      %616 = vmatpush1.bf16.msra.mxu0 %v577
      %617 = vmatprep.subr.bf16.mxu0 0
      %618 = vmatpush2.bf16.msra.mxu0 0
      %619 = vmatprep.subr.bf16.mxu0 0
      %620 = vmatpush2.bf16.msra.mxu0 0
      %621 = vmatprep.subr.bf16.mxu0 0
      %622 = vmatpush2.bf16.msra.mxu0 0
      %623 = vmatprep.subr.bf16.mxu0 0
      %624 = vmatpush2.bf16.msra.mxu0 0
      %625 = vmatprep.subr.bf16.mxu0 0
      %626 = vmatpush2.bf16.msra.mxu0 0
      %627 = vmatprep.subr.bf16.mxu0 0
      %628 = vmatpush2.bf16.msra.mxu0 0
      %629 = vmatprep.subr.bf16.mxu0 0
      %630 = vmatpush2.bf16.msra.mxu0 0
      %631 = vmatprep.subr.bf16.mxu0 0
      %632 = vmatpush2.bf16.msra.mxu0 0
      %633 = vmatprep.mubr.bf16.mxu0 0
      %634 = vmatmul.mubr.bf16.gmra.mxu0 %v587
      %v635 = vpop.f32.mrf.mxu0
      %v636 = vadd.f32 %v509, %v635
      %v637 = vpop.f32.mrf.mxu0
      %v638 = vpop.f32.mrf.mxu0
      %v639 = vadd.f32 %v512, %v638
      %v640 = vpop.f32.mrf.mxu0
      %641 = vmatprep.mubr.bf16.mxu0 0
      %642 = vmatmul.mubr.bf16.gmra.mxu0 %v590
      %v643 = vpop.f32.mrf.mxu0
      %v644 = vadd.f32 %v517, %v643
      %v645 = vpop.f32.mrf.mxu0
      %v646 = vpop.f32.mrf.mxu0
      %v647 = vadd.f32 %v520, %v646
      %v648 = vpop.f32.mrf.mxu0
      %649 = vmatprep.mubr.bf16.mxu0 0
      %650 = vmatmul.mubr.bf16.gmra.mxu0 %v593
      %v651 = vpop.f32.mrf.mxu0
      %v652 = vadd.f32 %v525, %v651
      %v653 = vpop.f32.mrf.mxu0
      %v654 = vpop.f32.mrf.mxu0
      %v655 = vadd.f32 %v528, %v654
      %v656 = vpop.f32.mrf.mxu0
      %657 = vmatprep.mubr.bf16.mxu0 0
      %658 = vmatmul.mubr.bf16.gmra.mxu0 %v596
      %v659 = vpop.f32.mrf.mxu0
      %v660 = vadd.f32 %v533, %v659
      %v661 = vpop.f32.mrf.mxu0
      %v662 = vpop.f32.mrf.mxu0
      %v663 = vadd.f32 %v536, %v662
      %v664 = vpop.f32.mrf.mxu0
      %665 = vdwg.mxu0
      %v666 = vld [vmem:[%s346] sm:$0x1]
      %v668 = vlaneseq
      %v669 = vshrl.u32 %v668, 7
      %v670 = vsub.s32 0, %v669
      %v671 = vrot.slane %v666, %v670
      %v673 = vmul.f32 %v636, %v671
      %v674 = vmul.f32 %v639, %v671
      %v675 = vmul.f32 %v644, %v671
      %v676 = vmul.f32 %v647, %v671
      %v677 = vmul.f32 %v652, %v671
      %v678 = vmul.f32 %v655, %v671
      %v679 = vmul.f32 %v660, %v671
      %v680 = vmul.f32 %v663, %v671
      %v681 = vld [vmem:[%s349] sm:$0x1]
      %v683 = vlaneseq
      %v684 = vshrl.u32 %v683, 7
      %v685 = vsub.s32 0, %v684
      %v686 = vrot.slane %v681, %v685
      %v688 = vadd.f32 %v673, %v686
      %v689 = vadd.f32 %v674, %v686
      %v690 = vadd.f32 %v675, %v686
      %v691 = vadd.f32 %v676, %v686
      %v692 = vadd.f32 %v677, %v686
      %v693 = vadd.f32 %v678, %v686
      %v694 = vadd.f32 %v679, %v686
      %v695 = vadd.f32 %v680, %v686
      %v696 = vpack.c.bf16 %v689, %v688
      %v697 = vpack.c.bf16 %v691, %v690
      %v698 = vpack.c.bf16 %v693, %v692
      %v699 = vpack.c.bf16 %v695, %v694
      %v704 = vunpack.c.l.b16 %v696
      %v705 = vunpack.c.h.b16 %v696
      %v706 = vunpack.c.l.b16 %v697
      %v707 = vunpack.c.h.b16 %v697
      %v708 = vunpack.c.l.b16 %v698
      %v709 = vunpack.c.h.b16 %v698
      %v710 = vunpack.c.l.b16 %v699
      %v711 = vunpack.c.h.b16 %v699
      %v712 = vpack.c.b16 %v704, %v704
      %v713 = vpack.c.b16 %v705, %v705
      %v714 = vpack.c.b16 %v706, %v706
      %v715 = vpack.c.b16 %v707, %v707
      %v716 = vpack.c.b16 %v708, %v708
      %v717 = vpack.c.b16 %v709, %v709
      %v718 = vpack.c.b16 %v710, %v710
      %v719 = vpack.c.b16 %v711, %v711
      %728 = vst [vmem:[%s357] sm:$0xf] %v712
      %729 = vst [vmem:[%s357 + $0x4] sm:$0xf] %v713
      %730 = vst [vmem:[%s357 + $0x8] sm:$0xf] %v714
      %731 = vst [vmem:[%s357 + $0xc] sm:$0xf] %v715
      %732 = vst [vmem:[%s357 + $0x10] sm:$0xf] %v716
      %733 = vst [vmem:[%s357 + $0x14] sm:$0xf] %v717
      %734 = vst [vmem:[%s357 + $0x18] sm:$0xf] %v718
      %735 = vst [vmem:[%s357 + $0x1c] sm:$0xf] %v719
      %s736 = smul.u32 8, %s21
      %p737 = scmp.lt.s32.totalorder %s736, 15
      %s738 = scalar_select %p737, %s736, 15
      %p739 = scmp.lt.s32.totalorder %s22, 0
      %s740 = scalar_select %p739, %s22, 0
      %s741 = sadd.s32 %s740, %s738
      %s742 = smul.addr %s741, 4
      %s743 = scalar_lea.vmem %s6, %s742
      // Predicated region
      $region45: #{ublock_apply_nchw.15} parent=43 // pred_check
        %p744 = pneg %p205
      $region46: #{ublock_apply_nchw.15} parent=43 // pred_check_branch
        %746 = sbr.rel (%p744) target = $region48
      $region47: #{ublock_apply_nchw.15} parent=43 // pred_region
        %s747 = smul.u32 8, %s21
      $region48: #{ublock_apply_nchw.15} parent=43 // pred_fallthru
        _
    $region44: #{ublock_apply_nchw.15} parent=5 // pred_fallthru
      _
    %p748 = scmp.le.s32.totalorder 2, %s12
    // Predicated region
    $region49: #{ublock_apply_nchw.15} parent=5 // pred_check
      %p749 = pneg %p748
    $region50: #{ublock_apply_nchw.15} parent=5 // pred_check_branch
      %751 = sbr.rel (%p749) target = $region52
    $region51: #{ublock_apply_nchw.15} parent=5 // pred_region
      %s752 = ssub.s32 %s12, 2
      // Predicated region
      $region53: #{ublock_apply_nchw.15} parent=51 // pred_check
        %p753 = pneg %p211
      $region54: #{ublock_apply_nchw.15} parent=51 // pred_check_branch
        %755 = sbr.rel (%p753) target = $region56
      $region55: #{ublock_apply_nchw.15} parent=51 // pred_region
        %s756 = smul.u32 8, %s23
        %p757 = scmp.lt.s32.totalorder %s756, 15
        %s758 = scalar_select %p757, %s756, 15
        %p759 = scmp.lt.s32.totalorder %s24, 0
        %s760 = scalar_select %p759, %s24, 0
        %s761 = sadd.s32 %s760, %s758
        %s762 = smul.addr %s761, 4
        %s763 = scalar_lea.vmem %s6, %s762
      $region56: #{ublock_apply_nchw.15} parent=51 // pred_fallthru
        _
    $region52: #{ublock_apply_nchw.15} parent=5 // pred_fallthru
      _
  $region6: #{ublock_apply_nchw.15} parent=0 // loop_footer
    %s16 = sadd.s32 1, %s12
  $region7: #{ublock_apply_nchw.15} parent=0 // loop_footer_branch
    %11 = sbr.rel target = $region3
  $region8: #{ublock_apply_nchw.15} parent=0 // loop_exit
    _

</llo_original>
